<compile_context>
chip_gen: v6e
topology: v6e:2x2x1
jax: 0.10.0
libtpu: 0.0.40
codegen_flags: <defaults>
</compile_context>

<pallas_src>
import math

import numpy as np

import jax
import jax.numpy as jnp
from jax.experimental import pallas as pl
from jax.experimental.pallas import tpu as pltpu

NEG_SLOPE = 0.01   # nn.LeakyReLU default
BN_EPS = 1e-5      # nn.BatchNorm2d default

# ConvT(9->4, k=7, s=1, p=0) ; ConvT(4->2, k=4, s=2, p=1) ; ConvT(2->1, k=4, s=2, p=1)
LAYER_CFGS = [
    dict(ci=9, co=4, k=7, s=1, p=0),
    dict(ci=4, co=2, k=4, s=2, p=1),
    dict(ci=2, co=1, k=4, s=2, p=1),
]


# ---------------------------------------------------------------------------
# Pallas kernel: whole decoder, 3 x [matmul -> BN(batch stats) -> LeakyReLU]
# on channel-major feature-flattened activations (N, C*OH*OW).
# ---------------------------------------------------------------------------
def _make_decoder_kernel(meta):
    """meta: per-layer static (num_output_channels C, spatial size HW)."""

    def layer(a, w_ref, s_ref, b_ref, c, hw):
        inv_count = 1.0 / float(a.shape[0] * hw)          # static N*HW
        # ConvTranspose2d as one dense matmul on flattened features
        # (bf16-stored weights, f32 accumulate).
        y = jnp.dot(a, w_ref[...].astype(jnp.float32),
                    preferred_element_type=jnp.float32)                   # (N, F)
        s = s_ref[...]                                                     # (F, C) one-hot pool
        st = b_ref[0:c, :]                                                 # (C, F) broadcast
        gamma_f = b_ref[c:c + 1, :]                                        # (1, F)
        beta_f = b_ref[c + 1:c + 2, :]                                     # (1, F)
        # Per-channel batch mean (training-mode BatchNorm).
        mean_c = jnp.sum(jnp.dot(y, s, preferred_element_type=jnp.float32),
                         axis=0, keepdims=True) * inv_count                # (1, C)
        mean_f = jnp.dot(mean_c, st, preferred_element_type=jnp.float32)   # (1, F)
        d = y - mean_f
        # Per-channel biased variance via (y - mean)^2 (cancellation-safe).
        var_c = jnp.sum(jnp.dot(d * d, s, preferred_element_type=jnp.float32),
                        axis=0, keepdims=True) * inv_count                 # (1, C)
        inv_std_c = jax.lax.rsqrt(var_c + BN_EPS)                          # rsqrt on C lanes
        inv_std_f = jnp.dot(inv_std_c, st,
                            preferred_element_type=jnp.float32)            # (1, F)
        z = d * (inv_std_f * gamma_f) + beta_f
        return jnp.where(z >= 0.0, z, NEG_SLOPE * z)                       # LeakyReLU

    def kernel(x_ref,
               w1_ref, s1_ref, b1_ref,
               w2_ref, s2_ref, b2_ref,
               w3_ref, s3_ref, b3_ref,
               o_ref):
        a1 = layer(x_ref[...], w1_ref, s1_ref, b1_ref, *meta[0])           # (N, 196)
        a2 = layer(a1, w2_ref, s2_ref, b2_ref, *meta[1])                   # (N, 392)
        o_ref[...] = layer(a2, w3_ref, s3_ref, b3_ref, *meta[2])           # (N, 784)

    return kernel


def _fused_decoder_call(x2d, ops, meta):
    n = x2d.shape[0]
    f_out = ops[-1][0].shape[1]
    args = [x2d]
    for layer_ops in ops:
        args.extend(layer_ops)
    return pl.pallas_call(
        _make_decoder_kernel(meta),
        out_shape=jax.ShapeDtypeStruct((n, f_out), jnp.float32),
        in_specs=[pl.BlockSpec(memory_space=pltpu.MemorySpace.VMEM)
                  for _ in args],
        out_specs=pl.BlockSpec(memory_space=pltpu.MemorySpace.VMEM),
    )(*args)


# ---------------------------------------------------------------------------
# Host-side (NumPy) precompute from the weights only -- runs once, outside jit.
# ---------------------------------------------------------------------------
def _dense_convT_matrix_np(w, h, wdt, stride, padding):
    """ConvTranspose2d weight (CI, CO, K, K) acting on an (h, wdt) input, as a
    dense (CI*h*wdt, CO*OH*OW) matrix on channel-major flattened features."""
    ci_n, co_n, k, _ = w.shape
    oh_n = (h - 1) * stride - 2 * padding + k
    ow_n = (wdt - 1) * stride - 2 * padding + k
    ci, ih, iw, co, kh, kw = np.meshgrid(
        np.arange(ci_n), np.arange(h), np.arange(wdt),
        np.arange(co_n), np.arange(k), np.arange(k), indexing="ij")
    oh = ih * stride - padding + kh
    ow = iw * stride - padding + kw
    valid = (oh >= 0) & (oh < oh_n) & (ow >= 0) & (ow < ow_n)
    rows = (ci * h + ih) * wdt + iw
    cols = (co * oh_n + oh) * ow_n + ow
    mat = np.zeros((ci_n * h * wdt, co_n * oh_n * ow_n), np.float32)
    np.add.at(mat, (rows[valid], cols[valid]), w[ci, co, kh, kw][valid])
    return mat, oh_n, ow_n


def prepare_decoder(params, h0, w0):
    """Per layer: (W_dense[bf16], S one-hot pool (F,C), packed [S^T;g_f;b_f])."""
    ops, meta = [], []
    h, wdt = h0, w0
    for cfg, (w, gamma, beta) in zip(LAYER_CFGS, params):
        wd, oh, ow = _dense_convT_matrix_np(np.asarray(w, np.float32),
                                            h, wdt, cfg["s"], cfg["p"])
        c, hw = cfg["co"], oh * ow
        f = c * hw
        s_pool = (np.arange(f)[:, None] // hw
                  == np.arange(c)[None, :]).astype(np.float32)         # (F, C)
        bcast = np.empty((c + 2, f), np.float32)
        bcast[:c, :] = s_pool.T                                         # S^T broadcast
        bcast[c, :] = np.repeat(np.asarray(gamma, np.float32), hw)      # gamma_f
        bcast[c + 1, :] = np.repeat(np.asarray(beta, np.float32), hw)   # beta_f
        ops.append((jnp.asarray(wd, dtype=jnp.bfloat16),
                    jnp.asarray(s_pool),
                    jnp.asarray(bcast)))
        meta.append((c, hw))
        h, wdt = oh, ow
    return ops, tuple(meta), (h, wdt)


def build_decoder_forward(params, h0, w0):
    """Hoisted precompute + jitted fused forward."""
    ops, meta, (oh, ow) = prepare_decoder(params, h0, w0)
    co = LAYER_CFGS[-1]["co"]

    @jax.jit
    def forward(x, ops):
        n, ci, h, w = x.shape
        out2d = _fused_decoder_call(x.reshape(n, ci * h * w), ops, meta)
        # Features are channel-major (c, oh, ow): NCHW is a free reshape.
        return out2d.reshape(n, co, oh, ow)

    # TODO(synk): training-mode BatchNorm running-stat updates are a PyTorch
    # in-place side effect and are not reproduced (they do not affect output).
    return lambda x: forward(x, ops)


# ---------------------------------------------------------------------------
# Parameters + pure-JAX reference (self-check).
# ---------------------------------------------------------------------------
def init_params(key):
    params = []
    for cfg in LAYER_CFGS:
        key, wk, gk, bk = jax.random.split(key, 4)
        fan = cfg["ci"] * cfg["k"] * cfg["k"]
        w = jax.random.normal(wk, (cfg["ci"], cfg["co"], cfg["k"], cfg["k"]),
                              jnp.float32) * (1.0 / math.sqrt(fan))
        gamma = 1.0 + 0.1 * jax.random.normal(gk, (cfg["co"],), jnp.float32)
        beta = 0.1 * jax.random.normal(bk, (cfg["co"],), jnp.float32)
        params.append((w, gamma, beta))
    return params


def _convT_ref(x, w, stride, padding):
    k = w.shape[2]
    wconv = jnp.flip(w, axis=(2, 3)).transpose(1, 0, 2, 3)   # (CO, CI, K, K)
    pad = k - 1 - padding
    return jax.lax.conv_general_dilated(
        x, wconv, window_strides=(1, 1), padding=[(pad, pad), (pad, pad)],
        lhs_dilation=(stride, stride),
        dimension_numbers=("NCHW", "OIHW", "NCHW"),
        precision=jax.lax.Precision.HIGHEST)


def decoder_reference(x, params):
    out = x
    for cfg, (w, gamma, beta) in zip(LAYER_CFGS, params):
        y = _convT_ref(out, w, cfg["s"], cfg["p"])
        mean = jnp.mean(y, axis=(0, 2, 3), keepdims=True)
        var = jnp.mean((y - mean) ** 2, axis=(0, 2, 3), keepdims=True)
        y = (y - mean) * jax.lax.rsqrt(var + BN_EPS)
        y = y * gamma[None, :, None, None] + beta[None, :, None, None]
        out = jnp.where(y >= 0.0, y, NEG_SLOPE * y)
    return out


if __name__ == "__main__":
    key = jax.random.PRNGKey(0)
    key, xk = jax.random.split(key)
    # Latent input implied by ConvTranspose2d(9, 4, 7, 1, 0): (N, 9, 1, 1)
    x = jax.random.normal(xk, (2, 9, 1, 1), jnp.float32)
    params = init_params(key)

    fwd = build_decoder_forward(params, 1, 1)
    out = jax.block_until_ready(fwd(x))

    assert out.shape == (2, 1, 28, 28), out.shape
    assert bool(jnp.all(jnp.isfinite(out)))

    # Tight check: reference using the SAME bf16-rounded conv weights
    # (validates the kernel math itself, independent of weight storage).
    params_q = [(w.astype(jnp.bfloat16).astype(jnp.float32), g, b)
                for (w, g, b) in params]
    ref_q = jax.block_until_ready(decoder_reference(x, params_q))
    assert bool(jnp.allclose(out, ref_q, atol=2e-3, rtol=2e-3)), float(
        jnp.max(jnp.abs(out - ref_q)))

    # Loose sanity check vs the exact-f32 reference (only bf16 weight-storage drift).
    ref = jax.block_until_ready(decoder_reference(x, params))
    assert bool(jnp.allclose(out, ref, atol=5e-2, rtol=5e-2)), float(
        jnp.max(jnp.abs(out - ref)))

    print("KERNEL_OK")
</pallas_src>

<mosaic_0001>
module attributes {stable_mosaic.version = 11 : i64} {
  func.func @kernel(%arg0: memref<2x9xf32, #tpu.memory_space<vmem>>, %arg1: memref<9x196xbf16, #tpu.memory_space<vmem>>, %arg2: memref<196x4xf32, #tpu.memory_space<vmem>>, %arg3: memref<6x196xf32, #tpu.memory_space<vmem>>, %arg4: memref<196x392xbf16, #tpu.memory_space<vmem>>, %arg5: memref<392x2xf32, #tpu.memory_space<vmem>>, %arg6: memref<4x392xf32, #tpu.memory_space<vmem>>, %arg7: memref<392x784xbf16, #tpu.memory_space<vmem>>, %arg8: memref<784x1xf32, #tpu.memory_space<vmem>>, %arg9: memref<3x784xf32, #tpu.memory_space<vmem>>, %arg10: memref<2x784xf32, #tpu.memory_space<vmem>>) attributes {dimension_semantics = [], scalar_prefetch = 0 : i64, scratch_operands = 0 : i64, tpu.core_type = #tpu.core_type<tc>} {
    %c0 = arith.constant 0 : index
    %c0_0 = arith.constant 0 : index
    %0 = vector.load %arg0[%c0, %c0_0] : memref<2x9xf32, #tpu.memory_space<vmem>>, vector<2x9xf32>
    %c0_1 = arith.constant 0 : index
    %c0_2 = arith.constant 0 : index
    %1 = vector.load %arg1[%c0_1, %c0_2] : memref<9x196xbf16, #tpu.memory_space<vmem>>, vector<9x196xbf16>
    %2 = arith.extf %1 : vector<9x196xbf16> to vector<9x196xf32>
    %cst = arith.constant dense<0.000000e+00> : vector<2x196xf32>
    %3 = tpu.matmul %0, %2, %cst {dimension_numbers = #tpu.dot_dimension_numbers<[1], [0], [0], [1], [0, 0, 1, 1], [], []>} : vector<2x9xf32>, vector<9x196xf32>, vector<2x196xf32> -> vector<2x196xf32>
    %c0_3 = arith.constant 0 : index
    %c0_4 = arith.constant 0 : index
    %4 = vector.load %arg2[%c0_3, %c0_4] : memref<196x4xf32, #tpu.memory_space<vmem>>, vector<196x4xf32>
    %c0_5 = arith.constant 0 : index
    %c0_6 = arith.constant 0 : index
    %5 = vector.load %arg3[%c0_5, %c0_6] : memref<6x196xf32, #tpu.memory_space<vmem>>, vector<4x196xf32>
    %c4 = arith.constant 4 : index
    %c0_7 = arith.constant 0 : index
    %6 = vector.load %arg3[%c4, %c0_7] : memref<6x196xf32, #tpu.memory_space<vmem>>, vector<1x196xf32>
    %c5 = arith.constant 5 : index
    %c0_8 = arith.constant 0 : index
    %7 = vector.load %arg3[%c5, %c0_8] : memref<6x196xf32, #tpu.memory_space<vmem>>, vector<1x196xf32>
    %cst_9 = arith.constant dense<0.000000e+00> : vector<2x4xf32>
    %8 = tpu.matmul %3, %4, %cst_9 {dimension_numbers = #tpu.dot_dimension_numbers<[1], [0], [0], [1], [0, 0, 1, 1], [], []>} : vector<2x196xf32>, vector<196x4xf32>, vector<2x4xf32> -> vector<2x4xf32>
    %cst_10 = arith.constant dense<0.000000e+00> : vector<4xf32>
    %9 = vector.multi_reduction <add>, %8, %cst_10 [0] : vector<2x4xf32> to vector<4xf32>
    %10 = vector.shape_cast %9 : vector<4xf32> to vector<1x4xf32>
    %cst_11 = arith.constant 0.0102040814 : f32
    %11 = vector.broadcast %cst_11 : f32 to vector<1x4xf32>
    %12 = arith.mulf %10, %11 : vector<1x4xf32>
    %cst_12 = arith.constant dense<0.000000e+00> : vector<1x196xf32>
    %13 = tpu.matmul %12, %5, %cst_12 {dimension_numbers = #tpu.dot_dimension_numbers<[1], [0], [0], [1], [0, 0, 1, 1], [], []>} : vector<1x4xf32>, vector<4x196xf32>, vector<1x196xf32> -> vector<1x196xf32>
    %14 = vector.broadcast %13 : vector<1x196xf32> to vector<2x196xf32>
    %15 = arith.subf %3, %14 : vector<2x196xf32>
    %16 = arith.mulf %15, %15 : vector<2x196xf32>
    %cst_13 = arith.constant dense<0.000000e+00> : vector<2x4xf32>
    %17 = tpu.matmul %16, %4, %cst_13 {dimension_numbers = #tpu.dot_dimension_numbers<[1], [0], [0], [1], [0, 0, 1, 1], [], []>} : vector<2x196xf32>, vector<196x4xf32>, vector<2x4xf32> -> vector<2x4xf32>
    %cst_14 = arith.constant dense<0.000000e+00> : vector<4xf32>
    %18 = vector.multi_reduction <add>, %17, %cst_14 [0] : vector<2x4xf32> to vector<4xf32>
    %19 = vector.shape_cast %18 : vector<4xf32> to vector<1x4xf32>
    %cst_15 = arith.constant 0.0102040814 : f32
    %20 = vector.broadcast %cst_15 : f32 to vector<1x4xf32>
    %21 = arith.mulf %19, %20 : vector<1x4xf32>
    %cst_16 = arith.constant 9.99999974E-6 : f32
    %22 = vector.broadcast %cst_16 : f32 to vector<1x4xf32>
    %23 = arith.addf %21, %22 : vector<1x4xf32>
    %24 = math.rsqrt %23 : vector<1x4xf32>
    %cst_17 = arith.constant dense<0.000000e+00> : vector<1x196xf32>
    %25 = tpu.matmul %24, %5, %cst_17 {dimension_numbers = #tpu.dot_dimension_numbers<[1], [0], [0], [1], [0, 0, 1, 1], [], []>} : vector<1x4xf32>, vector<4x196xf32>, vector<1x196xf32> -> vector<1x196xf32>
    %26 = arith.mulf %25, %6 : vector<1x196xf32>
    %27 = vector.broadcast %26 : vector<1x196xf32> to vector<2x196xf32>
    %28 = arith.mulf %15, %27 : vector<2x196xf32>
    %29 = vector.broadcast %7 : vector<1x196xf32> to vector<2x196xf32>
    %30 = arith.addf %28, %29 : vector<2x196xf32>
    %cst_18 = arith.constant 0.000000e+00 : f32
    %31 = vector.broadcast %cst_18 : f32 to vector<2x196xf32>
    %32 = arith.cmpf oge, %30, %31 : vector<2x196xf32>
    %cst_19 = arith.constant 0.00999999977 : f32
    %33 = vector.broadcast %cst_19 : f32 to vector<2x196xf32>
    %34 = arith.mulf %33, %30 : vector<2x196xf32>
    %35 = arith.select %32, %30, %34 : vector<2x196xi1>, vector<2x196xf32>
    %c0_20 = arith.constant 0 : index
    %c0_21 = arith.constant 0 : index
    %36 = vector.load %arg4[%c0_20, %c0_21] : memref<196x392xbf16, #tpu.memory_space<vmem>>, vector<196x392xbf16>
    %37 = arith.extf %36 : vector<196x392xbf16> to vector<196x392xf32>
    %cst_22 = arith.constant dense<0.000000e+00> : vector<2x392xf32>
    %38 = tpu.matmul %35, %37, %cst_22 {dimension_numbers = #tpu.dot_dimension_numbers<[1], [0], [0], [1], [0, 0, 1, 1], [], []>} : vector<2x196xf32>, vector<196x392xf32>, vector<2x392xf32> -> vector<2x392xf32>
    %c0_23 = arith.constant 0 : index
    %c0_24 = arith.constant 0 : index
    %39 = vector.load %arg5[%c0_23, %c0_24] : memref<392x2xf32, #tpu.memory_space<vmem>>, vector<392x2xf32>
    %c0_25 = arith.constant 0 : index
    %c0_26 = arith.constant 0 : index
    %40 = vector.load %arg6[%c0_25, %c0_26] : memref<4x392xf32, #tpu.memory_space<vmem>>, vector<2x392xf32>
    %c2 = arith.constant 2 : index
    %c0_27 = arith.constant 0 : index
    %41 = vector.load %arg6[%c2, %c0_27] : memref<4x392xf32, #tpu.memory_space<vmem>>, vector<1x392xf32>
    %c3 = arith.constant 3 : index
    %c0_28 = arith.constant 0 : index
    %42 = vector.load %arg6[%c3, %c0_28] : memref<4x392xf32, #tpu.memory_space<vmem>>, vector<1x392xf32>
    %cst_29 = arith.constant dense<0.000000e+00> : vector<2x2xf32>
    %43 = tpu.matmul %38, %39, %cst_29 {dimension_numbers = #tpu.dot_dimension_numbers<[1], [0], [0], [1], [0, 0, 1, 1], [], []>} : vector<2x392xf32>, vector<392x2xf32>, vector<2x2xf32> -> vector<2x2xf32>
    %cst_30 = arith.constant dense<0.000000e+00> : vector<2xf32>
    %44 = vector.multi_reduction <add>, %43, %cst_30 [0] : vector<2x2xf32> to vector<2xf32>
    %45 = vector.shape_cast %44 : vector<2xf32> to vector<1x2xf32>
    %cst_31 = arith.constant 0.00255102036 : f32
    %46 = vector.broadcast %cst_31 : f32 to vector<1x2xf32>
    %47 = arith.mulf %45, %46 : vector<1x2xf32>
    %cst_32 = arith.constant dense<0.000000e+00> : vector<1x392xf32>
    %48 = tpu.matmul %47, %40, %cst_32 {dimension_numbers = #tpu.dot_dimension_numbers<[1], [0], [0], [1], [0, 0, 1, 1], [], []>} : vector<1x2xf32>, vector<2x392xf32>, vector<1x392xf32> -> vector<1x392xf32>
    %49 = vector.broadcast %48 : vector<1x392xf32> to vector<2x392xf32>
    %50 = arith.subf %38, %49 : vector<2x392xf32>
    %51 = arith.mulf %50, %50 : vector<2x392xf32>
    %cst_33 = arith.constant dense<0.000000e+00> : vector<2x2xf32>
    %52 = tpu.matmul %51, %39, %cst_33 {dimension_numbers = #tpu.dot_dimension_numbers<[1], [0], [0], [1], [0, 0, 1, 1], [], []>} : vector<2x392xf32>, vector<392x2xf32>, vector<2x2xf32> -> vector<2x2xf32>
    %cst_34 = arith.constant dense<0.000000e+00> : vector<2xf32>
    %53 = vector.multi_reduction <add>, %52, %cst_34 [0] : vector<2x2xf32> to vector<2xf32>
    %54 = vector.shape_cast %53 : vector<2xf32> to vector<1x2xf32>
    %cst_35 = arith.constant 0.00255102036 : f32
    %55 = vector.broadcast %cst_35 : f32 to vector<1x2xf32>
    %56 = arith.mulf %54, %55 : vector<1x2xf32>
    %cst_36 = arith.constant 9.99999974E-6 : f32
    %57 = vector.broadcast %cst_36 : f32 to vector<1x2xf32>
    %58 = arith.addf %56, %57 : vector<1x2xf32>
    %59 = math.rsqrt %58 : vector<1x2xf32>
    %cst_37 = arith.constant dense<0.000000e+00> : vector<1x392xf32>
    %60 = tpu.matmul %59, %40, %cst_37 {dimension_numbers = #tpu.dot_dimension_numbers<[1], [0], [0], [1], [0, 0, 1, 1], [], []>} : vector<1x2xf32>, vector<2x392xf32>, vector<1x392xf32> -> vector<1x392xf32>
    %61 = arith.mulf %60, %41 : vector<1x392xf32>
    %62 = vector.broadcast %61 : vector<1x392xf32> to vector<2x392xf32>
    %63 = arith.mulf %50, %62 : vector<2x392xf32>
    %64 = vector.broadcast %42 : vector<1x392xf32> to vector<2x392xf32>
    %65 = arith.addf %63, %64 : vector<2x392xf32>
    %cst_38 = arith.constant 0.000000e+00 : f32
    %66 = vector.broadcast %cst_38 : f32 to vector<2x392xf32>
    %67 = arith.cmpf oge, %65, %66 : vector<2x392xf32>
    %cst_39 = arith.constant 0.00999999977 : f32
    %68 = vector.broadcast %cst_39 : f32 to vector<2x392xf32>
    %69 = arith.mulf %68, %65 : vector<2x392xf32>
    %70 = arith.select %67, %65, %69 : vector<2x392xi1>, vector<2x392xf32>
    %c0_40 = arith.constant 0 : index
    %c0_41 = arith.constant 0 : index
    %71 = vector.load %arg7[%c0_40, %c0_41] : memref<392x784xbf16, #tpu.memory_space<vmem>>, vector<392x784xbf16>
    %72 = arith.extf %71 : vector<392x784xbf16> to vector<392x784xf32>
    %cst_42 = arith.constant dense<0.000000e+00> : vector<2x784xf32>
    %73 = tpu.matmul %70, %72, %cst_42 {dimension_numbers = #tpu.dot_dimension_numbers<[1], [0], [0], [1], [0, 0, 1, 1], [], []>} : vector<2x392xf32>, vector<392x784xf32>, vector<2x784xf32> -> vector<2x784xf32>
    %c0_43 = arith.constant 0 : index
    %c0_44 = arith.constant 0 : index
    %74 = vector.load %arg8[%c0_43, %c0_44] : memref<784x1xf32, #tpu.memory_space<vmem>>, vector<784x1xf32>
    %c0_45 = arith.constant 0 : index
    %c0_46 = arith.constant 0 : index
    %75 = vector.load %arg9[%c0_45, %c0_46] : memref<3x784xf32, #tpu.memory_space<vmem>>, vector<1x784xf32>
    %c1 = arith.constant 1 : index
    %c0_47 = arith.constant 0 : index
    %76 = vector.load %arg9[%c1, %c0_47] : memref<3x784xf32, #tpu.memory_space<vmem>>, vector<1x784xf32>
    %c2_48 = arith.constant 2 : index
    %c0_49 = arith.constant 0 : index
    %77 = vector.load %arg9[%c2_48, %c0_49] : memref<3x784xf32, #tpu.memory_space<vmem>>, vector<1x784xf32>
    %cst_50 = arith.constant dense<0.000000e+00> : vector<2x1xf32>
    %78 = tpu.matmul %73, %74, %cst_50 {dimension_numbers = #tpu.dot_dimension_numbers<[1], [0], [0], [1], [0, 0, 1, 1], [], []>} : vector<2x784xf32>, vector<784x1xf32>, vector<2x1xf32> -> vector<2x1xf32>
    %cst_51 = arith.constant dense<0.000000e+00> : vector<1xf32>
    %79 = vector.multi_reduction <add>, %78, %cst_51 [0] : vector<2x1xf32> to vector<1xf32>
    %80 = vector.shape_cast %79 : vector<1xf32> to vector<1x1xf32>
    %cst_52 = arith.constant 6.37755089E-4 : f32
    %81 = vector.broadcast %cst_52 : f32 to vector<1x1xf32>
    %82 = arith.mulf %80, %81 : vector<1x1xf32>
    %cst_53 = arith.constant dense<0.000000e+00> : vector<1x784xf32>
    %83 = tpu.matmul %82, %75, %cst_53 {dimension_numbers = #tpu.dot_dimension_numbers<[1], [0], [0], [1], [0, 0, 1, 1], [], []>} : vector<1x1xf32>, vector<1x784xf32>, vector<1x784xf32> -> vector<1x784xf32>
    %84 = vector.broadcast %83 : vector<1x784xf32> to vector<2x784xf32>
    %85 = arith.subf %73, %84 : vector<2x784xf32>
    %86 = arith.mulf %85, %85 : vector<2x784xf32>
    %cst_54 = arith.constant dense<0.000000e+00> : vector<2x1xf32>
    %87 = tpu.matmul %86, %74, %cst_54 {dimension_numbers = #tpu.dot_dimension_numbers<[1], [0], [0], [1], [0, 0, 1, 1], [], []>} : vector<2x784xf32>, vector<784x1xf32>, vector<2x1xf32> -> vector<2x1xf32>
    %cst_55 = arith.constant dense<0.000000e+00> : vector<1xf32>
    %88 = vector.multi_reduction <add>, %87, %cst_55 [0] : vector<2x1xf32> to vector<1xf32>
    %89 = vector.shape_cast %88 : vector<1xf32> to vector<1x1xf32>
    %cst_56 = arith.constant 6.37755089E-4 : f32
    %90 = vector.broadcast %cst_56 : f32 to vector<1x1xf32>
    %91 = arith.mulf %89, %90 : vector<1x1xf32>
    %cst_57 = arith.constant 9.99999974E-6 : f32
    %92 = vector.broadcast %cst_57 : f32 to vector<1x1xf32>
    %93 = arith.addf %91, %92 : vector<1x1xf32>
    %94 = math.rsqrt %93 : vector<1x1xf32>
    %cst_58 = arith.constant dense<0.000000e+00> : vector<1x784xf32>
    %95 = tpu.matmul %94, %75, %cst_58 {dimension_numbers = #tpu.dot_dimension_numbers<[1], [0], [0], [1], [0, 0, 1, 1], [], []>} : vector<1x1xf32>, vector<1x784xf32>, vector<1x784xf32> -> vector<1x784xf32>
    %96 = arith.mulf %95, %76 : vector<1x784xf32>
    %97 = vector.broadcast %96 : vector<1x784xf32> to vector<2x784xf32>
    %98 = arith.mulf %85, %97 : vector<2x784xf32>
    %99 = vector.broadcast %77 : vector<1x784xf32> to vector<2x784xf32>
    %100 = arith.addf %98, %99 : vector<2x784xf32>
    %cst_59 = arith.constant 0.000000e+00 : f32
    %101 = vector.broadcast %cst_59 : f32 to vector<2x784xf32>
    %102 = arith.cmpf oge, %100, %101 : vector<2x784xf32>
    %cst_60 = arith.constant 0.00999999977 : f32
    %103 = vector.broadcast %cst_60 : f32 to vector<2x784xf32>
    %104 = arith.mulf %103, %100 : vector<2x784xf32>
    %105 = arith.select %102, %100, %104 : vector<2x784xi1>, vector<2x784xf32>
    %c0_61 = arith.constant 0 : index
    %c0_62 = arith.constant 0 : index
    %106 = vector.load %arg10[%c0_61, %c0_62] : memref<2x784xf32, #tpu.memory_space<vmem>>, vector<2x784xf32>
    tpu.vector_store %arg10[%c0_61, %c0_62], %105 {strides = array<i32>} : memref<2x784xf32, #tpu.memory_space<vmem>>, vector<2x784xf32>,
    return
  }
}

</mosaic_0001>

<llo_original>
// kernel: forward.1
$region0: #{forward.1}
  #allocation0 [shape = 'u32[]', space=smem, size = 0x4, offset = 0x4, fixed_abs, tag = 'smem constant byte address 0x4 - core index']
  #allocation1 [shape = 'u32[144,128]{1,0:T(1,128)}', space=vmem, size = 0x12000, scoped, tag = 'internal scratch']
  %s0 = inlined_call_operand.vmem [shape: f32[2,9], index: 0, kind: input, shape index: {}]
  %s1 = inlined_call_operand.vmem [shape: bf16[9,196], index: 1, kind: input, shape index: {}]
  %s2 = inlined_call_operand.vmem [shape: f32[196,4], index: 2, kind: input, shape index: {}]
  %s3 = inlined_call_operand.vmem [shape: f32[6,196], index: 3, kind: input, shape index: {}]
  %s4 = inlined_call_operand.vmem [shape: bf16[196,392], index: 4, kind: input, shape index: {}]
  %s5 = inlined_call_operand.vmem [shape: f32[392,2], index: 5, kind: input, shape index: {}]
  %s6 = inlined_call_operand.vmem [shape: f32[4,392], index: 6, kind: input, shape index: {}]
  %s7 = inlined_call_operand.vmem [shape: bf16[392,784], index: 7, kind: input, shape index: {}]
  %s8 = inlined_call_operand.vmem [shape: f32[784,1], index: 8, kind: input, shape index: {}]
  %s9 = inlined_call_operand.vmem [shape: f32[3,784], index: 9, kind: input, shape index: {}]
  %s10 = inlined_call_operand.vmem [shape: f32[2,784], index: 10, kind: output, shape index: {}]
  %s11 = sld [smem:[#allocation0]]
  $region50: #{forward.1} parent=0
    _
  %s13 = ssub.s32 1, %s11
  %s14 = scalar_select 0, %s13, %s11
  // Predicated region
  $region2: #{forward.1} parent=0 // pred_check
    _
  $region3: #{forward.1} parent=0 // pred_check_branch
    %16 = sbr.rel (0) target = $region5
  $region4: #{forward.1} parent=0 // pred_region
    _
  $region5: #{forward.1} parent=0 // pred_fallthru
    _
  // Predicated region
  $region6: #{forward.1} parent=0 // pred_check
    _
  $region7: #{forward.1} parent=0 // pred_check_branch
    %18 = sbr.rel (0) target = $region9
  $region8: #{forward.1} parent=0 // pred_region
    _
  $region9: #{forward.1} parent=0 // pred_fallthru
    _
  // Predicated region
  $region10: #{forward.1} parent=0 // pred_check
    _
  $region11: #{forward.1} parent=0 // pred_check_branch
    %20 = sbr.rel (0) target = $region13
  $region12: #{forward.1} parent=0 // pred_region
    _
  $region13: #{forward.1} parent=0 // pred_fallthru
    _
  // Predicated region
  $region14: #{forward.1} parent=0 // pred_check
    _
  $region15: #{forward.1} parent=0 // pred_check_branch
    %22 = sbr.rel (0) target = $region17
  $region16: #{forward.1} parent=0 // pred_region
    _
  $region17: #{forward.1} parent=0 // pred_fallthru
    _
  // Predicated region
  $region18: #{forward.1} parent=0 // pred_check
    _
  $region19: #{forward.1} parent=0 // pred_check_branch
    %24 = sbr.rel (0) target = $region21
  $region20: #{forward.1} parent=0 // pred_region
    _
  $region21: #{forward.1} parent=0 // pred_fallthru
    _
  // Predicated region
  $region22: #{forward.1} parent=0 // pred_check
    _
  $region23: #{forward.1} parent=0 // pred_check_branch
    %26 = sbr.rel (0) target = $region25
  $region24: #{forward.1} parent=0 // pred_region
    _
  $region25: #{forward.1} parent=0 // pred_fallthru
    _
  // Predicated region
  $region26: #{forward.1} parent=0 // pred_check
    _
  $region27: #{forward.1} parent=0 // pred_check_branch
    %28 = sbr.rel (0) target = $region29
  $region28: #{forward.1} parent=0 // pred_region
    _
  $region29: #{forward.1} parent=0 // pred_fallthru
    _
  // Predicated region
  $region30: #{forward.1} parent=0 // pred_check
    _
  $region31: #{forward.1} parent=0 // pred_check_branch
    %30 = sbr.rel (0) target = $region33
  $region32: #{forward.1} parent=0 // pred_region
    _
  $region33: #{forward.1} parent=0 // pred_fallthru
    _
  // Predicated region
  $region34: #{forward.1} parent=0 // pred_check
    _
  $region35: #{forward.1} parent=0 // pred_check_branch
    %32 = sbr.rel (0) target = $region37
  $region36: #{forward.1} parent=0 // pred_region
    _
  $region37: #{forward.1} parent=0 // pred_fallthru
    _
  // Predicated region
  $region38: #{forward.1} parent=0 // pred_check
    _
  $region39: #{forward.1} parent=0 // pred_check_branch
    %34 = sbr.rel (0) target = $region41
  $region40: #{forward.1} parent=0 // pred_region
    _
  $region41: #{forward.1} parent=0 // pred_fallthru
    _
  %v35 = vld [vmem:[%s0] sm:$0x3]
  %v36 = vld [vmem:[%s1] sm:$0xff]
  %v37 = vld [vmem:[%s1 + $0x8] sm:$0x11]
  %v38 = vunpack.c.l.bf16 %v36
  %v39 = vunpack.c.h.bf16 %v36
  %v40 = vunpack.c.l.bf16 %v37
  %v41 = vunpack.c.h.bf16 %v37
  %vm42 = vcmask 72704
  %v44 = vsel %vm42, %v35, 0
  %vm46 = vcmask 1040384
  %v48 = vsel %vm46, %v40, 0
  %v51 = vsel %vm46, %v41, 0
  %53 = vmatprep.subr.mxu0 0.0
  %54 = vmatpush1.msra.mxu0 0.0
  %55 = vmatprep.subr.mxu0 0.0
  %56 = vmatpush1.msra.mxu0 0.0
  %57 = vmatprep.subr.mxu0 0.0
  %58 = vmatpush1.msra.mxu0 0.0
  %59 = vmatprep.subr.mxu0 0.0
  %60 = vmatpush1.msra.mxu0 0.0
  %61 = vmatprep.subr.mxu0 0.0
  %62 = vmatpush1.msra.mxu0 0.0
  %63 = vmatprep.subr.mxu0 0.0
  %64 = vmatpush1.msra.mxu0 0.0
  %65 = vmatprep.subr.mxu0 0.0
  %66 = vmatpush1.msra.mxu0 0.0
  %67 = vmatprep.subr.mxu0 0.0
  %68 = vmatpush1.msra.mxu0 0.0
  %69 = vmatprep.subr.mxu0 0.0
  %70 = vmatpush1.msra.mxu0 0.0
  %71 = vmatprep.subr.mxu0 0.0
  %72 = vmatpush1.msra.mxu0 0.0
  %73 = vmatprep.subr.mxu0 0.0
  %74 = vmatpush1.msra.mxu0 0.0
  %75 = vmatprep.subr.mxu0 0.0
  %76 = vmatpush1.msra.mxu0 0.0
  %77 = vmatprep.subr.mxu0 0.0
  %78 = vmatpush1.msra.mxu0 0.0
  %79 = vmatprep.subr.mxu0 0.0
  %80 = vmatpush1.msra.mxu0 0.0
  %81 = vmatprep.subr.mxu0 %v51
  %82 = vmatpush1.msra.mxu0 %v48
  %83 = vmatprep.subr.mxu0 %v39
  %84 = vmatpush1.msra.mxu0 %v38
  %85 = vmatprep.subr.mxu0 0.0
  %86 = vmatpush2.msra.mxu0 0.0
  %87 = vmatprep.subr.mxu0 0.0
  %88 = vmatpush2.msra.mxu0 0.0
  %89 = vmatprep.subr.mxu0 0.0
  %90 = vmatpush2.msra.mxu0 0.0
  %91 = vmatprep.subr.mxu0 0.0
  %92 = vmatpush2.msra.mxu0 0.0
  %93 = vmatprep.subr.mxu0 0.0
  %94 = vmatpush2.msra.mxu0 0.0
  %95 = vmatprep.subr.mxu0 0.0
  %96 = vmatpush2.msra.mxu0 0.0
  %97 = vmatprep.subr.mxu0 0.0
  %98 = vmatpush2.msra.mxu0 0.0
  %99 = vmatprep.subr.mxu0 0.0
  %100 = vmatpush2.msra.mxu0 0.0
  %101 = vmatprep.subr.mxu0 0.0
  %102 = vmatpush2.msra.mxu0 0.0
  %103 = vmatprep.subr.mxu0 0.0
  %104 = vmatpush2.msra.mxu0 0.0
  %105 = vmatprep.subr.mxu0 0.0
  %106 = vmatpush2.msra.mxu0 0.0
  %107 = vmatprep.subr.mxu0 0.0
  %108 = vmatpush2.msra.mxu0 0.0
  %109 = vmatprep.subr.mxu0 0.0
  %110 = vmatpush2.msra.mxu0 0.0
  %111 = vmatprep.subr.mxu0 0.0
  %112 = vmatpush2.msra.mxu0 0.0
  %113 = vmatprep.subr.mxu0 0.0
  %114 = vmatpush2.msra.mxu0 0.0
  %115 = vmatprep.subr.mxu0 0.0
  %116 = vmatpush2.msra.mxu0 0.0
  %117 = vmatprep.mubr.f32.mxu0 0.0
  %118 = vmatmul.mubr.f32.gmra.mxu0 %v44
  %v119 = vpop.f32.mrf.mxu0
  %v120 = vadd.f32 0.0, %v119
  %v121 = vpop.f32.mrf.mxu0
  %v122 = vadd.f32 0.0, %v121
  %123 = vdwg.mxu0
  %v124 = vld [vmem:[%s2] sm:$0xff]
  %v125 = vld [vmem:[%s2 + $0x8] sm:$0xff]
  %v126 = vld [vmem:[%s2 + $0x10] sm:$0xff]
  %v127 = vld [vmem:[%s2 + $0x18] sm:$0xff]
  %v128 = vld [vmem:[%s2 + $0x20] sm:$0xff]
  %v129 = vld [vmem:[%s2 + $0x28] sm:$0xff]
  %v130 = vld [vmem:[%s2 + $0x30] sm:$0xff]
  %v131 = vld [vmem:[%s2 + $0x38] sm:$0xff]
  %v132 = vld [vmem:[%s2 + $0x40] sm:$0xff]
  %v133 = vld [vmem:[%s2 + $0x48] sm:$0xff]
  %v134 = vld [vmem:[%s2 + $0x50] sm:$0xff]
  %v135 = vld [vmem:[%s2 + $0x58] sm:$0xff]
  %v136 = vld [vmem:[%s2 + $0x60] sm:$0xff]
  %v137 = vld [vmem:[%s2 + $0x68] sm:$0xff]
  %v138 = vld [vmem:[%s2 + $0x70] sm:$0xff]
  %v139 = vld [vmem:[%s2 + $0x78] sm:$0xff]
  %v140 = vld [vmem:[%s2 + $0x80] sm:$0xff]
  %v141 = vld [vmem:[%s2 + $0x88] sm:$0xff]
  %v142 = vld [vmem:[%s2 + $0x90] sm:$0xff]
  %v143 = vld [vmem:[%s2 + $0x98] sm:$0xff]
  %v144 = vld [vmem:[%s2 + $0xa0] sm:$0xff]
  %v145 = vld [vmem:[%s2 + $0xa8] sm:$0xff]
  %v146 = vld [vmem:[%s2 + $0xb0] sm:$0xff]
  %v147 = vld [vmem:[%s2 + $0xb8] sm:$0xff]
  %v148 = vld [vmem:[%s2 + $0xc0] sm:$0xf]
  %v149 = vld [vmem:[%s3] sm:$0xf]
  %v150 = vld [vmem:[%s3 + $0x8] sm:$0xf]
  %s151 = scalar_lea.vmem %s3, 4
  %v152 = vld [vmem:[%s151] ss:$8 sm:$0x3]
  %s153 = scalar_lea.vmem %s3, 5
  %v154 = vld [vmem:[%s153] ss:$8 sm:$0x3]
  %vm155 = vcmask 556032
  %v157 = vsel %vm155, %v122, 0
  %vm159 = vcmask 1043456
  %v161 = vsel %vm159, %v148, 0
  %163 = vmatprep.subr.mxu0 0.0
  %164 = vmatpush1.msra.mxu0 %v139
  %165 = vmatprep.subr.mxu0 0.0
  %166 = vmatpush1.msra.mxu0 %v138
  %167 = vmatprep.subr.mxu0 0.0
  %168 = vmatpush1.msra.mxu0 %v137
  %169 = vmatprep.subr.mxu0 0.0
  %170 = vmatpush1.msra.mxu0 %v136
  %171 = vmatprep.subr.mxu0 0.0
  %172 = vmatpush1.msra.mxu0 %v135
  %173 = vmatprep.subr.mxu0 0.0
  %174 = vmatpush1.msra.mxu0 %v134
  %175 = vmatprep.subr.mxu0 0.0
  %176 = vmatpush1.msra.mxu0 %v133
  %177 = vmatprep.subr.mxu0 0.0
  %178 = vmatpush1.msra.mxu0 %v132
  %179 = vmatprep.subr.mxu0 0.0
  %180 = vmatpush1.msra.mxu0 %v131
  %181 = vmatprep.subr.mxu0 0.0
  %182 = vmatpush1.msra.mxu0 %v130
  %183 = vmatprep.subr.mxu0 0.0
  %184 = vmatpush1.msra.mxu0 %v129
  %185 = vmatprep.subr.mxu0 0.0
  %186 = vmatpush1.msra.mxu0 %v128
  %187 = vmatprep.subr.mxu0 0.0
  %188 = vmatpush1.msra.mxu0 %v127
  %189 = vmatprep.subr.mxu0 0.0
  %190 = vmatpush1.msra.mxu0 %v126
  %191 = vmatprep.subr.mxu0 0.0
  %192 = vmatpush1.msra.mxu0 %v125
  %193 = vmatprep.subr.mxu0 0.0
  %194 = vmatpush1.msra.mxu0 %v124
  %195 = vmatprep.subr.mxu0 0.0
  %196 = vmatpush2.msra.mxu0 0.0
  %197 = vmatprep.subr.mxu0 0.0
  %198 = vmatpush2.msra.mxu0 0.0
  %199 = vmatprep.subr.mxu0 0.0
  %200 = vmatpush2.msra.mxu0 0.0
  %201 = vmatprep.subr.mxu0 0.0
  %202 = vmatpush2.msra.mxu0 0.0
  %203 = vmatprep.subr.mxu0 0.0
  %204 = vmatpush2.msra.mxu0 0.0
  %205 = vmatprep.subr.mxu0 0.0
  %206 = vmatpush2.msra.mxu0 0.0
  %207 = vmatprep.subr.mxu0 0.0
  %208 = vmatpush2.msra.mxu0 0.0
  %209 = vmatprep.subr.mxu0 0.0
  %210 = vmatpush2.msra.mxu0 %v161
  %211 = vmatprep.subr.mxu0 0.0
  %212 = vmatpush2.msra.mxu0 %v147
  %213 = vmatprep.subr.mxu0 0.0
  %214 = vmatpush2.msra.mxu0 %v146
  %215 = vmatprep.subr.mxu0 0.0
  %216 = vmatpush2.msra.mxu0 %v145
  %217 = vmatprep.subr.mxu0 0.0
  %218 = vmatpush2.msra.mxu0 %v144
  %219 = vmatprep.subr.mxu0 0.0
  %220 = vmatpush2.msra.mxu0 %v143
  %221 = vmatprep.subr.mxu0 0.0
  %222 = vmatpush2.msra.mxu0 %v142
  %223 = vmatprep.subr.mxu0 0.0
  %224 = vmatpush2.msra.mxu0 %v141
  %225 = vmatprep.subr.mxu0 0.0
  %226 = vmatpush2.msra.mxu0 %v140
  %227 = vmatprep.mubr.f32.mxu0 %v157
  %228 = vmatmul.mubr.f32.gmra.mxu0 %v120
  %v229 = vpop.f32.mrf.mxu0
  %v230 = vadd.f32 0.0, %v229
  %v231 = vpop.f32.mrf.mxu0
  %232 = vdwg.mxu0
  %vm233 = vcmask 25600
  %v234 = vsel %vm233, %v230, 0.0
  %v235 = vrot.slane %v234, 4
  %v236 = vadd.f32 %v234, %v235
  %v237 = vrot.slane %v236, 2
  %v238 = vadd.f32 %v236, %v237
  %v239 = vrot.slane %v238, 1
  %v240 = vadd.f32 %v238, %v239
  %v241 = vmul.f32 %v240, 0.010204081
  %vm242 = vcmask 31744
  %v244 = vsel %vm242, %v241, 0
  %v247 = vsel %vm159, %v149, 0
  %v250 = vsel %vm159, %v150, 0
  %252 = vmatprep.subr.mxu0 0.0
  %253 = vmatpush1.msra.mxu0 0.0
  %254 = vmatprep.subr.mxu0 0.0
  %255 = vmatpush1.msra.mxu0 0.0
  %256 = vmatprep.subr.mxu0 0.0
  %257 = vmatpush1.msra.mxu0 0.0
  %258 = vmatprep.subr.mxu0 0.0
  %259 = vmatpush1.msra.mxu0 0.0
  %260 = vmatprep.subr.mxu0 0.0
  %261 = vmatpush1.msra.mxu0 0.0
  %262 = vmatprep.subr.mxu0 0.0
  %263 = vmatpush1.msra.mxu0 0.0
  %264 = vmatprep.subr.mxu0 0.0
  %265 = vmatpush1.msra.mxu0 0.0
  %266 = vmatprep.subr.mxu0 0.0
  %267 = vmatpush1.msra.mxu0 0.0
  %268 = vmatprep.subr.mxu0 0.0
  %269 = vmatpush1.msra.mxu0 0.0
  %270 = vmatprep.subr.mxu0 0.0
  %271 = vmatpush1.msra.mxu0 0.0
  %272 = vmatprep.subr.mxu0 0.0
  %273 = vmatpush1.msra.mxu0 0.0
  %274 = vmatprep.subr.mxu0 0.0
  %275 = vmatpush1.msra.mxu0 0.0
  %276 = vmatprep.subr.mxu0 0.0
  %277 = vmatpush1.msra.mxu0 0.0
  %278 = vmatprep.subr.mxu0 0.0
  %279 = vmatpush1.msra.mxu0 0.0
  %280 = vmatprep.subr.mxu0 0.0
  %281 = vmatpush1.msra.mxu0 0.0
  %282 = vmatprep.subr.mxu0 %v250
  %283 = vmatpush1.msra.mxu0 %v247
  %284 = vmatprep.subr.mxu0 0.0
  %285 = vmatpush2.msra.mxu0 0.0
  %286 = vmatprep.subr.mxu0 0.0
  %287 = vmatpush2.msra.mxu0 0.0
  %288 = vmatprep.subr.mxu0 0.0
  %289 = vmatpush2.msra.mxu0 0.0
  %290 = vmatprep.subr.mxu0 0.0
  %291 = vmatpush2.msra.mxu0 0.0
  %292 = vmatprep.subr.mxu0 0.0
  %293 = vmatpush2.msra.mxu0 0.0
  %294 = vmatprep.subr.mxu0 0.0
  %295 = vmatpush2.msra.mxu0 0.0
  %296 = vmatprep.subr.mxu0 0.0
  %297 = vmatpush2.msra.mxu0 0.0
  %298 = vmatprep.subr.mxu0 0.0
  %299 = vmatpush2.msra.mxu0 0.0
  %300 = vmatprep.subr.mxu0 0.0
  %301 = vmatpush2.msra.mxu0 0.0
  %302 = vmatprep.subr.mxu0 0.0
  %303 = vmatpush2.msra.mxu0 0.0
  %304 = vmatprep.subr.mxu0 0.0
  %305 = vmatpush2.msra.mxu0 0.0
  %306 = vmatprep.subr.mxu0 0.0
  %307 = vmatpush2.msra.mxu0 0.0
  %308 = vmatprep.subr.mxu0 0.0
  %309 = vmatpush2.msra.mxu0 0.0
  %310 = vmatprep.subr.mxu0 0.0
  %311 = vmatpush2.msra.mxu0 0.0
  %312 = vmatprep.subr.mxu0 0.0
  %313 = vmatpush2.msra.mxu0 0.0
  %314 = vmatprep.subr.mxu0 0.0
  %315 = vmatpush2.msra.mxu0 0.0
  %316 = vmatprep.mubr.f32.mxu0 0.0
  %317 = vmatmul.mubr.f32.gmra.mxu0 %v244
  %v318 = vpop.f32.mrf.mxu0
  %v319 = vadd.f32 0.0, %v318
  %v320 = vpop.f32.mrf.mxu0
  %v321 = vadd.f32 0.0, %v320
  %322 = vdwg.mxu0
  %v323 = vlaneseq
  %v324 = vshrl.u32 %v323, 7
  %v325 = vsub.s32 0, %v324
  %v326 = vrot.slane %v319, %v325
  %v327 = vlaneseq
  %v328 = vshrl.u32 %v327, 7
  %v329 = vsub.s32 0, %v328
  %v330 = vrot.slane %v321, %v329
  %v331 = vsub.f32 %v120, %v326
  %v332 = vsub.f32 %v122, %v330
  %v333 = vmul.f32 %v331, %v331
  %v334 = vmul.f32 %v332, %v332
  %v336 = vsel %vm155, %v334, 0
  %338 = vmatprep.subr.mxu0 0.0
  %339 = vmatpush1.msra.mxu0 %v139
  %340 = vmatprep.subr.mxu0 0.0
  %341 = vmatpush1.msra.mxu0 %v138
  %342 = vmatprep.subr.mxu0 0.0
  %343 = vmatpush1.msra.mxu0 %v137
  %344 = vmatprep.subr.mxu0 0.0
  %345 = vmatpush1.msra.mxu0 %v136
  %346 = vmatprep.subr.mxu0 0.0
  %347 = vmatpush1.msra.mxu0 %v135
  %348 = vmatprep.subr.mxu0 0.0
  %349 = vmatpush1.msra.mxu0 %v134
  %350 = vmatprep.subr.mxu0 0.0
  %351 = vmatpush1.msra.mxu0 %v133
  %352 = vmatprep.subr.mxu0 0.0
  %353 = vmatpush1.msra.mxu0 %v132
  %354 = vmatprep.subr.mxu0 0.0
  %355 = vmatpush1.msra.mxu0 %v131
  %356 = vmatprep.subr.mxu0 0.0
  %357 = vmatpush1.msra.mxu0 %v130
  %358 = vmatprep.subr.mxu0 0.0
  %359 = vmatpush1.msra.mxu0 %v129
  %360 = vmatprep.subr.mxu0 0.0
  %361 = vmatpush1.msra.mxu0 %v128
  %362 = vmatprep.subr.mxu0 0.0
  %363 = vmatpush1.msra.mxu0 %v127
  %364 = vmatprep.subr.mxu0 0.0
  %365 = vmatpush1.msra.mxu0 %v126
  %366 = vmatprep.subr.mxu0 0.0
  %367 = vmatpush1.msra.mxu0 %v125
  %368 = vmatprep.subr.mxu0 0.0
  %369 = vmatpush1.msra.mxu0 %v124
  %370 = vmatprep.subr.mxu0 0.0
  %371 = vmatpush2.msra.mxu0 0.0
  %372 = vmatprep.subr.mxu0 0.0
  %373 = vmatpush2.msra.mxu0 0.0
  %374 = vmatprep.subr.mxu0 0.0
  %375 = vmatpush2.msra.mxu0 0.0
  %376 = vmatprep.subr.mxu0 0.0
  %377 = vmatpush2.msra.mxu0 0.0
  %378 = vmatprep.subr.mxu0 0.0
  %379 = vmatpush2.msra.mxu0 0.0
  %380 = vmatprep.subr.mxu0 0.0
  %381 = vmatpush2.msra.mxu0 0.0
  %382 = vmatprep.subr.mxu0 0.0
  %383 = vmatpush2.msra.mxu0 0.0
  %384 = vmatprep.subr.mxu0 0.0
  %385 = vmatpush2.msra.mxu0 %v161
  %386 = vmatprep.subr.mxu0 0.0
  %387 = vmatpush2.msra.mxu0 %v147
  %388 = vmatprep.subr.mxu0 0.0
  %389 = vmatpush2.msra.mxu0 %v146
  %390 = vmatprep.subr.mxu0 0.0
  %391 = vmatpush2.msra.mxu0 %v145
  %392 = vmatprep.subr.mxu0 0.0
  %393 = vmatpush2.msra.mxu0 %v144
  %394 = vmatprep.subr.mxu0 0.0
  %395 = vmatpush2.msra.mxu0 %v143
  %396 = vmatprep.subr.mxu0 0.0
  %397 = vmatpush2.msra.mxu0 %v142
  %398 = vmatprep.subr.mxu0 0.0
  %399 = vmatpush2.msra.mxu0 %v141
  %400 = vmatprep.subr.mxu0 0.0
  %401 = vmatpush2.msra.mxu0 %v140
  %402 = vmatprep.mubr.f32.mxu0 %v336
  %403 = vmatmul.mubr.f32.gmra.mxu0 %v333
  %v404 = vpop.f32.mrf.mxu0
  %v405 = vadd.f32 0.0, %v404
  %v406 = vpop.f32.mrf.mxu0
  %407 = vdwg.mxu0
  %v408 = vsel %vm233, %v405, 0.0
  %v409 = vrot.slane %v408, 4
  %v410 = vadd.f32 %v408, %v409
  %v411 = vrot.slane %v410, 2
  %v412 = vadd.f32 %v410, %v411
  %v413 = vrot.slane %v412, 1
  %v414 = vadd.f32 %v412, %v413
  %v415 = vmul.f32 %v414, 0.010204081
  %v416 = vadd.f32 %v415, 1e-05
  %v417 = vrsqrt.pop %v416
  %v419 = vsel %vm242, %v417, 0
  %421 = vmatprep.subr.mxu0 0.0
  %422 = vmatpush1.msra.mxu0 0.0
  %423 = vmatprep.subr.mxu0 0.0
  %424 = vmatpush1.msra.mxu0 0.0
  %425 = vmatprep.subr.mxu0 0.0
  %426 = vmatpush1.msra.mxu0 0.0
  %427 = vmatprep.subr.mxu0 0.0
  %428 = vmatpush1.msra.mxu0 0.0
  %429 = vmatprep.subr.mxu0 0.0
  %430 = vmatpush1.msra.mxu0 0.0
  %431 = vmatprep.subr.mxu0 0.0
  %432 = vmatpush1.msra.mxu0 0.0
  %433 = vmatprep.subr.mxu0 0.0
  %434 = vmatpush1.msra.mxu0 0.0
  %435 = vmatprep.subr.mxu0 0.0
  %436 = vmatpush1.msra.mxu0 0.0
  %437 = vmatprep.subr.mxu0 0.0
  %438 = vmatpush1.msra.mxu0 0.0
  %439 = vmatprep.subr.mxu0 0.0
  %440 = vmatpush1.msra.mxu0 0.0
  %441 = vmatprep.subr.mxu0 0.0
  %442 = vmatpush1.msra.mxu0 0.0
  %443 = vmatprep.subr.mxu0 0.0
  %444 = vmatpush1.msra.mxu0 0.0
  %445 = vmatprep.subr.mxu0 0.0
  %446 = vmatpush1.msra.mxu0 0.0
  %447 = vmatprep.subr.mxu0 0.0
  %448 = vmatpush1.msra.mxu0 0.0
  %449 = vmatprep.subr.mxu0 0.0
  %450 = vmatpush1.msra.mxu0 0.0
  %451 = vmatprep.subr.mxu0 %v250
  %452 = vmatpush1.msra.mxu0 %v247
  %453 = vmatprep.subr.mxu0 0.0
  %454 = vmatpush2.msra.mxu0 0.0
  %455 = vmatprep.subr.mxu0 0.0
  %456 = vmatpush2.msra.mxu0 0.0
  %457 = vmatprep.subr.mxu0 0.0
  %458 = vmatpush2.msra.mxu0 0.0
  %459 = vmatprep.subr.mxu0 0.0
  %460 = vmatpush2.msra.mxu0 0.0
  %461 = vmatprep.subr.mxu0 0.0
  %462 = vmatpush2.msra.mxu0 0.0
  %463 = vmatprep.subr.mxu0 0.0
  %464 = vmatpush2.msra.mxu0 0.0
  %465 = vmatprep.subr.mxu0 0.0
  %466 = vmatpush2.msra.mxu0 0.0
  %467 = vmatprep.subr.mxu0 0.0
  %468 = vmatpush2.msra.mxu0 0.0
  %469 = vmatprep.subr.mxu0 0.0
  %470 = vmatpush2.msra.mxu0 0.0
  %471 = vmatprep.subr.mxu0 0.0
  %472 = vmatpush2.msra.mxu0 0.0
  %473 = vmatprep.subr.mxu0 0.0
  %474 = vmatpush2.msra.mxu0 0.0
  %475 = vmatprep.subr.mxu0 0.0
  %476 = vmatpush2.msra.mxu0 0.0
  %477 = vmatprep.subr.mxu0 0.0
  %478 = vmatpush2.msra.mxu0 0.0
  %479 = vmatprep.subr.mxu0 0.0
  %480 = vmatpush2.msra.mxu0 0.0
  %481 = vmatprep.subr.mxu0 0.0
  %482 = vmatpush2.msra.mxu0 0.0
  %483 = vmatprep.subr.mxu0 0.0
  %484 = vmatpush2.msra.mxu0 0.0
  %485 = vmatprep.mubr.f32.mxu0 0.0
  %486 = vmatmul.mubr.f32.gmra.mxu0 %v419
  %v487 = vpop.f32.mrf.mxu0
  %v488 = vadd.f32 0.0, %v487
  %v489 = vpop.f32.mrf.mxu0
  %v490 = vadd.f32 0.0, %v489
  %491 = vdwg.mxu0
  %v493 = vlaneseq
  %v494 = vshrl.u32 %v493, 7
  %v495 = vsub.s32 0, %v494
  %v496 = vrot.slane %v152, %v495
  %v497 = vlaneseq
  %v498 = vshrl.u32 %v497, 7
  %v499 = vsub.s32 1, %v498
  %v500 = vrot.slane %v152, %v499
  %v503 = vmul.f32 %v488, %v496
  %v504 = vmul.f32 %v490, %v500
  %v505 = vlaneseq
  %v506 = vshrl.u32 %v505, 7
  %v507 = vsub.s32 0, %v506
  %v508 = vrot.slane %v503, %v507
  %v509 = vlaneseq
  %v510 = vshrl.u32 %v509, 7
  %v511 = vsub.s32 0, %v510
  %v512 = vrot.slane %v504, %v511
  %v513 = vmul.f32 %v331, %v508
  %v514 = vmul.f32 %v332, %v512
  %v516 = vlaneseq
  %v517 = vshrl.u32 %v516, 7
  %v518 = vsub.s32 0, %v517
  %v519 = vrot.slane %v154, %v518
  %v520 = vlaneseq
  %v521 = vshrl.u32 %v520, 7
  %v522 = vsub.s32 1, %v521
  %v523 = vrot.slane %v154, %v522
  %v526 = vadd.f32 %v513, %v519
  %v527 = vadd.f32 %v514, %v523
  %vm528 = vcmp.ge.f32.partialorder %v526, 0.0
  %vm529 = vcmp.ge.f32.partialorder %v527, 0.0
  %v530 = vmul.f32 %v526, 0.01
  %v531 = vmul.f32 %v527, 0.01
  %v532 = vsel %vm528, %v526, %v530
  %v533 = vsel %vm529, %v527, %v531
  %v534 = vld [vmem:[%s4] sm:$0xff]
  %v535 = vld [vmem:[%s4 + $0x8] sm:$0xff]
  %v536 = vld [vmem:[%s4 + $0x10] sm:$0xff]
  %v537 = vld [vmem:[%s4 + $0x18] sm:$0xff]
  %v538 = vld [vmem:[%s4 + $0x20] sm:$0xff]
  %v539 = vld [vmem:[%s4 + $0x28] sm:$0xff]
  %v540 = vld [vmem:[%s4 + $0x30] sm:$0xff]
  %v541 = vld [vmem:[%s4 + $0x38] sm:$0xff]
  %v542 = vld [vmem:[%s4 + $0x40] sm:$0xff]
  %v543 = vld [vmem:[%s4 + $0x48] sm:$0xff]
  %v544 = vld [vmem:[%s4 + $0x50] sm:$0xff]
  %v545 = vld [vmem:[%s4 + $0x58] sm:$0xff]
  %v546 = vld [vmem:[%s4 + $0x60] sm:$0xff]
  %v547 = vld [vmem:[%s4 + $0x68] sm:$0xff]
  %v548 = vld [vmem:[%s4 + $0x70] sm:$0xff]
  %v549 = vld [vmem:[%s4 + $0x78] sm:$0xff]
  %v550 = vld [vmem:[%s4 + $0x80] sm:$0xff]
  %v551 = vld [vmem:[%s4 + $0x88] sm:$0xff]
  %v552 = vld [vmem:[%s4 + $0x90] sm:$0xff]
  %v553 = vld [vmem:[%s4 + $0x98] sm:$0xff]
  %v554 = vld [vmem:[%s4 + $0xa0] sm:$0xff]
  %v555 = vld [vmem:[%s4 + $0xa8] sm:$0xff]
  %v556 = vld [vmem:[%s4 + $0xb0] sm:$0xff]
  %v557 = vld [vmem:[%s4 + $0xb8] sm:$0xff]
  %v558 = vld [vmem:[%s4 + $0xc0] sm:$0xff]
  %v559 = vld [vmem:[%s4 + $0xc8] sm:$0xff]
  %v560 = vld [vmem:[%s4 + $0xd0] sm:$0xff]
  %v561 = vld [vmem:[%s4 + $0xd8] sm:$0xff]
  %v562 = vld [vmem:[%s4 + $0xe0] sm:$0xff]
  %v563 = vld [vmem:[%s4 + $0xe8] sm:$0xff]
  %v564 = vld [vmem:[%s4 + $0xf0] sm:$0xff]
  %v565 = vld [vmem:[%s4 + $0xf8] sm:$0xff]
  %v566 = vld [vmem:[%s4 + $0x100] sm:$0xff]
  %v567 = vld [vmem:[%s4 + $0x108] sm:$0xff]
  %v568 = vld [vmem:[%s4 + $0x110] sm:$0xff]
  %v569 = vld [vmem:[%s4 + $0x118] sm:$0xff]
  %v570 = vld [vmem:[%s4 + $0x120] sm:$0xff]
  %v571 = vld [vmem:[%s4 + $0x128] sm:$0xff]
  %v572 = vld [vmem:[%s4 + $0x130] sm:$0xff]
  %v573 = vld [vmem:[%s4 + $0x138] sm:$0xff]
  %v574 = vld [vmem:[%s4 + $0x140] sm:$0xff]
  %v575 = vld [vmem:[%s4 + $0x148] sm:$0xff]
  %v576 = vld [vmem:[%s4 + $0x150] sm:$0xff]
  %v577 = vld [vmem:[%s4 + $0x158] sm:$0xff]
  %v578 = vld [vmem:[%s4 + $0x160] sm:$0xff]
  %v579 = vld [vmem:[%s4 + $0x168] sm:$0xff]
  %v580 = vld [vmem:[%s4 + $0x170] sm:$0xff]
  %v581 = vld [vmem:[%s4 + $0x178] sm:$0xff]
  %v582 = vld [vmem:[%s4 + $0x180] sm:$0x33]
  %v583 = vld [vmem:[%s4 + $0x188] sm:$0x33]
  %v584 = vunpack.c.l.bf16 %v534
  %v585 = vunpack.c.h.bf16 %v534
  %v586 = vunpack.c.l.bf16 %v535
  %v587 = vunpack.c.h.bf16 %v535
  %v588 = vunpack.c.l.bf16 %v536
  %v589 = vunpack.c.h.bf16 %v536
  %v590 = vunpack.c.l.bf16 %v537
  %v591 = vunpack.c.h.bf16 %v537
  %v592 = vunpack.c.l.bf16 %v538
  %v593 = vunpack.c.h.bf16 %v538
  %v594 = vunpack.c.l.bf16 %v539
  %v595 = vunpack.c.h.bf16 %v539
  %v596 = vunpack.c.l.bf16 %v540
  %v597 = vunpack.c.h.bf16 %v540
  %v598 = vunpack.c.l.bf16 %v541
  %v599 = vunpack.c.h.bf16 %v541
  %v600 = vunpack.c.l.bf16 %v542
  %v601 = vunpack.c.h.bf16 %v542
  %v602 = vunpack.c.l.bf16 %v543
  %v603 = vunpack.c.h.bf16 %v543
  %v604 = vunpack.c.l.bf16 %v544
  %v605 = vunpack.c.h.bf16 %v544
  %v606 = vunpack.c.l.bf16 %v545
  %v607 = vunpack.c.h.bf16 %v545
  %v608 = vunpack.c.l.bf16 %v546
  %v609 = vunpack.c.h.bf16 %v546
  %v610 = vunpack.c.l.bf16 %v547
  %v611 = vunpack.c.h.bf16 %v547
  %v612 = vunpack.c.l.bf16 %v548
  %v613 = vunpack.c.h.bf16 %v548
  %v614 = vunpack.c.l.bf16 %v549
  %v615 = vunpack.c.h.bf16 %v549
  %v616 = vunpack.c.l.bf16 %v550
  %v617 = vunpack.c.h.bf16 %v550
  %v618 = vunpack.c.l.bf16 %v551
  %v619 = vunpack.c.h.bf16 %v551
  %v620 = vunpack.c.l.bf16 %v552
  %v621 = vunpack.c.h.bf16 %v552
  %v622 = vunpack.c.l.bf16 %v553
  %v623 = vunpack.c.h.bf16 %v553
  %v624 = vunpack.c.l.bf16 %v554
  %v625 = vunpack.c.h.bf16 %v554
  %v626 = vunpack.c.l.bf16 %v555
  %v627 = vunpack.c.h.bf16 %v555
  %v628 = vunpack.c.l.bf16 %v556
  %v629 = vunpack.c.h.bf16 %v556
  %v630 = vunpack.c.l.bf16 %v557
  %v631 = vunpack.c.h.bf16 %v557
  %v632 = vunpack.c.l.bf16 %v558
  %v633 = vunpack.c.h.bf16 %v558
  %v634 = vunpack.c.l.bf16 %v559
  %v635 = vunpack.c.h.bf16 %v559
  %v636 = vunpack.c.l.bf16 %v560
  %v637 = vunpack.c.h.bf16 %v560
  %v638 = vunpack.c.l.bf16 %v561
  %v639 = vunpack.c.h.bf16 %v561
  %v640 = vunpack.c.l.bf16 %v562
  %v641 = vunpack.c.h.bf16 %v562
  %v642 = vunpack.c.l.bf16 %v563
  %v643 = vunpack.c.h.bf16 %v563
  %v644 = vunpack.c.l.bf16 %v564
  %v645 = vunpack.c.h.bf16 %v564
  %v646 = vunpack.c.l.bf16 %v565
  %v647 = vunpack.c.h.bf16 %v565
  %v648 = vunpack.c.l.bf16 %v566
  %v649 = vunpack.c.h.bf16 %v566
  %v650 = vunpack.c.l.bf16 %v567
  %v651 = vunpack.c.h.bf16 %v567
  %v652 = vunpack.c.l.bf16 %v568
  %v653 = vunpack.c.h.bf16 %v568
  %v654 = vunpack.c.l.bf16 %v569
  %v655 = vunpack.c.h.bf16 %v569
  %v656 = vunpack.c.l.bf16 %v570
  %v657 = vunpack.c.h.bf16 %v570
  %v658 = vunpack.c.l.bf16 %v571
  %v659 = vunpack.c.h.bf16 %v571
  %v660 = vunpack.c.l.bf16 %v572
  %v661 = vunpack.c.h.bf16 %v572
  %v662 = vunpack.c.l.bf16 %v573
  %v663 = vunpack.c.h.bf16 %v573
  %v664 = vunpack.c.l.bf16 %v574
  %v665 = vunpack.c.h.bf16 %v574
  %v666 = vunpack.c.l.bf16 %v575
  %v667 = vunpack.c.h.bf16 %v575
  %v668 = vunpack.c.l.bf16 %v576
  %v669 = vunpack.c.h.bf16 %v576
  %v670 = vunpack.c.l.bf16 %v577
  %v671 = vunpack.c.h.bf16 %v577
  %v672 = vunpack.c.l.bf16 %v578
  %v673 = vunpack.c.h.bf16 %v578
  %v674 = vunpack.c.l.bf16 %v579
  %v675 = vunpack.c.h.bf16 %v579
  %v676 = vunpack.c.l.bf16 %v580
  %v677 = vunpack.c.h.bf16 %v580
  %v678 = vunpack.c.l.bf16 %v581
  %v679 = vunpack.c.h.bf16 %v581
  %v680 = vunpack.c.l.bf16 %v582
  %v681 = vunpack.c.h.bf16 %v582
  %v682 = vunpack.c.l.bf16 %v583
  %v683 = vunpack.c.h.bf16 %v583
  %v685 = vsel %vm155, %v533, 0
  %v688 = vsel %vm159, %v680, 0
  %v691 = vsel %vm159, %v681, 0
  %v694 = vsel %vm159, %v682, 0
  %v697 = vsel %vm159, %v683, 0
  %699 = vmatprep.subr.mxu0 %v645
  %700 = vmatpush1.msra.mxu0 %v644
  %701 = vmatprep.subr.mxu0 %v641
  %702 = vmatpush1.msra.mxu0 %v640
  %703 = vmatprep.subr.mxu0 %v637
  %704 = vmatpush1.msra.mxu0 %v636
  %705 = vmatprep.subr.mxu0 %v633
  %706 = vmatpush1.msra.mxu0 %v632
  %707 = vmatprep.subr.mxu0 %v629
  %708 = vmatpush1.msra.mxu0 %v628
  %709 = vmatprep.subr.mxu0 %v625
  %710 = vmatpush1.msra.mxu0 %v624
  %711 = vmatprep.subr.mxu0 %v621
  %712 = vmatpush1.msra.mxu0 %v620
  %713 = vmatprep.subr.mxu0 %v617
  %714 = vmatpush1.msra.mxu0 %v616
  %715 = vmatprep.subr.mxu0 %v613
  %716 = vmatpush1.msra.mxu0 %v612
  %717 = vmatprep.subr.mxu0 %v609
  %718 = vmatpush1.msra.mxu0 %v608
  %719 = vmatprep.subr.mxu0 %v605
  %720 = vmatpush1.msra.mxu0 %v604
  %721 = vmatprep.subr.mxu0 %v601
  %722 = vmatpush1.msra.mxu0 %v600
  %723 = vmatprep.subr.mxu0 %v597
  %724 = vmatpush1.msra.mxu0 %v596
  %725 = vmatprep.subr.mxu0 %v593
  %726 = vmatpush1.msra.mxu0 %v592
  %727 = vmatprep.subr.mxu0 %v589
  %728 = vmatpush1.msra.mxu0 %v588
  %729 = vmatprep.subr.mxu0 %v585
  %730 = vmatpush1.msra.mxu0 %v584
  %731 = vmatprep.subr.mxu0 0.0
  %732 = vmatpush2.msra.mxu0 0.0
  %733 = vmatprep.subr.mxu0 0.0
  %734 = vmatpush2.msra.mxu0 0.0
  %735 = vmatprep.subr.mxu0 0.0
  %736 = vmatpush2.msra.mxu0 0.0
  %737 = vmatprep.subr.mxu0 0.0
  %738 = vmatpush2.msra.mxu0 0.0
  %739 = vmatprep.subr.mxu0 0.0
  %740 = vmatpush2.msra.mxu0 0.0
  %741 = vmatprep.subr.mxu0 0.0
  %742 = vmatpush2.msra.mxu0 0.0
  %743 = vmatprep.subr.mxu0 0.0
  %744 = vmatpush2.msra.mxu0 0.0
  %745 = vmatprep.subr.mxu0 %v691
  %746 = vmatpush2.msra.mxu0 %v688
  %747 = vmatprep.subr.mxu0 %v677
  %748 = vmatpush2.msra.mxu0 %v676
  %749 = vmatprep.subr.mxu0 %v673
  %750 = vmatpush2.msra.mxu0 %v672
  %751 = vmatprep.subr.mxu0 %v669
  %752 = vmatpush2.msra.mxu0 %v668
  %753 = vmatprep.subr.mxu0 %v665
  %754 = vmatpush2.msra.mxu0 %v664
  %755 = vmatprep.subr.mxu0 %v661
  %756 = vmatpush2.msra.mxu0 %v660
  %757 = vmatprep.subr.mxu0 %v657
  %758 = vmatpush2.msra.mxu0 %v656
  %759 = vmatprep.subr.mxu0 %v653
  %760 = vmatpush2.msra.mxu0 %v652
  %761 = vmatprep.subr.mxu0 %v649
  %762 = vmatpush2.msra.mxu0 %v648
  %763 = vmatprep.mubr.f32.mxu0 %v685
  %764 = vmatmul.mubr.f32.gmra.mxu0 %v532
  %v765 = vpop.f32.mrf.mxu0
  %v766 = vadd.f32 0.0, %v765
  %v767 = vpop.f32.mrf.mxu0
  %v768 = vadd.f32 0.0, %v767
  %769 = vdwg.mxu0
  %770 = vmatprep.subr.mxu0 %v647
  %771 = vmatpush1.msra.mxu0 %v646
  %772 = vmatprep.subr.mxu0 %v643
  %773 = vmatpush1.msra.mxu0 %v642
  %774 = vmatprep.subr.mxu0 %v639
  %775 = vmatpush1.msra.mxu0 %v638
  %776 = vmatprep.subr.mxu0 %v635
  %777 = vmatpush1.msra.mxu0 %v634
  %778 = vmatprep.subr.mxu0 %v631
  %779 = vmatpush1.msra.mxu0 %v630
  %780 = vmatprep.subr.mxu0 %v627
  %781 = vmatpush1.msra.mxu0 %v626
  %782 = vmatprep.subr.mxu0 %v623
  %783 = vmatpush1.msra.mxu0 %v622
  %784 = vmatprep.subr.mxu0 %v619
  %785 = vmatpush1.msra.mxu0 %v618
  %786 = vmatprep.subr.mxu0 %v615
  %787 = vmatpush1.msra.mxu0 %v614
  %788 = vmatprep.subr.mxu0 %v611
  %789 = vmatpush1.msra.mxu0 %v610
  %790 = vmatprep.subr.mxu0 %v607
  %791 = vmatpush1.msra.mxu0 %v606
  %792 = vmatprep.subr.mxu0 %v603
  %793 = vmatpush1.msra.mxu0 %v602
  %794 = vmatprep.subr.mxu0 %v599
  %795 = vmatpush1.msra.mxu0 %v598
  %796 = vmatprep.subr.mxu0 %v595
  %797 = vmatpush1.msra.mxu0 %v594
  %798 = vmatprep.subr.mxu0 %v591
  %799 = vmatpush1.msra.mxu0 %v590
  %800 = vmatprep.subr.mxu0 %v587
  %801 = vmatpush1.msra.mxu0 %v586
  %802 = vmatprep.subr.mxu0 0.0
  %803 = vmatpush2.msra.mxu0 0.0
  %804 = vmatprep.subr.mxu0 0.0
  %805 = vmatpush2.msra.mxu0 0.0
  %806 = vmatprep.subr.mxu0 0.0
  %807 = vmatpush2.msra.mxu0 0.0
  %808 = vmatprep.subr.mxu0 0.0
  %809 = vmatpush2.msra.mxu0 0.0
  %810 = vmatprep.subr.mxu0 0.0
  %811 = vmatpush2.msra.mxu0 0.0
  %812 = vmatprep.subr.mxu0 0.0
  %813 = vmatpush2.msra.mxu0 0.0
  %814 = vmatprep.subr.mxu0 0.0
  %815 = vmatpush2.msra.mxu0 0.0
  %816 = vmatprep.subr.mxu0 %v697
  %817 = vmatpush2.msra.mxu0 %v694
  %818 = vmatprep.subr.mxu0 %v679
  %819 = vmatpush2.msra.mxu0 %v678
  %820 = vmatprep.subr.mxu0 %v675
  %821 = vmatpush2.msra.mxu0 %v674
  %822 = vmatprep.subr.mxu0 %v671
  %823 = vmatpush2.msra.mxu0 %v670
  %824 = vmatprep.subr.mxu0 %v667
  %825 = vmatpush2.msra.mxu0 %v666
  %826 = vmatprep.subr.mxu0 %v663
  %827 = vmatpush2.msra.mxu0 %v662
  %828 = vmatprep.subr.mxu0 %v659
  %829 = vmatpush2.msra.mxu0 %v658
  %830 = vmatprep.subr.mxu0 %v655
  %831 = vmatpush2.msra.mxu0 %v654
  %832 = vmatprep.subr.mxu0 %v651
  %833 = vmatpush2.msra.mxu0 %v650
  %834 = vmatprep.mubr.f32.mxu0 %v685
  %835 = vmatmul.mubr.f32.gmra.mxu0 %v532
  %v836 = vpop.f32.mrf.mxu0
  %v837 = vadd.f32 0.0, %v836
  %v838 = vpop.f32.mrf.mxu0
  %v839 = vadd.f32 0.0, %v838
  %840 = vdwg.mxu0
  %v841 = vld [vmem:[%s5] sm:$0xff]
  %v842 = vld [vmem:[%s5 + $0x8] sm:$0xff]
  %v843 = vld [vmem:[%s5 + $0x10] sm:$0xff]
  %v844 = vld [vmem:[%s5 + $0x18] sm:$0xff]
  %v845 = vld [vmem:[%s5 + $0x20] sm:$0xff]
  %v846 = vld [vmem:[%s5 + $0x28] sm:$0xff]
  %v847 = vld [vmem:[%s5 + $0x30] sm:$0xff]
  %v848 = vld [vmem:[%s5 + $0x38] sm:$0xff]
  %v849 = vld [vmem:[%s5 + $0x40] sm:$0xff]
  %v850 = vld [vmem:[%s5 + $0x48] sm:$0xff]
  %v851 = vld [vmem:[%s5 + $0x50] sm:$0xff]
  %v852 = vld [vmem:[%s5 + $0x58] sm:$0xff]
  %v853 = vld [vmem:[%s5 + $0x60] sm:$0xff]
  %v854 = vld [vmem:[%s5 + $0x68] sm:$0xff]
  %v855 = vld [vmem:[%s5 + $0x70] sm:$0xff]
  %v856 = vld [vmem:[%s5 + $0x78] sm:$0xff]
  %v857 = vld [vmem:[%s5 + $0x80] sm:$0xff]
  %v858 = vld [vmem:[%s5 + $0x88] sm:$0xff]
  %v859 = vld [vmem:[%s5 + $0x90] sm:$0xff]
  %v860 = vld [vmem:[%s5 + $0x98] sm:$0xff]
  %v861 = vld [vmem:[%s5 + $0xa0] sm:$0xff]
  %v862 = vld [vmem:[%s5 + $0xa8] sm:$0xff]
  %v863 = vld [vmem:[%s5 + $0xb0] sm:$0xff]
  %v864 = vld [vmem:[%s5 + $0xb8] sm:$0xff]
  %v865 = vld [vmem:[%s5 + $0xc0] sm:$0xff]
  %v866 = vld [vmem:[%s5 + $0xc8] sm:$0xff]
  %v867 = vld [vmem:[%s5 + $0xd0] sm:$0xff]
  %v868 = vld [vmem:[%s5 + $0xd8] sm:$0xff]
  %v869 = vld [vmem:[%s5 + $0xe0] sm:$0xff]
  %v870 = vld [vmem:[%s5 + $0xe8] sm:$0xff]
  %v871 = vld [vmem:[%s5 + $0xf0] sm:$0xff]
  %v872 = vld [vmem:[%s5 + $0xf8] sm:$0xff]
  %v873 = vld [vmem:[%s5 + $0x100] sm:$0xff]
  %v874 = vld [vmem:[%s5 + $0x108] sm:$0xff]
  %v875 = vld [vmem:[%s5 + $0x110] sm:$0xff]
  %v876 = vld [vmem:[%s5 + $0x118] sm:$0xff]
  %v877 = vld [vmem:[%s5 + $0x120] sm:$0xff]
  %v878 = vld [vmem:[%s5 + $0x128] sm:$0xff]
  %v879 = vld [vmem:[%s5 + $0x130] sm:$0xff]
  %v880 = vld [vmem:[%s5 + $0x138] sm:$0xff]
  %v881 = vld [vmem:[%s5 + $0x140] sm:$0xff]
  %v882 = vld [vmem:[%s5 + $0x148] sm:$0xff]
  %v883 = vld [vmem:[%s5 + $0x150] sm:$0xff]
  %v884 = vld [vmem:[%s5 + $0x158] sm:$0xff]
  %v885 = vld [vmem:[%s5 + $0x160] sm:$0xff]
  %v886 = vld [vmem:[%s5 + $0x168] sm:$0xff]
  %v887 = vld [vmem:[%s5 + $0x170] sm:$0xff]
  %v888 = vld [vmem:[%s5 + $0x178] sm:$0xff]
  %v889 = vld [vmem:[%s5 + $0x180] sm:$0xff]
  %v890 = vld [vmem:[%s6] sm:$0x33]
  %v891 = vld [vmem:[%s6 + $0x8] sm:$0x33]
  %s892 = scalar_lea.vmem %s6, 2
  %v893 = vld [vmem:[%s892] ss:$4 sm:$0xf]
  %s894 = scalar_lea.vmem %s6, 3
  %v895 = vld [vmem:[%s894] ss:$4 sm:$0xf]
  %vm896 = vcmask 64512
  %v898 = vsel %vm896, %v839, 0
  %900 = vmatprep.subr.mxu0 0.0
  %901 = vmatpush1.msra.mxu0 %v856
  %902 = vmatprep.subr.mxu0 0.0
  %903 = vmatpush1.msra.mxu0 %v855
  %904 = vmatprep.subr.mxu0 0.0
  %905 = vmatpush1.msra.mxu0 %v854
  %906 = vmatprep.subr.mxu0 0.0
  %907 = vmatpush1.msra.mxu0 %v853
  %908 = vmatprep.subr.mxu0 0.0
  %909 = vmatpush1.msra.mxu0 %v852
  %910 = vmatprep.subr.mxu0 0.0
  %911 = vmatpush1.msra.mxu0 %v851
  %912 = vmatprep.subr.mxu0 0.0
  %913 = vmatpush1.msra.mxu0 %v850
  %914 = vmatprep.subr.mxu0 0.0
  %915 = vmatpush1.msra.mxu0 %v849
  %916 = vmatprep.subr.mxu0 0.0
  %917 = vmatpush1.msra.mxu0 %v848
  %918 = vmatprep.subr.mxu0 0.0
  %919 = vmatpush1.msra.mxu0 %v847
  %920 = vmatprep.subr.mxu0 0.0
  %921 = vmatpush1.msra.mxu0 %v846
  %922 = vmatprep.subr.mxu0 0.0
  %923 = vmatpush1.msra.mxu0 %v845
  %924 = vmatprep.subr.mxu0 0.0
  %925 = vmatpush1.msra.mxu0 %v844
  %926 = vmatprep.subr.mxu0 0.0
  %927 = vmatpush1.msra.mxu0 %v843
  %928 = vmatprep.subr.mxu0 0.0
  %929 = vmatpush1.msra.mxu0 %v842
  %930 = vmatprep.subr.mxu0 0.0
  %931 = vmatpush1.msra.mxu0 %v841
  %932 = vmatprep.subr.mxu0 0.0
  %933 = vmatpush2.msra.mxu0 %v872
  %934 = vmatprep.subr.mxu0 0.0
  %935 = vmatpush2.msra.mxu0 %v871
  %936 = vmatprep.subr.mxu0 0.0
  %937 = vmatpush2.msra.mxu0 %v870
  %938 = vmatprep.subr.mxu0 0.0
  %939 = vmatpush2.msra.mxu0 %v869
  %940 = vmatprep.subr.mxu0 0.0
  %941 = vmatpush2.msra.mxu0 %v868
  %942 = vmatprep.subr.mxu0 0.0
  %943 = vmatpush2.msra.mxu0 %v867
  %944 = vmatprep.subr.mxu0 0.0
  %945 = vmatpush2.msra.mxu0 %v866
  %946 = vmatprep.subr.mxu0 0.0
  %947 = vmatpush2.msra.mxu0 %v865
  %948 = vmatprep.subr.mxu0 0.0
  %949 = vmatpush2.msra.mxu0 %v864
  %950 = vmatprep.subr.mxu0 0.0
  %951 = vmatpush2.msra.mxu0 %v863
  %952 = vmatprep.subr.mxu0 0.0
  %953 = vmatpush2.msra.mxu0 %v862
  %954 = vmatprep.subr.mxu0 0.0
  %955 = vmatpush2.msra.mxu0 %v861
  %956 = vmatprep.subr.mxu0 0.0
  %957 = vmatpush2.msra.mxu0 %v860
  %958 = vmatprep.subr.mxu0 0.0
  %959 = vmatpush2.msra.mxu0 %v859
  %960 = vmatprep.subr.mxu0 0.0
  %961 = vmatpush2.msra.mxu0 %v858
  %962 = vmatprep.subr.mxu0 0.0
  %963 = vmatpush2.msra.mxu0 %v857
  %964 = vmatprep.mubr.f32.mxu0 %v768
  %965 = vmatmul.mubr.f32.gmra.mxu0 %v766
  %v966 = vpop.f32.mrf.mxu0
  %v967 = vadd.f32 0.0, %v966
  %v968 = vpop.f32.mrf.mxu0
  %969 = vdwg.mxu0
  %970 = vmatprep.subr.mxu0 0.0
  %971 = vmatpush1.msra.mxu0 %v888
  %972 = vmatprep.subr.mxu0 0.0
  %973 = vmatpush1.msra.mxu0 %v887
  %974 = vmatprep.subr.mxu0 0.0
  %975 = vmatpush1.msra.mxu0 %v886
  %976 = vmatprep.subr.mxu0 0.0
  %977 = vmatpush1.msra.mxu0 %v885
  %978 = vmatprep.subr.mxu0 0.0
  %979 = vmatpush1.msra.mxu0 %v884
  %980 = vmatprep.subr.mxu0 0.0
  %981 = vmatpush1.msra.mxu0 %v883
  %982 = vmatprep.subr.mxu0 0.0
  %983 = vmatpush1.msra.mxu0 %v882
  %984 = vmatprep.subr.mxu0 0.0
  %985 = vmatpush1.msra.mxu0 %v881
  %986 = vmatprep.subr.mxu0 0.0
  %987 = vmatpush1.msra.mxu0 %v880
  %988 = vmatprep.subr.mxu0 0.0
  %989 = vmatpush1.msra.mxu0 %v879
  %990 = vmatprep.subr.mxu0 0.0
  %991 = vmatpush1.msra.mxu0 %v878
  %992 = vmatprep.subr.mxu0 0.0
  %993 = vmatpush1.msra.mxu0 %v877
  %994 = vmatprep.subr.mxu0 0.0
  %995 = vmatpush1.msra.mxu0 %v876
  %996 = vmatprep.subr.mxu0 0.0
  %997 = vmatpush1.msra.mxu0 %v875
  %998 = vmatprep.subr.mxu0 0.0
  %999 = vmatpush1.msra.mxu0 %v874
  %1000 = vmatprep.subr.mxu0 0.0
  %1001 = vmatpush1.msra.mxu0 %v873
  %1002 = vmatprep.subr.mxu0 0.0
  %1003 = vmatpush2.msra.mxu0 0.0
  %1004 = vmatprep.subr.mxu0 0.0
  %1005 = vmatpush2.msra.mxu0 0.0
  %1006 = vmatprep.subr.mxu0 0.0
  %1007 = vmatpush2.msra.mxu0 0.0
  %1008 = vmatprep.subr.mxu0 0.0
  %1009 = vmatpush2.msra.mxu0 0.0
  %1010 = vmatprep.subr.mxu0 0.0
  %1011 = vmatpush2.msra.mxu0 0.0
  %1012 = vmatprep.subr.mxu0 0.0
  %1013 = vmatpush2.msra.mxu0 0.0
  %1014 = vmatprep.subr.mxu0 0.0
  %1015 = vmatpush2.msra.mxu0 0.0
  %1016 = vmatprep.subr.mxu0 0.0
  %1017 = vmatpush2.msra.mxu0 0.0
  %1018 = vmatprep.subr.mxu0 0.0
  %1019 = vmatpush2.msra.mxu0 0.0
  %1020 = vmatprep.subr.mxu0 0.0
  %1021 = vmatpush2.msra.mxu0 0.0
  %1022 = vmatprep.subr.mxu0 0.0
  %1023 = vmatpush2.msra.mxu0 0.0
  %1024 = vmatprep.subr.mxu0 0.0
  %1025 = vmatpush2.msra.mxu0 0.0
  %1026 = vmatprep.subr.mxu0 0.0
  %1027 = vmatpush2.msra.mxu0 0.0
  %1028 = vmatprep.subr.mxu0 0.0
  %1029 = vmatpush2.msra.mxu0 0.0
  %1030 = vmatprep.subr.mxu0 0.0
  %1031 = vmatpush2.msra.mxu0 0.0
  %1032 = vmatprep.subr.mxu0 0.0
  %1033 = vmatpush2.msra.mxu0 %v889
  %1034 = vmatprep.mubr.f32.mxu0 %v898
  %1035 = vmatmul.mubr.f32.gmra.mxu0 %v837
  %v1036 = vpop.f32.mrf.mxu0
  %v1037 = vadd.f32 %v967, %v1036
  %v1038 = vpop.f32.mrf.mxu0
  %1039 = vdwg.mxu0
  %vm1040 = vcmask 9216
  %v1041 = vsel %vm1040, %v1037, 0.0
  %v1042 = vrot.slane %v1041, 4
  %v1043 = vadd.f32 %v1041, %v1042
  %v1044 = vrot.slane %v1043, 2
  %v1045 = vadd.f32 %v1043, %v1044
  %v1046 = vrot.slane %v1045, 1
  %v1047 = vadd.f32 %v1045, %v1046
  %v1048 = vmul.f32 %v1047, 0.0025510204
  %v1051 = vcombine.high %v890, %v890
  %v1052 = vcombine.high %v891, %v891
  %vm1053 = vcmask 15360
  %v1055 = vsel %vm1053, %v1048, 0
  %vm1057 = vcmask 1041408
  %v1058 = vsel %vm1057, %v890, 0
  %v1060 = vsel %vm1057, %v1051, 0
  %v1062 = vsel %vm1057, %v891, 0
  %v1064 = vsel %vm1057, %v1052, 0
  %1066 = vmatprep.subr.mxu0 0.0
  %1067 = vmatpush1.msra.mxu0 0.0
  %1068 = vmatprep.subr.mxu0 0.0
  %1069 = vmatpush1.msra.mxu0 0.0
  %1070 = vmatprep.subr.mxu0 0.0
  %1071 = vmatpush1.msra.mxu0 0.0
  %1072 = vmatprep.subr.mxu0 0.0
  %1073 = vmatpush1.msra.mxu0 0.0
  %1074 = vmatprep.subr.mxu0 0.0
  %1075 = vmatpush1.msra.mxu0 0.0
  %1076 = vmatprep.subr.mxu0 0.0
  %1077 = vmatpush1.msra.mxu0 0.0
  %1078 = vmatprep.subr.mxu0 0.0
  %1079 = vmatpush1.msra.mxu0 0.0
  %1080 = vmatprep.subr.mxu0 0.0
  %1081 = vmatpush1.msra.mxu0 0.0
  %1082 = vmatprep.subr.mxu0 0.0
  %1083 = vmatpush1.msra.mxu0 0.0
  %1084 = vmatprep.subr.mxu0 0.0
  %1085 = vmatpush1.msra.mxu0 0.0
  %1086 = vmatprep.subr.mxu0 0.0
  %1087 = vmatpush1.msra.mxu0 0.0
  %1088 = vmatprep.subr.mxu0 0.0
  %1089 = vmatpush1.msra.mxu0 0.0
  %1090 = vmatprep.subr.mxu0 0.0
  %1091 = vmatpush1.msra.mxu0 0.0
  %1092 = vmatprep.subr.mxu0 0.0
  %1093 = vmatpush1.msra.mxu0 0.0
  %1094 = vmatprep.subr.mxu0 0.0
  %1095 = vmatpush1.msra.mxu0 0.0
  %1096 = vmatprep.subr.mxu0 %v1060
  %1097 = vmatpush1.msra.mxu0 %v1058
  %1098 = vmatprep.subr.mxu0 0.0
  %1099 = vmatpush2.msra.mxu0 0.0
  %1100 = vmatprep.subr.mxu0 0.0
  %1101 = vmatpush2.msra.mxu0 0.0
  %1102 = vmatprep.subr.mxu0 0.0
  %1103 = vmatpush2.msra.mxu0 0.0
  %1104 = vmatprep.subr.mxu0 0.0
  %1105 = vmatpush2.msra.mxu0 0.0
  %1106 = vmatprep.subr.mxu0 0.0
  %1107 = vmatpush2.msra.mxu0 0.0
  %1108 = vmatprep.subr.mxu0 0.0
  %1109 = vmatpush2.msra.mxu0 0.0
  %1110 = vmatprep.subr.mxu0 0.0
  %1111 = vmatpush2.msra.mxu0 0.0
  %1112 = vmatprep.subr.mxu0 0.0
  %1113 = vmatpush2.msra.mxu0 0.0
  %1114 = vmatprep.subr.mxu0 0.0
  %1115 = vmatpush2.msra.mxu0 0.0
  %1116 = vmatprep.subr.mxu0 0.0
  %1117 = vmatpush2.msra.mxu0 0.0
  %1118 = vmatprep.subr.mxu0 0.0
  %1119 = vmatpush2.msra.mxu0 0.0
  %1120 = vmatprep.subr.mxu0 0.0
  %1121 = vmatpush2.msra.mxu0 0.0
  %1122 = vmatprep.subr.mxu0 0.0
  %1123 = vmatpush2.msra.mxu0 0.0
  %1124 = vmatprep.subr.mxu0 0.0
  %1125 = vmatpush2.msra.mxu0 0.0
  %1126 = vmatprep.subr.mxu0 0.0
  %1127 = vmatpush2.msra.mxu0 0.0
  %1128 = vmatprep.subr.mxu0 0.0
  %1129 = vmatpush2.msra.mxu0 0.0
  %1130 = vmatprep.mubr.f32.mxu0 0.0
  %1131 = vmatmul.mubr.f32.gmra.mxu0 %v1055
  %v1132 = vpop.f32.mrf.mxu0
  %v1133 = vadd.f32 0.0, %v1132
  %v1134 = vpop.f32.mrf.mxu0
  %v1135 = vadd.f32 0.0, %v1134
  %1136 = vdwg.mxu0
  %1137 = vmatprep.subr.mxu0 0.0
  %1138 = vmatpush1.msra.mxu0 0.0
  %1139 = vmatprep.subr.mxu0 0.0
  %1140 = vmatpush1.msra.mxu0 0.0
  %1141 = vmatprep.subr.mxu0 0.0
  %1142 = vmatpush1.msra.mxu0 0.0
  %1143 = vmatprep.subr.mxu0 0.0
  %1144 = vmatpush1.msra.mxu0 0.0
  %1145 = vmatprep.subr.mxu0 0.0
  %1146 = vmatpush1.msra.mxu0 0.0
  %1147 = vmatprep.subr.mxu0 0.0
  %1148 = vmatpush1.msra.mxu0 0.0
  %1149 = vmatprep.subr.mxu0 0.0
  %1150 = vmatpush1.msra.mxu0 0.0
  %1151 = vmatprep.subr.mxu0 0.0
  %1152 = vmatpush1.msra.mxu0 0.0
  %1153 = vmatprep.subr.mxu0 0.0
  %1154 = vmatpush1.msra.mxu0 0.0
  %1155 = vmatprep.subr.mxu0 0.0
  %1156 = vmatpush1.msra.mxu0 0.0
  %1157 = vmatprep.subr.mxu0 0.0
  %1158 = vmatpush1.msra.mxu0 0.0
  %1159 = vmatprep.subr.mxu0 0.0
  %1160 = vmatpush1.msra.mxu0 0.0
  %1161 = vmatprep.subr.mxu0 0.0
  %1162 = vmatpush1.msra.mxu0 0.0
  %1163 = vmatprep.subr.mxu0 0.0
  %1164 = vmatpush1.msra.mxu0 0.0
  %1165 = vmatprep.subr.mxu0 0.0
  %1166 = vmatpush1.msra.mxu0 0.0
  %1167 = vmatprep.subr.mxu0 %v1064
  %1168 = vmatpush1.msra.mxu0 %v1062
  %1169 = vmatprep.subr.mxu0 0.0
  %1170 = vmatpush2.msra.mxu0 0.0
  %1171 = vmatprep.subr.mxu0 0.0
  %1172 = vmatpush2.msra.mxu0 0.0
  %1173 = vmatprep.subr.mxu0 0.0
  %1174 = vmatpush2.msra.mxu0 0.0
  %1175 = vmatprep.subr.mxu0 0.0
  %1176 = vmatpush2.msra.mxu0 0.0
  %1177 = vmatprep.subr.mxu0 0.0
  %1178 = vmatpush2.msra.mxu0 0.0
  %1179 = vmatprep.subr.mxu0 0.0
  %1180 = vmatpush2.msra.mxu0 0.0
  %1181 = vmatprep.subr.mxu0 0.0
  %1182 = vmatpush2.msra.mxu0 0.0
  %1183 = vmatprep.subr.mxu0 0.0
  %1184 = vmatpush2.msra.mxu0 0.0
  %1185 = vmatprep.subr.mxu0 0.0
  %1186 = vmatpush2.msra.mxu0 0.0
  %1187 = vmatprep.subr.mxu0 0.0
  %1188 = vmatpush2.msra.mxu0 0.0
  %1189 = vmatprep.subr.mxu0 0.0
  %1190 = vmatpush2.msra.mxu0 0.0
  %1191 = vmatprep.subr.mxu0 0.0
  %1192 = vmatpush2.msra.mxu0 0.0
  %1193 = vmatprep.subr.mxu0 0.0
  %1194 = vmatpush2.msra.mxu0 0.0
  %1195 = vmatprep.subr.mxu0 0.0
  %1196 = vmatpush2.msra.mxu0 0.0
  %1197 = vmatprep.subr.mxu0 0.0
  %1198 = vmatpush2.msra.mxu0 0.0
  %1199 = vmatprep.subr.mxu0 0.0
  %1200 = vmatpush2.msra.mxu0 0.0
  %1201 = vmatprep.mubr.f32.mxu0 0.0
  %1202 = vmatmul.mubr.f32.gmra.mxu0 %v1055
  %v1203 = vpop.f32.mrf.mxu0
  %v1204 = vadd.f32 0.0, %v1203
  %v1205 = vpop.f32.mrf.mxu0
  %v1206 = vadd.f32 0.0, %v1205
  %1207 = vdwg.mxu0
  %v1208 = vlaneseq
  %v1209 = vshrl.u32 %v1208, 7
  %v1210 = vsub.s32 0, %v1209
  %v1211 = vrot.slane %v1133, %v1210
  %v1212 = vlaneseq
  %v1213 = vshrl.u32 %v1212, 7
  %v1214 = vsub.s32 0, %v1213
  %v1215 = vrot.slane %v1135, %v1214
  %v1216 = vlaneseq
  %v1217 = vshrl.u32 %v1216, 7
  %v1218 = vsub.s32 0, %v1217
  %v1219 = vrot.slane %v1204, %v1218
  %v1220 = vlaneseq
  %v1221 = vshrl.u32 %v1220, 7
  %v1222 = vsub.s32 0, %v1221
  %v1223 = vrot.slane %v1206, %v1222
  %v1224 = vsub.f32 %v766, %v1211
  %v1225 = vsub.f32 %v768, %v1215
  %v1226 = vsub.f32 %v837, %v1219
  %v1227 = vsub.f32 %v839, %v1223
  %v1228 = vmul.f32 %v1224, %v1224
  %v1229 = vmul.f32 %v1225, %v1225
  %v1230 = vmul.f32 %v1226, %v1226
  %v1231 = vmul.f32 %v1227, %v1227
  %v1233 = vsel %vm896, %v1231, 0
  %1235 = vmatprep.subr.mxu0 0.0
  %1236 = vmatpush1.msra.mxu0 %v856
  %1237 = vmatprep.subr.mxu0 0.0
  %1238 = vmatpush1.msra.mxu0 %v855
  %1239 = vmatprep.subr.mxu0 0.0
  %1240 = vmatpush1.msra.mxu0 %v854
  %1241 = vmatprep.subr.mxu0 0.0
  %1242 = vmatpush1.msra.mxu0 %v853
  %1243 = vmatprep.subr.mxu0 0.0
  %1244 = vmatpush1.msra.mxu0 %v852
  %1245 = vmatprep.subr.mxu0 0.0
  %1246 = vmatpush1.msra.mxu0 %v851
  %1247 = vmatprep.subr.mxu0 0.0
  %1248 = vmatpush1.msra.mxu0 %v850
  %1249 = vmatprep.subr.mxu0 0.0
  %1250 = vmatpush1.msra.mxu0 %v849
  %1251 = vmatprep.subr.mxu0 0.0
  %1252 = vmatpush1.msra.mxu0 %v848
  %1253 = vmatprep.subr.mxu0 0.0
  %1254 = vmatpush1.msra.mxu0 %v847
  %1255 = vmatprep.subr.mxu0 0.0
  %1256 = vmatpush1.msra.mxu0 %v846
  %1257 = vmatprep.subr.mxu0 0.0
  %1258 = vmatpush1.msra.mxu0 %v845
  %1259 = vmatprep.subr.mxu0 0.0
  %1260 = vmatpush1.msra.mxu0 %v844
  %1261 = vmatprep.subr.mxu0 0.0
  %1262 = vmatpush1.msra.mxu0 %v843
  %1263 = vmatprep.subr.mxu0 0.0
  %1264 = vmatpush1.msra.mxu0 %v842
  %1265 = vmatprep.subr.mxu0 0.0
  %1266 = vmatpush1.msra.mxu0 %v841
  %1267 = vmatprep.subr.mxu0 0.0
  %1268 = vmatpush2.msra.mxu0 %v872
  %1269 = vmatprep.subr.mxu0 0.0
  %1270 = vmatpush2.msra.mxu0 %v871
  %1271 = vmatprep.subr.mxu0 0.0
  %1272 = vmatpush2.msra.mxu0 %v870
  %1273 = vmatprep.subr.mxu0 0.0
  %1274 = vmatpush2.msra.mxu0 %v869
  %1275 = vmatprep.subr.mxu0 0.0
  %1276 = vmatpush2.msra.mxu0 %v868
  %1277 = vmatprep.subr.mxu0 0.0
  %1278 = vmatpush2.msra.mxu0 %v867
  %1279 = vmatprep.subr.mxu0 0.0
  %1280 = vmatpush2.msra.mxu0 %v866
  %1281 = vmatprep.subr.mxu0 0.0
  %1282 = vmatpush2.msra.mxu0 %v865
  %1283 = vmatprep.subr.mxu0 0.0
  %1284 = vmatpush2.msra.mxu0 %v864
  %1285 = vmatprep.subr.mxu0 0.0
  %1286 = vmatpush2.msra.mxu0 %v863
  %1287 = vmatprep.subr.mxu0 0.0
  %1288 = vmatpush2.msra.mxu0 %v862
  %1289 = vmatprep.subr.mxu0 0.0
  %1290 = vmatpush2.msra.mxu0 %v861
  %1291 = vmatprep.subr.mxu0 0.0
  %1292 = vmatpush2.msra.mxu0 %v860
  %1293 = vmatprep.subr.mxu0 0.0
  %1294 = vmatpush2.msra.mxu0 %v859
  %1295 = vmatprep.subr.mxu0 0.0
  %1296 = vmatpush2.msra.mxu0 %v858
  %1297 = vmatprep.subr.mxu0 0.0
  %1298 = vmatpush2.msra.mxu0 %v857
  %1299 = vmatprep.mubr.f32.mxu0 %v1229
  %1300 = vmatmul.mubr.f32.gmra.mxu0 %v1228
  %v1301 = vpop.f32.mrf.mxu0
  %v1302 = vadd.f32 0.0, %v1301
  %v1303 = vpop.f32.mrf.mxu0
  %1304 = vdwg.mxu0
  %1305 = vmatprep.subr.mxu0 0.0
  %1306 = vmatpush1.msra.mxu0 %v888
  %1307 = vmatprep.subr.mxu0 0.0
  %1308 = vmatpush1.msra.mxu0 %v887
  %1309 = vmatprep.subr.mxu0 0.0
  %1310 = vmatpush1.msra.mxu0 %v886
  %1311 = vmatprep.subr.mxu0 0.0
  %1312 = vmatpush1.msra.mxu0 %v885
  %1313 = vmatprep.subr.mxu0 0.0
  %1314 = vmatpush1.msra.mxu0 %v884
  %1315 = vmatprep.subr.mxu0 0.0
  %1316 = vmatpush1.msra.mxu0 %v883
  %1317 = vmatprep.subr.mxu0 0.0
  %1318 = vmatpush1.msra.mxu0 %v882
  %1319 = vmatprep.subr.mxu0 0.0
  %1320 = vmatpush1.msra.mxu0 %v881
  %1321 = vmatprep.subr.mxu0 0.0
  %1322 = vmatpush1.msra.mxu0 %v880
  %1323 = vmatprep.subr.mxu0 0.0
  %1324 = vmatpush1.msra.mxu0 %v879
  %1325 = vmatprep.subr.mxu0 0.0
  %1326 = vmatpush1.msra.mxu0 %v878
  %1327 = vmatprep.subr.mxu0 0.0
  %1328 = vmatpush1.msra.mxu0 %v877
  %1329 = vmatprep.subr.mxu0 0.0
  %1330 = vmatpush1.msra.mxu0 %v876
  %1331 = vmatprep.subr.mxu0 0.0
  %1332 = vmatpush1.msra.mxu0 %v875
  %1333 = vmatprep.subr.mxu0 0.0
  %1334 = vmatpush1.msra.mxu0 %v874
  %1335 = vmatprep.subr.mxu0 0.0
  %1336 = vmatpush1.msra.mxu0 %v873
  %1337 = vmatprep.subr.mxu0 0.0
  %1338 = vmatpush2.msra.mxu0 0.0
  %1339 = vmatprep.subr.mxu0 0.0
  %1340 = vmatpush2.msra.mxu0 0.0
  %1341 = vmatprep.subr.mxu0 0.0
  %1342 = vmatpush2.msra.mxu0 0.0
  %1343 = vmatprep.subr.mxu0 0.0
  %1344 = vmatpush2.msra.mxu0 0.0
  %1345 = vmatprep.subr.mxu0 0.0
  %1346 = vmatpush2.msra.mxu0 0.0
  %1347 = vmatprep.subr.mxu0 0.0
  %1348 = vmatpush2.msra.mxu0 0.0
  %1349 = vmatprep.subr.mxu0 0.0
  %1350 = vmatpush2.msra.mxu0 0.0
  %1351 = vmatprep.subr.mxu0 0.0
  %1352 = vmatpush2.msra.mxu0 0.0
  %1353 = vmatprep.subr.mxu0 0.0
  %1354 = vmatpush2.msra.mxu0 0.0
  %1355 = vmatprep.subr.mxu0 0.0
  %1356 = vmatpush2.msra.mxu0 0.0
  %1357 = vmatprep.subr.mxu0 0.0
  %1358 = vmatpush2.msra.mxu0 0.0
  %1359 = vmatprep.subr.mxu0 0.0
  %1360 = vmatpush2.msra.mxu0 0.0
  %1361 = vmatprep.subr.mxu0 0.0
  %1362 = vmatpush2.msra.mxu0 0.0
  %1363 = vmatprep.subr.mxu0 0.0
  %1364 = vmatpush2.msra.mxu0 0.0
  %1365 = vmatprep.subr.mxu0 0.0
  %1366 = vmatpush2.msra.mxu0 0.0
  %1367 = vmatprep.subr.mxu0 0.0
  %1368 = vmatpush2.msra.mxu0 %v889
  %1369 = vmatprep.mubr.f32.mxu0 %v1233
  %1370 = vmatmul.mubr.f32.gmra.mxu0 %v1230
  %v1371 = vpop.f32.mrf.mxu0
  %v1372 = vadd.f32 %v1302, %v1371
  %v1373 = vpop.f32.mrf.mxu0
  %1374 = vdwg.mxu0
  %v1375 = vsel %vm1040, %v1372, 0.0
  %v1376 = vrot.slane %v1375, 4
  %v1377 = vadd.f32 %v1375, %v1376
  %v1378 = vrot.slane %v1377, 2
  %v1379 = vadd.f32 %v1377, %v1378
  %v1380 = vrot.slane %v1379, 1
  %v1381 = vadd.f32 %v1379, %v1380
  %v1382 = vmul.f32 %v1381, 0.0025510204
  %v1383 = vadd.f32 %v1382, 1e-05
  %v1384 = vrsqrt.pop %v1383
  %v1386 = vsel %vm1053, %v1384, 0
  %1388 = vmatprep.subr.mxu0 0.0
  %1389 = vmatpush1.msra.mxu0 0.0
  %1390 = vmatprep.subr.mxu0 0.0
  %1391 = vmatpush1.msra.mxu0 0.0
  %1392 = vmatprep.subr.mxu0 0.0
  %1393 = vmatpush1.msra.mxu0 0.0
  %1394 = vmatprep.subr.mxu0 0.0
  %1395 = vmatpush1.msra.mxu0 0.0
  %1396 = vmatprep.subr.mxu0 0.0
  %1397 = vmatpush1.msra.mxu0 0.0
  %1398 = vmatprep.subr.mxu0 0.0
  %1399 = vmatpush1.msra.mxu0 0.0
  %1400 = vmatprep.subr.mxu0 0.0
  %1401 = vmatpush1.msra.mxu0 0.0
  %1402 = vmatprep.subr.mxu0 0.0
  %1403 = vmatpush1.msra.mxu0 0.0
  %1404 = vmatprep.subr.mxu0 0.0
  %1405 = vmatpush1.msra.mxu0 0.0
  %1406 = vmatprep.subr.mxu0 0.0
  %1407 = vmatpush1.msra.mxu0 0.0
  %1408 = vmatprep.subr.mxu0 0.0
  %1409 = vmatpush1.msra.mxu0 0.0
  %1410 = vmatprep.subr.mxu0 0.0
  %1411 = vmatpush1.msra.mxu0 0.0
  %1412 = vmatprep.subr.mxu0 0.0
  %1413 = vmatpush1.msra.mxu0 0.0
  %1414 = vmatprep.subr.mxu0 0.0
  %1415 = vmatpush1.msra.mxu0 0.0
  %1416 = vmatprep.subr.mxu0 0.0
  %1417 = vmatpush1.msra.mxu0 0.0
  %1418 = vmatprep.subr.mxu0 %v1060
  %1419 = vmatpush1.msra.mxu0 %v1058
  %1420 = vmatprep.subr.mxu0 0.0
  %1421 = vmatpush2.msra.mxu0 0.0
  %1422 = vmatprep.subr.mxu0 0.0
  %1423 = vmatpush2.msra.mxu0 0.0
  %1424 = vmatprep.subr.mxu0 0.0
  %1425 = vmatpush2.msra.mxu0 0.0
  %1426 = vmatprep.subr.mxu0 0.0
  %1427 = vmatpush2.msra.mxu0 0.0
  %1428 = vmatprep.subr.mxu0 0.0
  %1429 = vmatpush2.msra.mxu0 0.0
  %1430 = vmatprep.subr.mxu0 0.0
  %1431 = vmatpush2.msra.mxu0 0.0
  %1432 = vmatprep.subr.mxu0 0.0
  %1433 = vmatpush2.msra.mxu0 0.0
  %1434 = vmatprep.subr.mxu0 0.0
  %1435 = vmatpush2.msra.mxu0 0.0
  %1436 = vmatprep.subr.mxu0 0.0
  %1437 = vmatpush2.msra.mxu0 0.0
  %1438 = vmatprep.subr.mxu0 0.0
  %1439 = vmatpush2.msra.mxu0 0.0
  %1440 = vmatprep.subr.mxu0 0.0
  %1441 = vmatpush2.msra.mxu0 0.0
  %1442 = vmatprep.subr.mxu0 0.0
  %1443 = vmatpush2.msra.mxu0 0.0
  %1444 = vmatprep.subr.mxu0 0.0
  %1445 = vmatpush2.msra.mxu0 0.0
  %1446 = vmatprep.subr.mxu0 0.0
  %1447 = vmatpush2.msra.mxu0 0.0
  %1448 = vmatprep.subr.mxu0 0.0
  %1449 = vmatpush2.msra.mxu0 0.0
  %1450 = vmatprep.subr.mxu0 0.0
  %1451 = vmatpush2.msra.mxu0 0.0
  %1452 = vmatprep.mubr.f32.mxu0 0.0
  %1453 = vmatmul.mubr.f32.gmra.mxu0 %v1386
  %v1454 = vpop.f32.mrf.mxu0
  %v1455 = vadd.f32 0.0, %v1454
  %v1456 = vpop.f32.mrf.mxu0
  %v1457 = vadd.f32 0.0, %v1456
  %1458 = vdwg.mxu0
  %1459 = vmatprep.subr.mxu0 0.0
  %1460 = vmatpush1.msra.mxu0 0.0
  %1461 = vmatprep.subr.mxu0 0.0
  %1462 = vmatpush1.msra.mxu0 0.0
  %1463 = vmatprep.subr.mxu0 0.0
  %1464 = vmatpush1.msra.mxu0 0.0
  %1465 = vmatprep.subr.mxu0 0.0
  %1466 = vmatpush1.msra.mxu0 0.0
  %1467 = vmatprep.subr.mxu0 0.0
  %1468 = vmatpush1.msra.mxu0 0.0
  %1469 = vmatprep.subr.mxu0 0.0
  %1470 = vmatpush1.msra.mxu0 0.0
  %1471 = vmatprep.subr.mxu0 0.0
  %1472 = vmatpush1.msra.mxu0 0.0
  %1473 = vmatprep.subr.mxu0 0.0
  %1474 = vmatpush1.msra.mxu0 0.0
  %1475 = vmatprep.subr.mxu0 0.0
  %1476 = vmatpush1.msra.mxu0 0.0
  %1477 = vmatprep.subr.mxu0 0.0
  %1478 = vmatpush1.msra.mxu0 0.0
  %1479 = vmatprep.subr.mxu0 0.0
  %1480 = vmatpush1.msra.mxu0 0.0
  %1481 = vmatprep.subr.mxu0 0.0
  %1482 = vmatpush1.msra.mxu0 0.0
  %1483 = vmatprep.subr.mxu0 0.0
  %1484 = vmatpush1.msra.mxu0 0.0
  %1485 = vmatprep.subr.mxu0 0.0
  %1486 = vmatpush1.msra.mxu0 0.0
  %1487 = vmatprep.subr.mxu0 0.0
  %1488 = vmatpush1.msra.mxu0 0.0
  %1489 = vmatprep.subr.mxu0 %v1064
  %1490 = vmatpush1.msra.mxu0 %v1062
  %1491 = vmatprep.subr.mxu0 0.0
  %1492 = vmatpush2.msra.mxu0 0.0
  %1493 = vmatprep.subr.mxu0 0.0
  %1494 = vmatpush2.msra.mxu0 0.0
  %1495 = vmatprep.subr.mxu0 0.0
  %1496 = vmatpush2.msra.mxu0 0.0
  %1497 = vmatprep.subr.mxu0 0.0
  %1498 = vmatpush2.msra.mxu0 0.0
  %1499 = vmatprep.subr.mxu0 0.0
  %1500 = vmatpush2.msra.mxu0 0.0
  %1501 = vmatprep.subr.mxu0 0.0
  %1502 = vmatpush2.msra.mxu0 0.0
  %1503 = vmatprep.subr.mxu0 0.0
  %1504 = vmatpush2.msra.mxu0 0.0
  %1505 = vmatprep.subr.mxu0 0.0
  %1506 = vmatpush2.msra.mxu0 0.0
  %1507 = vmatprep.subr.mxu0 0.0
  %1508 = vmatpush2.msra.mxu0 0.0
  %1509 = vmatprep.subr.mxu0 0.0
  %1510 = vmatpush2.msra.mxu0 0.0
  %1511 = vmatprep.subr.mxu0 0.0
  %1512 = vmatpush2.msra.mxu0 0.0
  %1513 = vmatprep.subr.mxu0 0.0
  %1514 = vmatpush2.msra.mxu0 0.0
  %1515 = vmatprep.subr.mxu0 0.0
  %1516 = vmatpush2.msra.mxu0 0.0
  %1517 = vmatprep.subr.mxu0 0.0
  %1518 = vmatpush2.msra.mxu0 0.0
  %1519 = vmatprep.subr.mxu0 0.0
  %1520 = vmatpush2.msra.mxu0 0.0
  %1521 = vmatprep.subr.mxu0 0.0
  %1522 = vmatpush2.msra.mxu0 0.0
  %1523 = vmatprep.mubr.f32.mxu0 0.0
  %1524 = vmatmul.mubr.f32.gmra.mxu0 %v1386
  %v1525 = vpop.f32.mrf.mxu0
  %v1526 = vadd.f32 0.0, %v1525
  %v1527 = vpop.f32.mrf.mxu0
  %v1528 = vadd.f32 0.0, %v1527
  %1529 = vdwg.mxu0
  %v1531 = vlaneseq
  %v1532 = vshrl.u32 %v1531, 7
  %v1533 = vsub.s32 0, %v1532
  %v1534 = vrot.slane %v893, %v1533
  %v1535 = vlaneseq
  %v1536 = vshrl.u32 %v1535, 7
  %v1537 = vsub.s32 1, %v1536
  %v1538 = vrot.slane %v893, %v1537
  %v1539 = vlaneseq
  %v1540 = vshrl.u32 %v1539, 7
  %v1541 = vsub.s32 2, %v1540
  %v1542 = vrot.slane %v893, %v1541
  %v1543 = vlaneseq
  %v1544 = vshrl.u32 %v1543, 7
  %v1545 = vsub.s32 3, %v1544
  %v1546 = vrot.slane %v893, %v1545
  %v1551 = vmul.f32 %v1455, %v1534
  %v1552 = vmul.f32 %v1457, %v1538
  %v1553 = vmul.f32 %v1526, %v1542
  %v1554 = vmul.f32 %v1528, %v1546
  %v1555 = vlaneseq
  %v1556 = vshrl.u32 %v1555, 7
  %v1557 = vsub.s32 0, %v1556
  %v1558 = vrot.slane %v1551, %v1557
  %v1559 = vlaneseq
  %v1560 = vshrl.u32 %v1559, 7
  %v1561 = vsub.s32 0, %v1560
  %v1562 = vrot.slane %v1552, %v1561
  %v1563 = vlaneseq
  %v1564 = vshrl.u32 %v1563, 7
  %v1565 = vsub.s32 0, %v1564
  %v1566 = vrot.slane %v1553, %v1565
  %v1567 = vlaneseq
  %v1568 = vshrl.u32 %v1567, 7
  %v1569 = vsub.s32 0, %v1568
  %v1570 = vrot.slane %v1554, %v1569
  %v1571 = vmul.f32 %v1224, %v1558
  %v1572 = vmul.f32 %v1225, %v1562
  %v1573 = vmul.f32 %v1226, %v1566
  %v1574 = vmul.f32 %v1227, %v1570
  %v1576 = vlaneseq
  %v1577 = vshrl.u32 %v1576, 7
  %v1578 = vsub.s32 0, %v1577
  %v1579 = vrot.slane %v895, %v1578
  %v1580 = vlaneseq
  %v1581 = vshrl.u32 %v1580, 7
  %v1582 = vsub.s32 1, %v1581
  %v1583 = vrot.slane %v895, %v1582
  %v1584 = vlaneseq
  %v1585 = vshrl.u32 %v1584, 7
  %v1586 = vsub.s32 2, %v1585
  %v1587 = vrot.slane %v895, %v1586
  %v1588 = vlaneseq
  %v1589 = vshrl.u32 %v1588, 7
  %v1590 = vsub.s32 3, %v1589
  %v1591 = vrot.slane %v895, %v1590
  %v1596 = vadd.f32 %v1571, %v1579
  %v1597 = vadd.f32 %v1572, %v1583
  %v1598 = vadd.f32 %v1573, %v1587
  %v1599 = vadd.f32 %v1574, %v1591
  %vm1600 = vcmp.ge.f32.partialorder %v1596, 0.0
  %vm1601 = vcmp.ge.f32.partialorder %v1597, 0.0
  %vm1602 = vcmp.ge.f32.partialorder %v1598, 0.0
  %vm1603 = vcmp.ge.f32.partialorder %v1599, 0.0
  %v1604 = vmul.f32 %v1596, 0.01
  %v1605 = vmul.f32 %v1597, 0.01
  %v1606 = vmul.f32 %v1598, 0.01
  %v1607 = vmul.f32 %v1599, 0.01
  %v1608 = vsel %vm1600, %v1596, %v1604
  %v1609 = vsel %vm1601, %v1597, %v1605
  %v1610 = vsel %vm1602, %v1598, %v1606
  %v1611 = vsel %vm1603, %v1599, %v1607
  %v1612 = vld [vmem:[%s7] sm:$0xff]
  %v1613 = vld [vmem:[%s7 + $0x8] sm:$0xff]
  %v1614 = vld [vmem:[%s7 + $0x10] sm:$0xff]
  %v1615 = vld [vmem:[%s7 + $0x18] sm:$0xf]
  %v1616 = vld [vmem:[%s7 + $0x1c] sm:$0xff]
  %v1617 = vld [vmem:[%s7 + $0x24] sm:$0xff]
  %v1618 = vld [vmem:[%s7 + $0x2c] sm:$0xff]
  %v1619 = vld [vmem:[%s7 + $0x34] sm:$0xf]
  %v1620 = vld [vmem:[%s7 + $0x38] sm:$0xff]
  %v1621 = vld [vmem:[%s7 + $0x40] sm:$0xff]
  %v1622 = vld [vmem:[%s7 + $0x48] sm:$0xff]
  %v1623 = vld [vmem:[%s7 + $0x50] sm:$0xf]
  %v1624 = vld [vmem:[%s7 + $0x54] sm:$0xff]
  %v1625 = vld [vmem:[%s7 + $0x5c] sm:$0xff]
  %v1626 = vld [vmem:[%s7 + $0x64] sm:$0xff]
  %v1627 = vld [vmem:[%s7 + $0x6c] sm:$0xf]
  %v1628 = vld [vmem:[%s7 + $0x70] sm:$0xff]
  %v1629 = vld [vmem:[%s7 + $0x78] sm:$0xff]
  %v1630 = vld [vmem:[%s7 + $0x80] sm:$0xff]
  %v1631 = vld [vmem:[%s7 + $0x88] sm:$0xf]
  %v1632 = vld [vmem:[%s7 + $0x8c] sm:$0xff]
  %v1633 = vld [vmem:[%s7 + $0x94] sm:$0xff]
  %v1634 = vld [vmem:[%s7 + $0x9c] sm:$0xff]
  %v1635 = vld [vmem:[%s7 + $0xa4] sm:$0xf]
  %v1636 = vld [vmem:[%s7 + $0xa8] sm:$0xff]
  %v1637 = vld [vmem:[%s7 + $0xb0] sm:$0xff]
  %v1638 = vld [vmem:[%s7 + $0xb8] sm:$0xff]
  %v1639 = vld [vmem:[%s7 + $0xc0] sm:$0xf]
  %v1640 = vld [vmem:[%s7 + $0xc4] sm:$0xff]
  %v1641 = vld [vmem:[%s7 + $0xcc] sm:$0xff]
  %v1642 = vld [vmem:[%s7 + $0xd4] sm:$0xff]
  %v1643 = vld [vmem:[%s7 + $0xdc] sm:$0xf]
  %v1644 = vld [vmem:[%s7 + $0xe0] sm:$0xff]
  %v1645 = vld [vmem:[%s7 + $0xe8] sm:$0xff]
  %v1646 = vld [vmem:[%s7 + $0xf0] sm:$0xff]
  %v1647 = vld [vmem:[%s7 + $0xf8] sm:$0xf]
  %v1648 = vld [vmem:[%s7 + $0xfc] sm:$0xff]
  %v1649 = vld [vmem:[%s7 + $0x104] sm:$0xff]
  %v1650 = vld [vmem:[%s7 + $0x10c] sm:$0xff]
  %v1651 = vld [vmem:[%s7 + $0x114] sm:$0xf]
  %v1652 = vld [vmem:[%s7 + $0x118] sm:$0xff]
  %v1653 = vld [vmem:[%s7 + $0x120] sm:$0xff]
  %v1654 = vld [vmem:[%s7 + $0x128] sm:$0xff]
  %v1655 = vld [vmem:[%s7 + $0x130] sm:$0xf]
  %v1656 = vld [vmem:[%s7 + $0x134] sm:$0xff]
  %v1657 = vld [vmem:[%s7 + $0x13c] sm:$0xff]
  %v1658 = vld [vmem:[%s7 + $0x144] sm:$0xff]
  %v1659 = vld [vmem:[%s7 + $0x14c] sm:$0xf]
  %v1660 = vld [vmem:[%s7 + $0x150] sm:$0xff]
  %v1661 = vld [vmem:[%s7 + $0x158] sm:$0xff]
  %v1662 = vld [vmem:[%s7 + $0x160] sm:$0xff]
  %v1663 = vld [vmem:[%s7 + $0x168] sm:$0xf]
  %v1664 = vld [vmem:[%s7 + $0x16c] sm:$0xff]
  %v1665 = vld [vmem:[%s7 + $0x174] sm:$0xff]
  %v1666 = vld [vmem:[%s7 + $0x17c] sm:$0xff]
  %v1667 = vld [vmem:[%s7 + $0x184] sm:$0xf]
  %v1668 = vld [vmem:[%s7 + $0x188] sm:$0xff]
  %v1669 = vld [vmem:[%s7 + $0x190] sm:$0xff]
  %v1670 = vld [vmem:[%s7 + $0x198] sm:$0xff]
  %v1671 = vld [vmem:[%s7 + $0x1a0] sm:$0xf]
  %v1672 = vld [vmem:[%s7 + $0x1a4] sm:$0xff]
  %v1673 = vld [vmem:[%s7 + $0x1ac] sm:$0xff]
  %v1674 = vld [vmem:[%s7 + $0x1b4] sm:$0xff]
  %v1675 = vld [vmem:[%s7 + $0x1bc] sm:$0xf]
  %v1676 = vld [vmem:[%s7 + $0x1c0] sm:$0xff]
  %v1677 = vld [vmem:[%s7 + $0x1c8] sm:$0xff]
  %v1678 = vld [vmem:[%s7 + $0x1d0] sm:$0xff]
  %v1679 = vld [vmem:[%s7 + $0x1d8] sm:$0xf]
  %v1680 = vld [vmem:[%s7 + $0x1dc] sm:$0xff]
  %v1681 = vld [vmem:[%s7 + $0x1e4] sm:$0xff]
  %v1682 = vld [vmem:[%s7 + $0x1ec] sm:$0xff]
  %v1683 = vld [vmem:[%s7 + $0x1f4] sm:$0xf]
  %v1684 = vld [vmem:[%s7 + $0x1f8] sm:$0xff]
  %v1685 = vld [vmem:[%s7 + $0x200] sm:$0xff]
  %v1686 = vld [vmem:[%s7 + $0x208] sm:$0xff]
  %v1687 = vld [vmem:[%s7 + $0x210] sm:$0xf]
  %v1688 = vld [vmem:[%s7 + $0x214] sm:$0xff]
  %v1689 = vld [vmem:[%s7 + $0x21c] sm:$0xff]
  %v1690 = vld [vmem:[%s7 + $0x224] sm:$0xff]
  %v1691 = vld [vmem:[%s7 + $0x22c] sm:$0xf]
  %v1692 = vld [vmem:[%s7 + $0x230] sm:$0xff]
  %v1693 = vld [vmem:[%s7 + $0x238] sm:$0xff]
  %v1694 = vld [vmem:[%s7 + $0x240] sm:$0xff]
  %v1695 = vld [vmem:[%s7 + $0x248] sm:$0xf]
  %v1696 = vld [vmem:[%s7 + $0x24c] sm:$0xff]
  %v1697 = vld [vmem:[%s7 + $0x254] sm:$0xff]
  %v1698 = vld [vmem:[%s7 + $0x25c] sm:$0xff]
  %v1699 = vld [vmem:[%s7 + $0x264] sm:$0xf]
  %v1700 = vld [vmem:[%s7 + $0x268] sm:$0xff]
  %v1701 = vld [vmem:[%s7 + $0x270] sm:$0xff]
  %v1702 = vld [vmem:[%s7 + $0x278] sm:$0xff]
  %v1703 = vld [vmem:[%s7 + $0x280] sm:$0xf]
  %v1704 = vld [vmem:[%s7 + $0x284] sm:$0xff]
  %v1705 = vld [vmem:[%s7 + $0x28c] sm:$0xff]
  %v1706 = vld [vmem:[%s7 + $0x294] sm:$0xff]
  %v1707 = vld [vmem:[%s7 + $0x29c] sm:$0xf]
  %v1708 = vld [vmem:[%s7 + $0x2a0] sm:$0xff]
  %v1709 = vld [vmem:[%s7 + $0x2a8] sm:$0xff]
  %v1710 = vld [vmem:[%s7 + $0x2b0] sm:$0xff]
  %v1711 = vld [vmem:[%s7 + $0x2b8] sm:$0xf]
  %v1712 = vld [vmem:[%s7 + $0x2bc] sm:$0xff]
  %v1713 = vld [vmem:[%s7 + $0x2c4] sm:$0xff]
  %v1714 = vld [vmem:[%s7 + $0x2cc] sm:$0xff]
  %v1715 = vld [vmem:[%s7 + $0x2d4] sm:$0xf]
  %v1716 = vld [vmem:[%s7 + $0x2d8] sm:$0xff]
  %v1717 = vld [vmem:[%s7 + $0x2e0] sm:$0xff]
  %v1718 = vld [vmem:[%s7 + $0x2e8] sm:$0xff]
  %v1719 = vld [vmem:[%s7 + $0x2f0] sm:$0xf]
  %v1720 = vld [vmem:[%s7 + $0x2f4] sm:$0xff]
  %v1721 = vld [vmem:[%s7 + $0x2fc] sm:$0xff]
  %v1722 = vld [vmem:[%s7 + $0x304] sm:$0xff]
  %v1723 = vld [vmem:[%s7 + $0x30c] sm:$0xf]
  %v1724 = vld [vmem:[%s7 + $0x310] sm:$0xff]
  %v1725 = vld [vmem:[%s7 + $0x318] sm:$0xff]
  %v1726 = vld [vmem:[%s7 + $0x320] sm:$0xff]
  %v1727 = vld [vmem:[%s7 + $0x328] sm:$0xf]
  %v1728 = vld [vmem:[%s7 + $0x32c] sm:$0xff]
  %v1729 = vld [vmem:[%s7 + $0x334] sm:$0xff]
  %v1730 = vld [vmem:[%s7 + $0x33c] sm:$0xff]
  %v1731 = vld [vmem:[%s7 + $0x344] sm:$0xf]
  %v1732 = vld [vmem:[%s7 + $0x348] sm:$0xff]
  %v1733 = vld [vmem:[%s7 + $0x350] sm:$0xff]
  %v1734 = vld [vmem:[%s7 + $0x358] sm:$0xff]
  %v1735 = vld [vmem:[%s7 + $0x360] sm:$0xf]
  %v1736 = vld [vmem:[%s7 + $0x364] sm:$0xff]
  %v1737 = vld [vmem:[%s7 + $0x36c] sm:$0xff]
  %v1738 = vld [vmem:[%s7 + $0x374] sm:$0xff]
  %v1739 = vld [vmem:[%s7 + $0x37c] sm:$0xf]
  %v1740 = vld [vmem:[%s7 + $0x380] sm:$0xff]
  %v1741 = vld [vmem:[%s7 + $0x388] sm:$0xff]
  %v1742 = vld [vmem:[%s7 + $0x390] sm:$0xff]
  %v1743 = vld [vmem:[%s7 + $0x398] sm:$0xf]
  %v1744 = vld [vmem:[%s7 + $0x39c] sm:$0xff]
  %v1745 = vld [vmem:[%s7 + $0x3a4] sm:$0xff]
  %v1746 = vld [vmem:[%s7 + $0x3ac] sm:$0xff]
  %v1747 = vld [vmem:[%s7 + $0x3b4] sm:$0xf]
  %v1748 = vld [vmem:[%s7 + $0x3b8] sm:$0xff]
  %v1749 = vld [vmem:[%s7 + $0x3c0] sm:$0xff]
  %v1750 = vld [vmem:[%s7 + $0x3c8] sm:$0xff]
  %v1751 = vld [vmem:[%s7 + $0x3d0] sm:$0xf]
  %v1752 = vld [vmem:[%s7 + $0x3d4] sm:$0xff]
  %v1753 = vld [vmem:[%s7 + $0x3dc] sm:$0xff]
  %v1754 = vld [vmem:[%s7 + $0x3e4] sm:$0xff]
  %v1755 = vld [vmem:[%s7 + $0x3ec] sm:$0xf]
  %v1756 = vld [vmem:[%s7 + $0x3f0] sm:$0xff]
  %v1757 = vld [vmem:[%s7 + $0x3f8] sm:$0xff]
  %v1758 = vld [vmem:[%s7 + $0x400] sm:$0xff]
  %v1759 = vld [vmem:[%s7 + $0x408] sm:$0xf]
  %v1760 = vld [vmem:[%s7 + $0x40c] sm:$0xff]
  %v1761 = vld [vmem:[%s7 + $0x414] sm:$0xff]
  %v1762 = vld [vmem:[%s7 + $0x41c] sm:$0xff]
  %v1763 = vld [vmem:[%s7 + $0x424] sm:$0xf]
  %v1764 = vld [vmem:[%s7 + $0x428] sm:$0xff]
  %v1765 = vld [vmem:[%s7 + $0x430] sm:$0xff]
  %v1766 = vld [vmem:[%s7 + $0x438] sm:$0xff]
  %v1767 = vld [vmem:[%s7 + $0x440] sm:$0xf]
  %v1768 = vld [vmem:[%s7 + $0x444] sm:$0xff]
  %v1769 = vld [vmem:[%s7 + $0x44c] sm:$0xff]
  %v1770 = vld [vmem:[%s7 + $0x454] sm:$0xff]
  %v1771 = vld [vmem:[%s7 + $0x45c] sm:$0xf]
  %v1772 = vld [vmem:[%s7 + $0x460] sm:$0xff]
  %v1773 = vld [vmem:[%s7 + $0x468] sm:$0xff]
  %v1774 = vld [vmem:[%s7 + $0x470] sm:$0xff]
  %v1775 = vld [vmem:[%s7 + $0x478] sm:$0xf]
  %v1776 = vld [vmem:[%s7 + $0x47c] sm:$0xff]
  %v1777 = vld [vmem:[%s7 + $0x484] sm:$0xff]
  %v1778 = vld [vmem:[%s7 + $0x48c] sm:$0xff]
  %v1779 = vld [vmem:[%s7 + $0x494] sm:$0xf]
  %v1780 = vld [vmem:[%s7 + $0x498] sm:$0xff]
  %v1781 = vld [vmem:[%s7 + $0x4a0] sm:$0xff]
  %v1782 = vld [vmem:[%s7 + $0x4a8] sm:$0xff]
  %v1783 = vld [vmem:[%s7 + $0x4b0] sm:$0xf]
  %v1784 = vld [vmem:[%s7 + $0x4b4] sm:$0xff]
  %v1785 = vld [vmem:[%s7 + $0x4bc] sm:$0xff]
  %v1786 = vld [vmem:[%s7 + $0x4c4] sm:$0xff]
  %v1787 = vld [vmem:[%s7 + $0x4cc] sm:$0xf]
  %v1788 = vld [vmem:[%s7 + $0x4d0] sm:$0xff]
  %v1789 = vld [vmem:[%s7 + $0x4d8] sm:$0xff]
  %v1790 = vld [vmem:[%s7 + $0x4e0] sm:$0xff]
  %v1791 = vld [vmem:[%s7 + $0x4e8] sm:$0xf]
  %v1792 = vld [vmem:[%s7 + $0x4ec] sm:$0xff]
  %v1793 = vld [vmem:[%s7 + $0x4f4] sm:$0xff]
  %v1794 = vld [vmem:[%s7 + $0x4fc] sm:$0xff]
  %v1795 = vld [vmem:[%s7 + $0x504] sm:$0xf]
  %v1796 = vld [vmem:[%s7 + $0x508] sm:$0xff]
  %v1797 = vld [vmem:[%s7 + $0x510] sm:$0xff]
  %v1798 = vld [vmem:[%s7 + $0x518] sm:$0xff]
  %v1799 = vld [vmem:[%s7 + $0x520] sm:$0xf]
  %v1800 = vld [vmem:[%s7 + $0x524] sm:$0xff]
  %v1801 = vld [vmem:[%s7 + $0x52c] sm:$0xff]
  %v1802 = vld [vmem:[%s7 + $0x534] sm:$0xff]
  %v1803 = vld [vmem:[%s7 + $0x53c] sm:$0xf]
  %v1804 = vld [vmem:[%s7 + $0x540] sm:$0xff]
  %v1805 = vld [vmem:[%s7 + $0x548] sm:$0xff]
  %v1806 = vld [vmem:[%s7 + $0x550] sm:$0xff]
  %v1807 = vld [vmem:[%s7 + $0x558] sm:$0xf]
  %v1808 = vunpack.c.l.bf16 %v1612
  %v1809 = vunpack.c.h.bf16 %v1612
  %v1810 = vunpack.c.l.bf16 %v1613
  %v1811 = vunpack.c.h.bf16 %v1613
  %v1812 = vunpack.c.l.bf16 %v1614
  %v1813 = vunpack.c.h.bf16 %v1614
  %v1814 = vunpack.c.l.bf16 %v1615
  %v1815 = vunpack.c.l.bf16 %v1616
  %v1816 = vunpack.c.h.bf16 %v1616
  %v1817 = vunpack.c.l.bf16 %v1617
  %v1818 = vunpack.c.h.bf16 %v1617
  %v1819 = vunpack.c.l.bf16 %v1618
  %v1820 = vunpack.c.h.bf16 %v1618
  %v1821 = vunpack.c.l.bf16 %v1619
  %v1822 = vunpack.c.l.bf16 %v1620
  %v1823 = vunpack.c.h.bf16 %v1620
  %v1824 = vunpack.c.l.bf16 %v1621
  %v1825 = vunpack.c.h.bf16 %v1621
  %v1826 = vunpack.c.l.bf16 %v1622
  %v1827 = vunpack.c.h.bf16 %v1622
  %v1828 = vunpack.c.l.bf16 %v1623
  %v1829 = vunpack.c.l.bf16 %v1624
  %v1830 = vunpack.c.h.bf16 %v1624
  %v1831 = vunpack.c.l.bf16 %v1625
  %v1832 = vunpack.c.h.bf16 %v1625
  %v1833 = vunpack.c.l.bf16 %v1626
  %v1834 = vunpack.c.h.bf16 %v1626
  %v1835 = vunpack.c.l.bf16 %v1627
  %v1836 = vunpack.c.l.bf16 %v1628
  %v1837 = vunpack.c.h.bf16 %v1628
  %v1838 = vunpack.c.l.bf16 %v1629
  %v1839 = vunpack.c.h.bf16 %v1629
  %v1840 = vunpack.c.l.bf16 %v1630
  %v1841 = vunpack.c.h.bf16 %v1630
  %v1842 = vunpack.c.l.bf16 %v1631
  %v1843 = vunpack.c.l.bf16 %v1632
  %v1844 = vunpack.c.h.bf16 %v1632
  %v1845 = vunpack.c.l.bf16 %v1633
  %v1846 = vunpack.c.h.bf16 %v1633
  %v1847 = vunpack.c.l.bf16 %v1634
  %v1848 = vunpack.c.h.bf16 %v1634
  %v1849 = vunpack.c.l.bf16 %v1635
  %v1850 = vunpack.c.l.bf16 %v1636
  %v1851 = vunpack.c.h.bf16 %v1636
  %v1852 = vunpack.c.l.bf16 %v1637
  %v1853 = vunpack.c.h.bf16 %v1637
  %v1854 = vunpack.c.l.bf16 %v1638
  %v1855 = vunpack.c.h.bf16 %v1638
  %v1856 = vunpack.c.l.bf16 %v1639
  %v1857 = vunpack.c.l.bf16 %v1640
  %v1858 = vunpack.c.h.bf16 %v1640
  %v1859 = vunpack.c.l.bf16 %v1641
  %v1860 = vunpack.c.h.bf16 %v1641
  %v1861 = vunpack.c.l.bf16 %v1642
  %v1862 = vunpack.c.h.bf16 %v1642
  %v1863 = vunpack.c.l.bf16 %v1643
  %v1864 = vunpack.c.l.bf16 %v1644
  %v1865 = vunpack.c.h.bf16 %v1644
  %v1866 = vunpack.c.l.bf16 %v1645
  %v1867 = vunpack.c.h.bf16 %v1645
  %v1868 = vunpack.c.l.bf16 %v1646
  %v1869 = vunpack.c.h.bf16 %v1646
  %v1870 = vunpack.c.l.bf16 %v1647
  %v1871 = vunpack.c.l.bf16 %v1648
  %v1872 = vunpack.c.h.bf16 %v1648
  %v1873 = vunpack.c.l.bf16 %v1649
  %v1874 = vunpack.c.h.bf16 %v1649
  %v1875 = vunpack.c.l.bf16 %v1650
  %v1876 = vunpack.c.h.bf16 %v1650
  %v1877 = vunpack.c.l.bf16 %v1651
  %v1878 = vunpack.c.l.bf16 %v1652
  %v1879 = vunpack.c.h.bf16 %v1652
  %v1880 = vunpack.c.l.bf16 %v1653
  %v1881 = vunpack.c.h.bf16 %v1653
  %v1882 = vunpack.c.l.bf16 %v1654
  %v1883 = vunpack.c.h.bf16 %v1654
  %v1884 = vunpack.c.l.bf16 %v1655
  %v1885 = vunpack.c.l.bf16 %v1656
  %v1886 = vunpack.c.h.bf16 %v1656
  %v1887 = vunpack.c.l.bf16 %v1657
  %v1888 = vunpack.c.h.bf16 %v1657
  %v1889 = vunpack.c.l.bf16 %v1658
  %v1890 = vunpack.c.h.bf16 %v1658
  %v1891 = vunpack.c.l.bf16 %v1659
  %v1892 = vunpack.c.l.bf16 %v1660
  %v1893 = vunpack.c.h.bf16 %v1660
  %v1894 = vunpack.c.l.bf16 %v1661
  %v1895 = vunpack.c.h.bf16 %v1661
  %v1896 = vunpack.c.l.bf16 %v1662
  %v1897 = vunpack.c.h.bf16 %v1662
  %v1898 = vunpack.c.l.bf16 %v1663
  %v1899 = vunpack.c.l.bf16 %v1664
  %v1900 = vunpack.c.h.bf16 %v1664
  %v1901 = vunpack.c.l.bf16 %v1665
  %v1902 = vunpack.c.h.bf16 %v1665
  %v1903 = vunpack.c.l.bf16 %v1666
  %v1904 = vunpack.c.h.bf16 %v1666
  %v1905 = vunpack.c.l.bf16 %v1667
  %v1906 = vunpack.c.l.bf16 %v1668
  %v1907 = vunpack.c.h.bf16 %v1668
  %v1908 = vunpack.c.l.bf16 %v1669
  %v1909 = vunpack.c.h.bf16 %v1669
  %v1910 = vunpack.c.l.bf16 %v1670
  %v1911 = vunpack.c.h.bf16 %v1670
  %v1912 = vunpack.c.l.bf16 %v1671
  %v1913 = vunpack.c.l.bf16 %v1672
  %v1914 = vunpack.c.h.bf16 %v1672
  %v1915 = vunpack.c.l.bf16 %v1673
  %v1916 = vunpack.c.h.bf16 %v1673
  %v1917 = vunpack.c.l.bf16 %v1674
  %v1918 = vunpack.c.h.bf16 %v1674
  %v1919 = vunpack.c.l.bf16 %v1675
  %v1920 = vunpack.c.l.bf16 %v1676
  %v1921 = vunpack.c.h.bf16 %v1676
  %v1922 = vunpack.c.l.bf16 %v1677
  %v1923 = vunpack.c.h.bf16 %v1677
  %v1924 = vunpack.c.l.bf16 %v1678
  %v1925 = vunpack.c.h.bf16 %v1678
  %v1926 = vunpack.c.l.bf16 %v1679
  %v1927 = vunpack.c.l.bf16 %v1680
  %v1928 = vunpack.c.h.bf16 %v1680
  %v1929 = vunpack.c.l.bf16 %v1681
  %v1930 = vunpack.c.h.bf16 %v1681
  %v1931 = vunpack.c.l.bf16 %v1682
  %v1932 = vunpack.c.h.bf16 %v1682
  %v1933 = vunpack.c.l.bf16 %v1683
  %v1934 = vunpack.c.l.bf16 %v1684
  %v1935 = vunpack.c.h.bf16 %v1684
  %v1936 = vunpack.c.l.bf16 %v1685
  %v1937 = vunpack.c.h.bf16 %v1685
  %v1938 = vunpack.c.l.bf16 %v1686
  %v1939 = vunpack.c.h.bf16 %v1686
  %v1940 = vunpack.c.l.bf16 %v1687
  %v1941 = vunpack.c.l.bf16 %v1688
  %v1942 = vunpack.c.h.bf16 %v1688
  %v1943 = vunpack.c.l.bf16 %v1689
  %v1944 = vunpack.c.h.bf16 %v1689
  %v1945 = vunpack.c.l.bf16 %v1690
  %v1946 = vunpack.c.h.bf16 %v1690
  %v1947 = vunpack.c.l.bf16 %v1691
  %v1948 = vunpack.c.l.bf16 %v1692
  %v1949 = vunpack.c.h.bf16 %v1692
  %v1950 = vunpack.c.l.bf16 %v1693
  %v1951 = vunpack.c.h.bf16 %v1693
  %v1952 = vunpack.c.l.bf16 %v1694
  %v1953 = vunpack.c.h.bf16 %v1694
  %v1954 = vunpack.c.l.bf16 %v1695
  %v1955 = vunpack.c.l.bf16 %v1696
  %v1956 = vunpack.c.h.bf16 %v1696
  %v1957 = vunpack.c.l.bf16 %v1697
  %v1958 = vunpack.c.h.bf16 %v1697
  %v1959 = vunpack.c.l.bf16 %v1698
  %v1960 = vunpack.c.h.bf16 %v1698
  %v1961 = vunpack.c.l.bf16 %v1699
  %v1962 = vunpack.c.l.bf16 %v1700
  %v1963 = vunpack.c.h.bf16 %v1700
  %v1964 = vunpack.c.l.bf16 %v1701
  %v1965 = vunpack.c.h.bf16 %v1701
  %v1966 = vunpack.c.l.bf16 %v1702
  %v1967 = vunpack.c.h.bf16 %v1702
  %v1968 = vunpack.c.l.bf16 %v1703
  %v1969 = vunpack.c.l.bf16 %v1704
  %v1970 = vunpack.c.h.bf16 %v1704
  %v1971 = vunpack.c.l.bf16 %v1705
  %v1972 = vunpack.c.h.bf16 %v1705
  %v1973 = vunpack.c.l.bf16 %v1706
  %v1974 = vunpack.c.h.bf16 %v1706
  %v1975 = vunpack.c.l.bf16 %v1707
  %v1976 = vunpack.c.l.bf16 %v1708
  %v1977 = vunpack.c.h.bf16 %v1708
  %v1978 = vunpack.c.l.bf16 %v1709
  %v1979 = vunpack.c.h.bf16 %v1709
  %v1980 = vunpack.c.l.bf16 %v1710
  %v1981 = vunpack.c.h.bf16 %v1710
  %v1982 = vunpack.c.l.bf16 %v1711
  %v1983 = vunpack.c.l.bf16 %v1712
  %v1984 = vunpack.c.h.bf16 %v1712
  %v1985 = vunpack.c.l.bf16 %v1713
  %v1986 = vunpack.c.h.bf16 %v1713
  %v1987 = vunpack.c.l.bf16 %v1714
  %v1988 = vunpack.c.h.bf16 %v1714
  %v1989 = vunpack.c.l.bf16 %v1715
  %v1990 = vunpack.c.l.bf16 %v1716
  %v1991 = vunpack.c.h.bf16 %v1716
  %v1992 = vunpack.c.l.bf16 %v1717
  %v1993 = vunpack.c.h.bf16 %v1717
  %v1994 = vunpack.c.l.bf16 %v1718
  %v1995 = vunpack.c.h.bf16 %v1718
  %v1996 = vunpack.c.l.bf16 %v1719
  %v1997 = vunpack.c.l.bf16 %v1720
  %v1998 = vunpack.c.h.bf16 %v1720
  %v1999 = vunpack.c.l.bf16 %v1721
  %v2000 = vunpack.c.h.bf16 %v1721
  %v2001 = vunpack.c.l.bf16 %v1722
  %v2002 = vunpack.c.h.bf16 %v1722
  %v2003 = vunpack.c.l.bf16 %v1723
  %v2004 = vunpack.c.l.bf16 %v1724
  %v2005 = vunpack.c.h.bf16 %v1724
  %v2006 = vunpack.c.l.bf16 %v1725
  %v2007 = vunpack.c.h.bf16 %v1725
  %v2008 = vunpack.c.l.bf16 %v1726
  %v2009 = vunpack.c.h.bf16 %v1726
  %v2010 = vunpack.c.l.bf16 %v1727
  %v2011 = vunpack.c.l.bf16 %v1728
  %v2012 = vunpack.c.h.bf16 %v1728
  %v2013 = vunpack.c.l.bf16 %v1729
  %v2014 = vunpack.c.h.bf16 %v1729
  %v2015 = vunpack.c.l.bf16 %v1730
  %v2016 = vunpack.c.h.bf16 %v1730
  %v2017 = vunpack.c.l.bf16 %v1731
  %v2018 = vunpack.c.l.bf16 %v1732
  %v2019 = vunpack.c.h.bf16 %v1732
  %v2020 = vunpack.c.l.bf16 %v1733
  %v2021 = vunpack.c.h.bf16 %v1733
  %v2022 = vunpack.c.l.bf16 %v1734
  %v2023 = vunpack.c.h.bf16 %v1734
  %v2024 = vunpack.c.l.bf16 %v1735
  %v2025 = vunpack.c.l.bf16 %v1736
  %v2026 = vunpack.c.h.bf16 %v1736
  %v2027 = vunpack.c.l.bf16 %v1737
  %v2028 = vunpack.c.h.bf16 %v1737
  %v2029 = vunpack.c.l.bf16 %v1738
  %v2030 = vunpack.c.h.bf16 %v1738
  %v2031 = vunpack.c.l.bf16 %v1739
  %v2032 = vunpack.c.l.bf16 %v1740
  %v2033 = vunpack.c.h.bf16 %v1740
  %v2034 = vunpack.c.l.bf16 %v1741
  %v2035 = vunpack.c.h.bf16 %v1741
  %v2036 = vunpack.c.l.bf16 %v1742
  %v2037 = vunpack.c.h.bf16 %v1742
  %v2038 = vunpack.c.l.bf16 %v1743
  %v2039 = vunpack.c.l.bf16 %v1744
  %v2040 = vunpack.c.h.bf16 %v1744
  %v2041 = vunpack.c.l.bf16 %v1745
  %v2042 = vunpack.c.h.bf16 %v1745
  %v2043 = vunpack.c.l.bf16 %v1746
  %v2044 = vunpack.c.h.bf16 %v1746
  %v2045 = vunpack.c.l.bf16 %v1747
  %v2046 = vunpack.c.l.bf16 %v1748
  %v2047 = vunpack.c.h.bf16 %v1748
  %v2048 = vunpack.c.l.bf16 %v1749
  %v2049 = vunpack.c.h.bf16 %v1749
  %v2050 = vunpack.c.l.bf16 %v1750
  %v2051 = vunpack.c.h.bf16 %v1750
  %v2052 = vunpack.c.l.bf16 %v1751
  %v2053 = vunpack.c.l.bf16 %v1752
  %v2054 = vunpack.c.h.bf16 %v1752
  %v2055 = vunpack.c.l.bf16 %v1753
  %v2056 = vunpack.c.h.bf16 %v1753
  %v2057 = vunpack.c.l.bf16 %v1754
  %v2058 = vunpack.c.h.bf16 %v1754
  %v2059 = vunpack.c.l.bf16 %v1755
  %v2060 = vunpack.c.l.bf16 %v1756
  %v2061 = vunpack.c.h.bf16 %v1756
  %v2062 = vunpack.c.l.bf16 %v1757
  %v2063 = vunpack.c.h.bf16 %v1757
  %v2064 = vunpack.c.l.bf16 %v1758
  %v2065 = vunpack.c.h.bf16 %v1758
  %v2066 = vunpack.c.l.bf16 %v1759
  %v2067 = vunpack.c.l.bf16 %v1760
  %v2068 = vunpack.c.h.bf16 %v1760
  %v2069 = vunpack.c.l.bf16 %v1761
  %v2070 = vunpack.c.h.bf16 %v1761
  %v2071 = vunpack.c.l.bf16 %v1762
  %v2072 = vunpack.c.h.bf16 %v1762
  %v2073 = vunpack.c.l.bf16 %v1763
  %v2074 = vunpack.c.l.bf16 %v1764
  %v2075 = vunpack.c.h.bf16 %v1764
  %v2076 = vunpack.c.l.bf16 %v1765
  %v2077 = vunpack.c.h.bf16 %v1765
  %v2078 = vunpack.c.l.bf16 %v1766
  %v2079 = vunpack.c.h.bf16 %v1766
  %v2080 = vunpack.c.l.bf16 %v1767
  %v2081 = vunpack.c.l.bf16 %v1768
  %v2082 = vunpack.c.h.bf16 %v1768
  %v2083 = vunpack.c.l.bf16 %v1769
  %v2084 = vunpack.c.h.bf16 %v1769
  %v2085 = vunpack.c.l.bf16 %v1770
  %v2086 = vunpack.c.h.bf16 %v1770
  %v2087 = vunpack.c.l.bf16 %v1771
  %v2088 = vunpack.c.l.bf16 %v1772
  %v2089 = vunpack.c.h.bf16 %v1772
  %v2090 = vunpack.c.l.bf16 %v1773
  %v2091 = vunpack.c.h.bf16 %v1773
  %v2092 = vunpack.c.l.bf16 %v1774
  %v2093 = vunpack.c.h.bf16 %v1774
  %v2094 = vunpack.c.l.bf16 %v1775
  %v2095 = vunpack.c.l.bf16 %v1776
  %v2096 = vunpack.c.h.bf16 %v1776
  %v2097 = vunpack.c.l.bf16 %v1777
  %v2098 = vunpack.c.h.bf16 %v1777
  %v2099 = vunpack.c.l.bf16 %v1778
  %v2100 = vunpack.c.h.bf16 %v1778
  %v2101 = vunpack.c.l.bf16 %v1779
  %v2102 = vunpack.c.l.bf16 %v1780
  %v2103 = vunpack.c.h.bf16 %v1780
  %v2104 = vunpack.c.l.bf16 %v1781
  %v2105 = vunpack.c.h.bf16 %v1781
  %v2106 = vunpack.c.l.bf16 %v1782
  %v2107 = vunpack.c.h.bf16 %v1782
  %v2108 = vunpack.c.l.bf16 %v1783
  %v2109 = vunpack.c.l.bf16 %v1784
  %v2110 = vunpack.c.h.bf16 %v1784
  %v2111 = vunpack.c.l.bf16 %v1785
  %v2112 = vunpack.c.h.bf16 %v1785
  %v2113 = vunpack.c.l.bf16 %v1786
  %v2114 = vunpack.c.h.bf16 %v1786
  %v2115 = vunpack.c.l.bf16 %v1787
  %v2116 = vunpack.c.l.bf16 %v1788
  %v2117 = vunpack.c.h.bf16 %v1788
  %v2118 = vunpack.c.l.bf16 %v1789
  %v2119 = vunpack.c.h.bf16 %v1789
  %v2120 = vunpack.c.l.bf16 %v1790
  %v2121 = vunpack.c.h.bf16 %v1790
  %v2122 = vunpack.c.l.bf16 %v1791
  %v2123 = vunpack.c.l.bf16 %v1792
  %v2124 = vunpack.c.h.bf16 %v1792
  %v2125 = vunpack.c.l.bf16 %v1793
  %v2126 = vunpack.c.h.bf16 %v1793
  %v2127 = vunpack.c.l.bf16 %v1794
  %v2128 = vunpack.c.h.bf16 %v1794
  %v2129 = vunpack.c.l.bf16 %v1795
  %v2130 = vunpack.c.l.bf16 %v1796
  %v2131 = vunpack.c.h.bf16 %v1796
  %v2132 = vunpack.c.l.bf16 %v1797
  %v2133 = vunpack.c.h.bf16 %v1797
  %v2134 = vunpack.c.l.bf16 %v1798
  %v2135 = vunpack.c.h.bf16 %v1798
  %v2136 = vunpack.c.l.bf16 %v1799
  %v2137 = vunpack.c.l.bf16 %v1800
  %v2138 = vunpack.c.h.bf16 %v1800
  %v2139 = vunpack.c.l.bf16 %v1801
  %v2140 = vunpack.c.h.bf16 %v1801
  %v2141 = vunpack.c.l.bf16 %v1802
  %v2142 = vunpack.c.h.bf16 %v1802
  %v2143 = vunpack.c.l.bf16 %v1803
  %v2144 = vunpack.c.l.bf16 %v1804
  %v2145 = vunpack.c.h.bf16 %v1804
  %v2146 = vunpack.c.l.bf16 %v1805
  %v2147 = vunpack.c.h.bf16 %v1805
  %v2148 = vunpack.c.l.bf16 %v1806
  %v2149 = vunpack.c.h.bf16 %v1806
  %v2150 = vunpack.c.l.bf16 %v1807
  %v2152 = vsel %vm896, %v1611, 0
  %2154 = vmatprep.subr.mxu0 %v1914
  %2155 = vmatpush1.msra.mxu0 %v1913
  %2156 = vmatprep.subr.mxu0 %v1907
  %2157 = vmatpush1.msra.mxu0 %v1906
  %2158 = vmatprep.subr.mxu0 %v1900
  %2159 = vmatpush1.msra.mxu0 %v1899
  %2160 = vmatprep.subr.mxu0 %v1893
  %2161 = vmatpush1.msra.mxu0 %v1892
  %2162 = vmatprep.subr.mxu0 %v1886
  %2163 = vmatpush1.msra.mxu0 %v1885
  %2164 = vmatprep.subr.mxu0 %v1879
  %2165 = vmatpush1.msra.mxu0 %v1878
  %2166 = vmatprep.subr.mxu0 %v1872
  %2167 = vmatpush1.msra.mxu0 %v1871
  %2168 = vmatprep.subr.mxu0 %v1865
  %2169 = vmatpush1.msra.mxu0 %v1864
  %2170 = vmatprep.subr.mxu0 %v1858
  %2171 = vmatpush1.msra.mxu0 %v1857
  %2172 = vmatprep.subr.mxu0 %v1851
  %2173 = vmatpush1.msra.mxu0 %v1850
  %2174 = vmatprep.subr.mxu0 %v1844
  %2175 = vmatpush1.msra.mxu0 %v1843
  %2176 = vmatprep.subr.mxu0 %v1837
  %2177 = vmatpush1.msra.mxu0 %v1836
  %2178 = vmatprep.subr.mxu0 %v1830
  %2179 = vmatpush1.msra.mxu0 %v1829
  %2180 = vmatprep.subr.mxu0 %v1823
  %2181 = vmatpush1.msra.mxu0 %v1822
  %2182 = vmatprep.subr.mxu0 %v1816
  %2183 = vmatpush1.msra.mxu0 %v1815
  %2184 = vmatprep.subr.mxu0 %v1809
  %2185 = vmatpush1.msra.mxu0 %v1808
  %2186 = vmatprep.subr.mxu0 %v2026
  %2187 = vmatpush2.msra.mxu0 %v2025
  %2188 = vmatprep.subr.mxu0 %v2019
  %2189 = vmatpush2.msra.mxu0 %v2018
  %2190 = vmatprep.subr.mxu0 %v2012
  %2191 = vmatpush2.msra.mxu0 %v2011
  %2192 = vmatprep.subr.mxu0 %v2005
  %2193 = vmatpush2.msra.mxu0 %v2004
  %2194 = vmatprep.subr.mxu0 %v1998
  %2195 = vmatpush2.msra.mxu0 %v1997
  %2196 = vmatprep.subr.mxu0 %v1991
  %2197 = vmatpush2.msra.mxu0 %v1990
  %2198 = vmatprep.subr.mxu0 %v1984
  %2199 = vmatpush2.msra.mxu0 %v1983
  %2200 = vmatprep.subr.mxu0 %v1977
  %2201 = vmatpush2.msra.mxu0 %v1976
  %2202 = vmatprep.subr.mxu0 %v1970
  %2203 = vmatpush2.msra.mxu0 %v1969
  %2204 = vmatprep.subr.mxu0 %v1963
  %2205 = vmatpush2.msra.mxu0 %v1962
  %2206 = vmatprep.subr.mxu0 %v1956
  %2207 = vmatpush2.msra.mxu0 %v1955
  %2208 = vmatprep.subr.mxu0 %v1949
  %2209 = vmatpush2.msra.mxu0 %v1948
  %2210 = vmatprep.subr.mxu0 %v1942
  %2211 = vmatpush2.msra.mxu0 %v1941
  %2212 = vmatprep.subr.mxu0 %v1935
  %2213 = vmatpush2.msra.mxu0 %v1934
  %2214 = vmatprep.subr.mxu0 %v1928
  %2215 = vmatpush2.msra.mxu0 %v1927
  %2216 = vmatprep.subr.mxu0 %v1921
  %2217 = vmatpush2.msra.mxu0 %v1920
  %2218 = vmatprep.mubr.f32.mxu0 %v1609
  %2219 = vmatmul.mubr.f32.gmra.mxu0 %v1608
  %v2220 = vpop.f32.mrf.mxu0
  %v2221 = vadd.f32 0.0, %v2220
  %v2222 = vpop.f32.mrf.mxu0
  %v2223 = vadd.f32 0.0, %v2222
  %2224 = vdwg.mxu0
  %2225 = vmatprep.subr.mxu0 %v2138
  %2226 = vmatpush1.msra.mxu0 %v2137
  %2227 = vmatprep.subr.mxu0 %v2131
  %2228 = vmatpush1.msra.mxu0 %v2130
  %2229 = vmatprep.subr.mxu0 %v2124
  %2230 = vmatpush1.msra.mxu0 %v2123
  %2231 = vmatprep.subr.mxu0 %v2117
  %2232 = vmatpush1.msra.mxu0 %v2116
  %2233 = vmatprep.subr.mxu0 %v2110
  %2234 = vmatpush1.msra.mxu0 %v2109
  %2235 = vmatprep.subr.mxu0 %v2103
  %2236 = vmatpush1.msra.mxu0 %v2102
  %2237 = vmatprep.subr.mxu0 %v2096
  %2238 = vmatpush1.msra.mxu0 %v2095
  %2239 = vmatprep.subr.mxu0 %v2089
  %2240 = vmatpush1.msra.mxu0 %v2088
  %2241 = vmatprep.subr.mxu0 %v2082
  %2242 = vmatpush1.msra.mxu0 %v2081
  %2243 = vmatprep.subr.mxu0 %v2075
  %2244 = vmatpush1.msra.mxu0 %v2074
  %2245 = vmatprep.subr.mxu0 %v2068
  %2246 = vmatpush1.msra.mxu0 %v2067
  %2247 = vmatprep.subr.mxu0 %v2061
  %2248 = vmatpush1.msra.mxu0 %v2060
  %2249 = vmatprep.subr.mxu0 %v2054
  %2250 = vmatpush1.msra.mxu0 %v2053
  %2251 = vmatprep.subr.mxu0 %v2047
  %2252 = vmatpush1.msra.mxu0 %v2046
  %2253 = vmatprep.subr.mxu0 %v2040
  %2254 = vmatpush1.msra.mxu0 %v2039
  %2255 = vmatprep.subr.mxu0 %v2033
  %2256 = vmatpush1.msra.mxu0 %v2032
  %2257 = vmatprep.subr.mxu0 0.0
  %2258 = vmatpush2.msra.mxu0 0.0
  %2259 = vmatprep.subr.mxu0 0.0
  %2260 = vmatpush2.msra.mxu0 0.0
  %2261 = vmatprep.subr.mxu0 0.0
  %2262 = vmatpush2.msra.mxu0 0.0
  %2263 = vmatprep.subr.mxu0 0.0
  %2264 = vmatpush2.msra.mxu0 0.0
  %2265 = vmatprep.subr.mxu0 0.0
  %2266 = vmatpush2.msra.mxu0 0.0
  %2267 = vmatprep.subr.mxu0 0.0
  %2268 = vmatpush2.msra.mxu0 0.0
  %2269 = vmatprep.subr.mxu0 0.0
  %2270 = vmatpush2.msra.mxu0 0.0
  %2271 = vmatprep.subr.mxu0 0.0
  %2272 = vmatpush2.msra.mxu0 0.0
  %2273 = vmatprep.subr.mxu0 0.0
  %2274 = vmatpush2.msra.mxu0 0.0
  %2275 = vmatprep.subr.mxu0 0.0
  %2276 = vmatpush2.msra.mxu0 0.0
  %2277 = vmatprep.subr.mxu0 0.0
  %2278 = vmatpush2.msra.mxu0 0.0
  %2279 = vmatprep.subr.mxu0 0.0
  %2280 = vmatpush2.msra.mxu0 0.0
  %2281 = vmatprep.subr.mxu0 0.0
  %2282 = vmatpush2.msra.mxu0 0.0
  %2283 = vmatprep.subr.mxu0 0.0
  %2284 = vmatpush2.msra.mxu0 0.0
  %2285 = vmatprep.subr.mxu0 0.0
  %2286 = vmatpush2.msra.mxu0 0.0
  %2287 = vmatprep.subr.mxu0 %v2145
  %2288 = vmatpush2.msra.mxu0 %v2144
  %2289 = vmatprep.mubr.f32.mxu0 %v2152
  %2290 = vmatmul.mubr.f32.gmra.mxu0 %v1610
  %v2291 = vpop.f32.mrf.mxu0
  %v2292 = vadd.f32 %v2221, %v2291
  %v2293 = vpop.f32.mrf.mxu0
  %v2294 = vadd.f32 %v2223, %v2293
  %2295 = vdwg.mxu0
  %2296 = vmatprep.subr.mxu0 %v1916
  %2297 = vmatpush1.msra.mxu0 %v1915
  %2298 = vmatprep.subr.mxu0 %v1909
  %2299 = vmatpush1.msra.mxu0 %v1908
  %2300 = vmatprep.subr.mxu0 %v1902
  %2301 = vmatpush1.msra.mxu0 %v1901
  %2302 = vmatprep.subr.mxu0 %v1895
  %2303 = vmatpush1.msra.mxu0 %v1894
  %2304 = vmatprep.subr.mxu0 %v1888
  %2305 = vmatpush1.msra.mxu0 %v1887
  %2306 = vmatprep.subr.mxu0 %v1881
  %2307 = vmatpush1.msra.mxu0 %v1880
  %2308 = vmatprep.subr.mxu0 %v1874
  %2309 = vmatpush1.msra.mxu0 %v1873
  %2310 = vmatprep.subr.mxu0 %v1867
  %2311 = vmatpush1.msra.mxu0 %v1866
  %2312 = vmatprep.subr.mxu0 %v1860
  %2313 = vmatpush1.msra.mxu0 %v1859
  %2314 = vmatprep.subr.mxu0 %v1853
  %2315 = vmatpush1.msra.mxu0 %v1852
  %2316 = vmatprep.subr.mxu0 %v1846
  %2317 = vmatpush1.msra.mxu0 %v1845
  %2318 = vmatprep.subr.mxu0 %v1839
  %2319 = vmatpush1.msra.mxu0 %v1838
  %2320 = vmatprep.subr.mxu0 %v1832
  %2321 = vmatpush1.msra.mxu0 %v1831
  %2322 = vmatprep.subr.mxu0 %v1825
  %2323 = vmatpush1.msra.mxu0 %v1824
  %2324 = vmatprep.subr.mxu0 %v1818
  %2325 = vmatpush1.msra.mxu0 %v1817
  %2326 = vmatprep.subr.mxu0 %v1811
  %2327 = vmatpush1.msra.mxu0 %v1810
  %2328 = vmatprep.subr.mxu0 %v2028
  %2329 = vmatpush2.msra.mxu0 %v2027
  %2330 = vmatprep.subr.mxu0 %v2021
  %2331 = vmatpush2.msra.mxu0 %v2020
  %2332 = vmatprep.subr.mxu0 %v2014
  %2333 = vmatpush2.msra.mxu0 %v2013
  %2334 = vmatprep.subr.mxu0 %v2007
  %2335 = vmatpush2.msra.mxu0 %v2006
  %2336 = vmatprep.subr.mxu0 %v2000
  %2337 = vmatpush2.msra.mxu0 %v1999
  %2338 = vmatprep.subr.mxu0 %v1993
  %2339 = vmatpush2.msra.mxu0 %v1992
  %2340 = vmatprep.subr.mxu0 %v1986
  %2341 = vmatpush2.msra.mxu0 %v1985
  %2342 = vmatprep.subr.mxu0 %v1979
  %2343 = vmatpush2.msra.mxu0 %v1978
  %2344 = vmatprep.subr.mxu0 %v1972
  %2345 = vmatpush2.msra.mxu0 %v1971
  %2346 = vmatprep.subr.mxu0 %v1965
  %2347 = vmatpush2.msra.mxu0 %v1964
  %2348 = vmatprep.subr.mxu0 %v1958
  %2349 = vmatpush2.msra.mxu0 %v1957
  %2350 = vmatprep.subr.mxu0 %v1951
  %2351 = vmatpush2.msra.mxu0 %v1950
  %2352 = vmatprep.subr.mxu0 %v1944
  %2353 = vmatpush2.msra.mxu0 %v1943
  %2354 = vmatprep.subr.mxu0 %v1937
  %2355 = vmatpush2.msra.mxu0 %v1936
  %2356 = vmatprep.subr.mxu0 %v1930
  %2357 = vmatpush2.msra.mxu0 %v1929
  %2358 = vmatprep.subr.mxu0 %v1923
  %2359 = vmatpush2.msra.mxu0 %v1922
  %2360 = vmatprep.mubr.f32.mxu0 %v1609
  %2361 = vmatmul.mubr.f32.gmra.mxu0 %v1608
  %v2362 = vpop.f32.mrf.mxu0
  %v2363 = vadd.f32 0.0, %v2362
  %v2364 = vpop.f32.mrf.mxu0
  %v2365 = vadd.f32 0.0, %v2364
  %2366 = vdwg.mxu0
  %2367 = vmatprep.subr.mxu0 %v2140
  %2368 = vmatpush1.msra.mxu0 %v2139
  %2369 = vmatprep.subr.mxu0 %v2133
  %2370 = vmatpush1.msra.mxu0 %v2132
  %2371 = vmatprep.subr.mxu0 %v2126
  %2372 = vmatpush1.msra.mxu0 %v2125
  %2373 = vmatprep.subr.mxu0 %v2119
  %2374 = vmatpush1.msra.mxu0 %v2118
  %2375 = vmatprep.subr.mxu0 %v2112
  %2376 = vmatpush1.msra.mxu0 %v2111
  %2377 = vmatprep.subr.mxu0 %v2105
  %2378 = vmatpush1.msra.mxu0 %v2104
  %2379 = vmatprep.subr.mxu0 %v2098
  %2380 = vmatpush1.msra.mxu0 %v2097
  %2381 = vmatprep.subr.mxu0 %v2091
  %2382 = vmatpush1.msra.mxu0 %v2090
  %2383 = vmatprep.subr.mxu0 %v2084
  %2384 = vmatpush1.msra.mxu0 %v2083
  %2385 = vmatprep.subr.mxu0 %v2077
  %2386 = vmatpush1.msra.mxu0 %v2076
  %2387 = vmatprep.subr.mxu0 %v2070
  %2388 = vmatpush1.msra.mxu0 %v2069
  %2389 = vmatprep.subr.mxu0 %v2063
  %2390 = vmatpush1.msra.mxu0 %v2062
  %2391 = vmatprep.subr.mxu0 %v2056
  %2392 = vmatpush1.msra.mxu0 %v2055
  %2393 = vmatprep.subr.mxu0 %v2049
  %2394 = vmatpush1.msra.mxu0 %v2048
  %2395 = vmatprep.subr.mxu0 %v2042
  %2396 = vmatpush1.msra.mxu0 %v2041
  %2397 = vmatprep.subr.mxu0 %v2035
  %2398 = vmatpush1.msra.mxu0 %v2034
  %2399 = vmatprep.subr.mxu0 0.0
  %2400 = vmatpush2.msra.mxu0 0.0
  %2401 = vmatprep.subr.mxu0 0.0
  %2402 = vmatpush2.msra.mxu0 0.0
  %2403 = vmatprep.subr.mxu0 0.0
  %2404 = vmatpush2.msra.mxu0 0.0
  %2405 = vmatprep.subr.mxu0 0.0
  %2406 = vmatpush2.msra.mxu0 0.0
  %2407 = vmatprep.subr.mxu0 0.0
  %2408 = vmatpush2.msra.mxu0 0.0
  %2409 = vmatprep.subr.mxu0 0.0
  %2410 = vmatpush2.msra.mxu0 0.0
  %2411 = vmatprep.subr.mxu0 0.0
  %2412 = vmatpush2.msra.mxu0 0.0
  %2413 = vmatprep.subr.mxu0 0.0
  %2414 = vmatpush2.msra.mxu0 0.0
  %2415 = vmatprep.subr.mxu0 0.0
  %2416 = vmatpush2.msra.mxu0 0.0
  %2417 = vmatprep.subr.mxu0 0.0
  %2418 = vmatpush2.msra.mxu0 0.0
  %2419 = vmatprep.subr.mxu0 0.0
  %2420 = vmatpush2.msra.mxu0 0.0
  %2421 = vmatprep.subr.mxu0 0.0
  %2422 = vmatpush2.msra.mxu0 0.0
  %2423 = vmatprep.subr.mxu0 0.0
  %2424 = vmatpush2.msra.mxu0 0.0
  %2425 = vmatprep.subr.mxu0 0.0
  %2426 = vmatpush2.msra.mxu0 0.0
  %2427 = vmatprep.subr.mxu0 0.0
  %2428 = vmatpush2.msra.mxu0 0.0
  %2429 = vmatprep.subr.mxu0 %v2147
  %2430 = vmatpush2.msra.mxu0 %v2146
  %2431 = vmatprep.mubr.f32.mxu0 %v2152
  %2432 = vmatmul.mubr.f32.gmra.mxu0 %v1610
  %v2433 = vpop.f32.mrf.mxu0
  %v2434 = vadd.f32 %v2363, %v2433
  %v2435 = vpop.f32.mrf.mxu0
  %v2436 = vadd.f32 %v2365, %v2435
  %2437 = vdwg.mxu0
  %2438 = vmatprep.subr.mxu0 %v1918
  %2439 = vmatpush1.msra.mxu0 %v1917
  %2440 = vmatprep.subr.mxu0 %v1911
  %2441 = vmatpush1.msra.mxu0 %v1910
  %2442 = vmatprep.subr.mxu0 %v1904
  %2443 = vmatpush1.msra.mxu0 %v1903
  %2444 = vmatprep.subr.mxu0 %v1897
  %2445 = vmatpush1.msra.mxu0 %v1896
  %2446 = vmatprep.subr.mxu0 %v1890
  %2447 = vmatpush1.msra.mxu0 %v1889
  %2448 = vmatprep.subr.mxu0 %v1883
  %2449 = vmatpush1.msra.mxu0 %v1882
  %2450 = vmatprep.subr.mxu0 %v1876
  %2451 = vmatpush1.msra.mxu0 %v1875
  %2452 = vmatprep.subr.mxu0 %v1869
  %2453 = vmatpush1.msra.mxu0 %v1868
  %2454 = vmatprep.subr.mxu0 %v1862
  %2455 = vmatpush1.msra.mxu0 %v1861
  %2456 = vmatprep.subr.mxu0 %v1855
  %2457 = vmatpush1.msra.mxu0 %v1854
  %2458 = vmatprep.subr.mxu0 %v1848
  %2459 = vmatpush1.msra.mxu0 %v1847
  %2460 = vmatprep.subr.mxu0 %v1841
  %2461 = vmatpush1.msra.mxu0 %v1840
  %2462 = vmatprep.subr.mxu0 %v1834
  %2463 = vmatpush1.msra.mxu0 %v1833
  %2464 = vmatprep.subr.mxu0 %v1827
  %2465 = vmatpush1.msra.mxu0 %v1826
  %2466 = vmatprep.subr.mxu0 %v1820
  %2467 = vmatpush1.msra.mxu0 %v1819
  %2468 = vmatprep.subr.mxu0 %v1813
  %2469 = vmatpush1.msra.mxu0 %v1812
  %2470 = vmatprep.subr.mxu0 %v2030
  %2471 = vmatpush2.msra.mxu0 %v2029
  %2472 = vmatprep.subr.mxu0 %v2023
  %2473 = vmatpush2.msra.mxu0 %v2022
  %2474 = vmatprep.subr.mxu0 %v2016
  %2475 = vmatpush2.msra.mxu0 %v2015
  %2476 = vmatprep.subr.mxu0 %v2009
  %2477 = vmatpush2.msra.mxu0 %v2008
  %2478 = vmatprep.subr.mxu0 %v2002
  %2479 = vmatpush2.msra.mxu0 %v2001
  %2480 = vmatprep.subr.mxu0 %v1995
  %2481 = vmatpush2.msra.mxu0 %v1994
  %2482 = vmatprep.subr.mxu0 %v1988
  %2483 = vmatpush2.msra.mxu0 %v1987
  %2484 = vmatprep.subr.mxu0 %v1981
  %2485 = vmatpush2.msra.mxu0 %v1980
  %2486 = vmatprep.subr.mxu0 %v1974
  %2487 = vmatpush2.msra.mxu0 %v1973
  %2488 = vmatprep.subr.mxu0 %v1967
  %2489 = vmatpush2.msra.mxu0 %v1966
  %2490 = vmatprep.subr.mxu0 %v1960
  %2491 = vmatpush2.msra.mxu0 %v1959
  %2492 = vmatprep.subr.mxu0 %v1953
  %2493 = vmatpush2.msra.mxu0 %v1952
  %2494 = vmatprep.subr.mxu0 %v1946
  %2495 = vmatpush2.msra.mxu0 %v1945
  %2496 = vmatprep.subr.mxu0 %v1939
  %2497 = vmatpush2.msra.mxu0 %v1938
  %2498 = vmatprep.subr.mxu0 %v1932
  %2499 = vmatpush2.msra.mxu0 %v1931
  %2500 = vmatprep.subr.mxu0 %v1925
  %2501 = vmatpush2.msra.mxu0 %v1924
  %2502 = vmatprep.mubr.f32.mxu0 %v1609
  %2503 = vmatmul.mubr.f32.gmra.mxu0 %v1608
  %v2504 = vpop.f32.mrf.mxu0
  %v2505 = vadd.f32 0.0, %v2504
  %v2506 = vpop.f32.mrf.mxu0
  %v2507 = vadd.f32 0.0, %v2506
  %2508 = vdwg.mxu0
  %2509 = vmatprep.subr.mxu0 %v2142
  %2510 = vmatpush1.msra.mxu0 %v2141
  %2511 = vmatprep.subr.mxu0 %v2135
  %2512 = vmatpush1.msra.mxu0 %v2134
  %2513 = vmatprep.subr.mxu0 %v2128
  %2514 = vmatpush1.msra.mxu0 %v2127
  %2515 = vmatprep.subr.mxu0 %v2121
  %2516 = vmatpush1.msra.mxu0 %v2120
  %2517 = vmatprep.subr.mxu0 %v2114
  %2518 = vmatpush1.msra.mxu0 %v2113
  %2519 = vmatprep.subr.mxu0 %v2107
  %2520 = vmatpush1.msra.mxu0 %v2106
  %2521 = vmatprep.subr.mxu0 %v2100
  %2522 = vmatpush1.msra.mxu0 %v2099
  %2523 = vmatprep.subr.mxu0 %v2093
  %2524 = vmatpush1.msra.mxu0 %v2092
  %2525 = vmatprep.subr.mxu0 %v2086
  %2526 = vmatpush1.msra.mxu0 %v2085
  %2527 = vmatprep.subr.mxu0 %v2079
  %2528 = vmatpush1.msra.mxu0 %v2078
  %2529 = vmatprep.subr.mxu0 %v2072
  %2530 = vmatpush1.msra.mxu0 %v2071
  %2531 = vmatprep.subr.mxu0 %v2065
  %2532 = vmatpush1.msra.mxu0 %v2064
  %2533 = vmatprep.subr.mxu0 %v2058
  %2534 = vmatpush1.msra.mxu0 %v2057
  %2535 = vmatprep.subr.mxu0 %v2051
  %2536 = vmatpush1.msra.mxu0 %v2050
  %2537 = vmatprep.subr.mxu0 %v2044
  %2538 = vmatpush1.msra.mxu0 %v2043
  %2539 = vmatprep.subr.mxu0 %v2037
  %2540 = vmatpush1.msra.mxu0 %v2036
  %2541 = vmatprep.subr.mxu0 0.0
  %2542 = vmatpush2.msra.mxu0 0.0
  %2543 = vmatprep.subr.mxu0 0.0
  %2544 = vmatpush2.msra.mxu0 0.0
  %2545 = vmatprep.subr.mxu0 0.0
  %2546 = vmatpush2.msra.mxu0 0.0
  %2547 = vmatprep.subr.mxu0 0.0
  %2548 = vmatpush2.msra.mxu0 0.0
  %2549 = vmatprep.subr.mxu0 0.0
  %2550 = vmatpush2.msra.mxu0 0.0
  %2551 = vmatprep.subr.mxu0 0.0
  %2552 = vmatpush2.msra.mxu0 0.0
  %2553 = vmatprep.subr.mxu0 0.0
  %2554 = vmatpush2.msra.mxu0 0.0
  %2555 = vmatprep.subr.mxu0 0.0
  %2556 = vmatpush2.msra.mxu0 0.0
  %2557 = vmatprep.subr.mxu0 0.0
  %2558 = vmatpush2.msra.mxu0 0.0
  %2559 = vmatprep.subr.mxu0 0.0
  %2560 = vmatpush2.msra.mxu0 0.0
  %2561 = vmatprep.subr.mxu0 0.0
  %2562 = vmatpush2.msra.mxu0 0.0
  %2563 = vmatprep.subr.mxu0 0.0
  %2564 = vmatpush2.msra.mxu0 0.0
  %2565 = vmatprep.subr.mxu0 0.0
  %2566 = vmatpush2.msra.mxu0 0.0
  %2567 = vmatprep.subr.mxu0 0.0
  %2568 = vmatpush2.msra.mxu0 0.0
  %2569 = vmatprep.subr.mxu0 0.0
  %2570 = vmatpush2.msra.mxu0 0.0
  %2571 = vmatprep.subr.mxu0 %v2149
  %2572 = vmatpush2.msra.mxu0 %v2148
  %2573 = vmatprep.mubr.f32.mxu0 %v2152
  %2574 = vmatmul.mubr.f32.gmra.mxu0 %v1610
  %v2575 = vpop.f32.mrf.mxu0
  %v2576 = vadd.f32 %v2505, %v2575
  %v2577 = vpop.f32.mrf.mxu0
  %v2578 = vadd.f32 %v2507, %v2577
  %2579 = vdwg.mxu0
  %2580 = vmatprep.subr.mxu0 0.0
  %2581 = vmatpush1.msra.mxu0 %v1919
  %2582 = vmatprep.subr.mxu0 0.0
  %2583 = vmatpush1.msra.mxu0 %v1912
  %2584 = vmatprep.subr.mxu0 0.0
  %2585 = vmatpush1.msra.mxu0 %v1905
  %2586 = vmatprep.subr.mxu0 0.0
  %2587 = vmatpush1.msra.mxu0 %v1898
  %2588 = vmatprep.subr.mxu0 0.0
  %2589 = vmatpush1.msra.mxu0 %v1891
  %2590 = vmatprep.subr.mxu0 0.0
  %2591 = vmatpush1.msra.mxu0 %v1884
  %2592 = vmatprep.subr.mxu0 0.0
  %2593 = vmatpush1.msra.mxu0 %v1877
  %2594 = vmatprep.subr.mxu0 0.0
  %2595 = vmatpush1.msra.mxu0 %v1870
  %2596 = vmatprep.subr.mxu0 0.0
  %2597 = vmatpush1.msra.mxu0 %v1863
  %2598 = vmatprep.subr.mxu0 0.0
  %2599 = vmatpush1.msra.mxu0 %v1856
  %2600 = vmatprep.subr.mxu0 0.0
  %2601 = vmatpush1.msra.mxu0 %v1849
  %2602 = vmatprep.subr.mxu0 0.0
  %2603 = vmatpush1.msra.mxu0 %v1842
  %2604 = vmatprep.subr.mxu0 0.0
  %2605 = vmatpush1.msra.mxu0 %v1835
  %2606 = vmatprep.subr.mxu0 0.0
  %2607 = vmatpush1.msra.mxu0 %v1828
  %2608 = vmatprep.subr.mxu0 0.0
  %2609 = vmatpush1.msra.mxu0 %v1821
  %2610 = vmatprep.subr.mxu0 0.0
  %2611 = vmatpush1.msra.mxu0 %v1814
  %2612 = vmatprep.subr.mxu0 0.0
  %2613 = vmatpush2.msra.mxu0 %v2031
  %2614 = vmatprep.subr.mxu0 0.0
  %2615 = vmatpush2.msra.mxu0 %v2024
  %2616 = vmatprep.subr.mxu0 0.0
  %2617 = vmatpush2.msra.mxu0 %v2017
  %2618 = vmatprep.subr.mxu0 0.0
  %2619 = vmatpush2.msra.mxu0 %v2010
  %2620 = vmatprep.subr.mxu0 0.0
  %2621 = vmatpush2.msra.mxu0 %v2003
  %2622 = vmatprep.subr.mxu0 0.0
  %2623 = vmatpush2.msra.mxu0 %v1996
  %2624 = vmatprep.subr.mxu0 0.0
  %2625 = vmatpush2.msra.mxu0 %v1989
  %2626 = vmatprep.subr.mxu0 0.0
  %2627 = vmatpush2.msra.mxu0 %v1982
  %2628 = vmatprep.subr.mxu0 0.0
  %2629 = vmatpush2.msra.mxu0 %v1975
  %2630 = vmatprep.subr.mxu0 0.0
  %2631 = vmatpush2.msra.mxu0 %v1968
  %2632 = vmatprep.subr.mxu0 0.0
  %2633 = vmatpush2.msra.mxu0 %v1961
  %2634 = vmatprep.subr.mxu0 0.0
  %2635 = vmatpush2.msra.mxu0 %v1954
  %2636 = vmatprep.subr.mxu0 0.0
  %2637 = vmatpush2.msra.mxu0 %v1947
  %2638 = vmatprep.subr.mxu0 0.0
  %2639 = vmatpush2.msra.mxu0 %v1940
  %2640 = vmatprep.subr.mxu0 0.0
  %2641 = vmatpush2.msra.mxu0 %v1933
  %2642 = vmatprep.subr.mxu0 0.0
  %2643 = vmatpush2.msra.mxu0 %v1926
  %2644 = vmatprep.mubr.f32.mxu0 %v1609
  %2645 = vmatmul.mubr.f32.gmra.mxu0 %v1608
  %v2646 = vpop.f32.mrf.mxu0
  %v2647 = vadd.f32 0.0, %v2646
  %v2648 = vpop.f32.mrf.mxu0
  %2649 = vdwg.mxu0
  %2650 = vmatprep.subr.mxu0 0.0
  %2651 = vmatpush1.msra.mxu0 %v2143
  %2652 = vmatprep.subr.mxu0 0.0
  %2653 = vmatpush1.msra.mxu0 %v2136
  %2654 = vmatprep.subr.mxu0 0.0
  %2655 = vmatpush1.msra.mxu0 %v2129
  %2656 = vmatprep.subr.mxu0 0.0
  %2657 = vmatpush1.msra.mxu0 %v2122
  %2658 = vmatprep.subr.mxu0 0.0
  %2659 = vmatpush1.msra.mxu0 %v2115
  %2660 = vmatprep.subr.mxu0 0.0
  %2661 = vmatpush1.msra.mxu0 %v2108
  %2662 = vmatprep.subr.mxu0 0.0
  %2663 = vmatpush1.msra.mxu0 %v2101
  %2664 = vmatprep.subr.mxu0 0.0
  %2665 = vmatpush1.msra.mxu0 %v2094
  %2666 = vmatprep.subr.mxu0 0.0
  %2667 = vmatpush1.msra.mxu0 %v2087
  %2668 = vmatprep.subr.mxu0 0.0
  %2669 = vmatpush1.msra.mxu0 %v2080
  %2670 = vmatprep.subr.mxu0 0.0
  %2671 = vmatpush1.msra.mxu0 %v2073
  %2672 = vmatprep.subr.mxu0 0.0
  %2673 = vmatpush1.msra.mxu0 %v2066
  %2674 = vmatprep.subr.mxu0 0.0
  %2675 = vmatpush1.msra.mxu0 %v2059
  %2676 = vmatprep.subr.mxu0 0.0
  %2677 = vmatpush1.msra.mxu0 %v2052
  %2678 = vmatprep.subr.mxu0 0.0
  %2679 = vmatpush1.msra.mxu0 %v2045
  %2680 = vmatprep.subr.mxu0 0.0
  %2681 = vmatpush1.msra.mxu0 %v2038
  %2682 = vmatprep.subr.mxu0 0.0
  %2683 = vmatpush2.msra.mxu0 0.0
  %2684 = vmatprep.subr.mxu0 0.0
  %2685 = vmatpush2.msra.mxu0 0.0
  %2686 = vmatprep.subr.mxu0 0.0
  %2687 = vmatpush2.msra.mxu0 0.0
  %2688 = vmatprep.subr.mxu0 0.0
  %2689 = vmatpush2.msra.mxu0 0.0
  %2690 = vmatprep.subr.mxu0 0.0
  %2691 = vmatpush2.msra.mxu0 0.0
  %2692 = vmatprep.subr.mxu0 0.0
  %2693 = vmatpush2.msra.mxu0 0.0
  %2694 = vmatprep.subr.mxu0 0.0
  %2695 = vmatpush2.msra.mxu0 0.0
  %2696 = vmatprep.subr.mxu0 0.0
  %2697 = vmatpush2.msra.mxu0 0.0
  %2698 = vmatprep.subr.mxu0 0.0
  %2699 = vmatpush2.msra.mxu0 0.0
  %2700 = vmatprep.subr.mxu0 0.0
  %2701 = vmatpush2.msra.mxu0 0.0
  %2702 = vmatprep.subr.mxu0 0.0
  %2703 = vmatpush2.msra.mxu0 0.0
  %2704 = vmatprep.subr.mxu0 0.0
  %2705 = vmatpush2.msra.mxu0 0.0
  %2706 = vmatprep.subr.mxu0 0.0
  %2707 = vmatpush2.msra.mxu0 0.0
  %2708 = vmatprep.subr.mxu0 0.0
  %2709 = vmatpush2.msra.mxu0 0.0
  %2710 = vmatprep.subr.mxu0 0.0
  %2711 = vmatpush2.msra.mxu0 0.0
  %2712 = vmatprep.subr.mxu0 0.0
  %2713 = vmatpush2.msra.mxu0 %v2150
  %2714 = vmatprep.mubr.f32.mxu0 %v2152
  %2715 = vmatmul.mubr.f32.gmra.mxu0 %v1610
  %v2716 = vpop.f32.mrf.mxu0
  %v2717 = vadd.f32 %v2647, %v2716
  %v2718 = vpop.f32.mrf.mxu0
  %2719 = vdwg.mxu0
  %v2720 = vld [vmem:[%s8] sm:$0xff]
  %v2721 = vld [vmem:[%s8 + $0x8] sm:$0xff]
  %v2722 = vld [vmem:[%s8 + $0x10] sm:$0xff]
  %v2723 = vld [vmem:[%s8 + $0x18] sm:$0xff]
  %v2724 = vld [vmem:[%s8 + $0x20] sm:$0xff]
  %v2725 = vld [vmem:[%s8 + $0x28] sm:$0xff]
  %v2726 = vld [vmem:[%s8 + $0x30] sm:$0xff]
  %v2727 = vld [vmem:[%s8 + $0x38] sm:$0xff]
  %v2728 = vld [vmem:[%s8 + $0x40] sm:$0xff]
  %v2729 = vld [vmem:[%s8 + $0x48] sm:$0xff]
  %v2730 = vld [vmem:[%s8 + $0x50] sm:$0xff]
  %v2731 = vld [vmem:[%s8 + $0x58] sm:$0xff]
  %v2732 = vld [vmem:[%s8 + $0x60] sm:$0xff]
  %v2733 = vld [vmem:[%s8 + $0x68] sm:$0xff]
  %v2734 = vld [vmem:[%s8 + $0x70] sm:$0xff]
  %v2735 = vld [vmem:[%s8 + $0x78] sm:$0xff]
  %v2736 = vld [vmem:[%s8 + $0x80] sm:$0xff]
  %v2737 = vld [vmem:[%s8 + $0x88] sm:$0xff]
  %v2738 = vld [vmem:[%s8 + $0x90] sm:$0xff]
  %v2739 = vld [vmem:[%s8 + $0x98] sm:$0xff]
  %v2740 = vld [vmem:[%s8 + $0xa0] sm:$0xff]
  %v2741 = vld [vmem:[%s8 + $0xa8] sm:$0xff]
  %v2742 = vld [vmem:[%s8 + $0xb0] sm:$0xff]
  %v2743 = vld [vmem:[%s8 + $0xb8] sm:$0xff]
  %v2744 = vld [vmem:[%s8 + $0xc0] sm:$0xff]
  %v2745 = vld [vmem:[%s8 + $0xc8] sm:$0xff]
  %v2746 = vld [vmem:[%s8 + $0xd0] sm:$0xff]
  %v2747 = vld [vmem:[%s8 + $0xd8] sm:$0xff]
  %v2748 = vld [vmem:[%s8 + $0xe0] sm:$0xff]
  %v2749 = vld [vmem:[%s8 + $0xe8] sm:$0xff]
  %v2750 = vld [vmem:[%s8 + $0xf0] sm:$0xff]
  %v2751 = vld [vmem:[%s8 + $0xf8] sm:$0xff]
  %v2752 = vld [vmem:[%s8 + $0x100] sm:$0xff]
  %v2753 = vld [vmem:[%s8 + $0x108] sm:$0xff]
  %v2754 = vld [vmem:[%s8 + $0x110] sm:$0xff]
  %v2755 = vld [vmem:[%s8 + $0x118] sm:$0xff]
  %v2756 = vld [vmem:[%s8 + $0x120] sm:$0xff]
  %v2757 = vld [vmem:[%s8 + $0x128] sm:$0xff]
  %v2758 = vld [vmem:[%s8 + $0x130] sm:$0xff]
  %v2759 = vld [vmem:[%s8 + $0x138] sm:$0xff]
  %v2760 = vld [vmem:[%s8 + $0x140] sm:$0xff]
  %v2761 = vld [vmem:[%s8 + $0x148] sm:$0xff]
  %v2762 = vld [vmem:[%s8 + $0x150] sm:$0xff]
  %v2763 = vld [vmem:[%s8 + $0x158] sm:$0xff]
  %v2764 = vld [vmem:[%s8 + $0x160] sm:$0xff]
  %v2765 = vld [vmem:[%s8 + $0x168] sm:$0xff]
  %v2766 = vld [vmem:[%s8 + $0x170] sm:$0xff]
  %v2767 = vld [vmem:[%s8 + $0x178] sm:$0xff]
  %v2768 = vld [vmem:[%s8 + $0x180] sm:$0xff]
  %v2769 = vld [vmem:[%s8 + $0x188] sm:$0xff]
  %v2770 = vld [vmem:[%s8 + $0x190] sm:$0xff]
  %v2771 = vld [vmem:[%s8 + $0x198] sm:$0xff]
  %v2772 = vld [vmem:[%s8 + $0x1a0] sm:$0xff]
  %v2773 = vld [vmem:[%s8 + $0x1a8] sm:$0xff]
  %v2774 = vld [vmem:[%s8 + $0x1b0] sm:$0xff]
  %v2775 = vld [vmem:[%s8 + $0x1b8] sm:$0xff]
  %v2776 = vld [vmem:[%s8 + $0x1c0] sm:$0xff]
  %v2777 = vld [vmem:[%s8 + $0x1c8] sm:$0xff]
  %v2778 = vld [vmem:[%s8 + $0x1d0] sm:$0xff]
  %v2779 = vld [vmem:[%s8 + $0x1d8] sm:$0xff]
  %v2780 = vld [vmem:[%s8 + $0x1e0] sm:$0xff]
  %v2781 = vld [vmem:[%s8 + $0x1e8] sm:$0xff]
  %v2782 = vld [vmem:[%s8 + $0x1f0] sm:$0xff]
  %v2783 = vld [vmem:[%s8 + $0x1f8] sm:$0xff]
  %v2784 = vld [vmem:[%s8 + $0x200] sm:$0xff]
  %v2785 = vld [vmem:[%s8 + $0x208] sm:$0xff]
  %v2786 = vld [vmem:[%s8 + $0x210] sm:$0xff]
  %v2787 = vld [vmem:[%s8 + $0x218] sm:$0xff]
  %v2788 = vld [vmem:[%s8 + $0x220] sm:$0xff]
  %v2789 = vld [vmem:[%s8 + $0x228] sm:$0xff]
  %v2790 = vld [vmem:[%s8 + $0x230] sm:$0xff]
  %v2791 = vld [vmem:[%s8 + $0x238] sm:$0xff]
  %v2792 = vld [vmem:[%s8 + $0x240] sm:$0xff]
  %v2793 = vld [vmem:[%s8 + $0x248] sm:$0xff]
  %v2794 = vld [vmem:[%s8 + $0x250] sm:$0xff]
  %v2795 = vld [vmem:[%s8 + $0x258] sm:$0xff]
  %v2796 = vld [vmem:[%s8 + $0x260] sm:$0xff]
  %v2797 = vld [vmem:[%s8 + $0x268] sm:$0xff]
  %v2798 = vld [vmem:[%s8 + $0x270] sm:$0xff]
  %v2799 = vld [vmem:[%s8 + $0x278] sm:$0xff]
  %v2800 = vld [vmem:[%s8 + $0x280] sm:$0xff]
  %v2801 = vld [vmem:[%s8 + $0x288] sm:$0xff]
  %v2802 = vld [vmem:[%s8 + $0x290] sm:$0xff]
  %v2803 = vld [vmem:[%s8 + $0x298] sm:$0xff]
  %v2804 = vld [vmem:[%s8 + $0x2a0] sm:$0xff]
  %v2805 = vld [vmem:[%s8 + $0x2a8] sm:$0xff]
  %v2806 = vld [vmem:[%s8 + $0x2b0] sm:$0xff]
  %v2807 = vld [vmem:[%s8 + $0x2b8] sm:$0xff]
  %v2808 = vld [vmem:[%s8 + $0x2c0] sm:$0xff]
  %v2809 = vld [vmem:[%s8 + $0x2c8] sm:$0xff]
  %v2810 = vld [vmem:[%s8 + $0x2d0] sm:$0xff]
  %v2811 = vld [vmem:[%s8 + $0x2d8] sm:$0xff]
  %v2812 = vld [vmem:[%s8 + $0x2e0] sm:$0xff]
  %v2813 = vld [vmem:[%s8 + $0x2e8] sm:$0xff]
  %v2814 = vld [vmem:[%s8 + $0x2f0] sm:$0xff]
  %v2815 = vld [vmem:[%s8 + $0x2f8] sm:$0xff]
  %v2816 = vld [vmem:[%s8 + $0x300] sm:$0xff]
  %v2817 = vld [vmem:[%s8 + $0x308] sm:$0xff]
  %v2818 = vld [vmem:[%s9] ss:$4 sm:$0x7f]
  %s2819 = scalar_lea.vmem %s9, 1
  %v2820 = vld [vmem:[%s2819] ss:$4 sm:$0x7f]
  %s2821 = scalar_lea.vmem %s9, 2
  %v2822 = vld [vmem:[%s2821] ss:$4 sm:$0x7f]
  %vm2823 = vcmask 130048
  %v2825 = vsel %vm2823, %v2717, 0
  %2827 = vmatprep.subr.mxu0 0.0
  %2828 = vmatpush1.msra.mxu0 %v2735
  %2829 = vmatprep.subr.mxu0 0.0
  %2830 = vmatpush1.msra.mxu0 %v2734
  %2831 = vmatprep.subr.mxu0 0.0
  %2832 = vmatpush1.msra.mxu0 %v2733
  %2833 = vmatprep.subr.mxu0 0.0
  %2834 = vmatpush1.msra.mxu0 %v2732
  %2835 = vmatprep.subr.mxu0 0.0
  %2836 = vmatpush1.msra.mxu0 %v2731
  %2837 = vmatprep.subr.mxu0 0.0
  %2838 = vmatpush1.msra.mxu0 %v2730
  %2839 = vmatprep.subr.mxu0 0.0
  %2840 = vmatpush1.msra.mxu0 %v2729
  %2841 = vmatprep.subr.mxu0 0.0
  %2842 = vmatpush1.msra.mxu0 %v2728
  %2843 = vmatprep.subr.mxu0 0.0
  %2844 = vmatpush1.msra.mxu0 %v2727
  %2845 = vmatprep.subr.mxu0 0.0
  %2846 = vmatpush1.msra.mxu0 %v2726
  %2847 = vmatprep.subr.mxu0 0.0
  %2848 = vmatpush1.msra.mxu0 %v2725
  %2849 = vmatprep.subr.mxu0 0.0
  %2850 = vmatpush1.msra.mxu0 %v2724
  %2851 = vmatprep.subr.mxu0 0.0
  %2852 = vmatpush1.msra.mxu0 %v2723
  %2853 = vmatprep.subr.mxu0 0.0
  %2854 = vmatpush1.msra.mxu0 %v2722
  %2855 = vmatprep.subr.mxu0 0.0
  %2856 = vmatpush1.msra.mxu0 %v2721
  %2857 = vmatprep.subr.mxu0 0.0
  %2858 = vmatpush1.msra.mxu0 %v2720
  %2859 = vmatprep.subr.mxu0 0.0
  %2860 = vmatpush2.msra.mxu0 %v2751
  %2861 = vmatprep.subr.mxu0 0.0
  %2862 = vmatpush2.msra.mxu0 %v2750
  %2863 = vmatprep.subr.mxu0 0.0
  %2864 = vmatpush2.msra.mxu0 %v2749
  %2865 = vmatprep.subr.mxu0 0.0
  %2866 = vmatpush2.msra.mxu0 %v2748
  %2867 = vmatprep.subr.mxu0 0.0
  %2868 = vmatpush2.msra.mxu0 %v2747
  %2869 = vmatprep.subr.mxu0 0.0
  %2870 = vmatpush2.msra.mxu0 %v2746
  %2871 = vmatprep.subr.mxu0 0.0
  %2872 = vmatpush2.msra.mxu0 %v2745
  %2873 = vmatprep.subr.mxu0 0.0
  %2874 = vmatpush2.msra.mxu0 %v2744
  %2875 = vmatprep.subr.mxu0 0.0
  %2876 = vmatpush2.msra.mxu0 %v2743
  %2877 = vmatprep.subr.mxu0 0.0
  %2878 = vmatpush2.msra.mxu0 %v2742
  %2879 = vmatprep.subr.mxu0 0.0
  %2880 = vmatpush2.msra.mxu0 %v2741
  %2881 = vmatprep.subr.mxu0 0.0
  %2882 = vmatpush2.msra.mxu0 %v2740
  %2883 = vmatprep.subr.mxu0 0.0
  %2884 = vmatpush2.msra.mxu0 %v2739
  %2885 = vmatprep.subr.mxu0 0.0
  %2886 = vmatpush2.msra.mxu0 %v2738
  %2887 = vmatprep.subr.mxu0 0.0
  %2888 = vmatpush2.msra.mxu0 %v2737
  %2889 = vmatprep.subr.mxu0 0.0
  %2890 = vmatpush2.msra.mxu0 %v2736
  %2891 = vmatprep.mubr.f32.mxu0 %v2294
  %2892 = vmatmul.mubr.f32.gmra.mxu0 %v2292
  %v2893 = vpop.f32.mrf.mxu0
  %v2894 = vadd.f32 0.0, %v2893
  %v2895 = vpop.f32.mrf.mxu0
  %2896 = vdwg.mxu0
  %2897 = vmatprep.subr.mxu0 0.0
  %2898 = vmatpush1.msra.mxu0 %v2767
  %2899 = vmatprep.subr.mxu0 0.0
  %2900 = vmatpush1.msra.mxu0 %v2766
  %2901 = vmatprep.subr.mxu0 0.0
  %2902 = vmatpush1.msra.mxu0 %v2765
  %2903 = vmatprep.subr.mxu0 0.0
  %2904 = vmatpush1.msra.mxu0 %v2764
  %2905 = vmatprep.subr.mxu0 0.0
  %2906 = vmatpush1.msra.mxu0 %v2763
  %2907 = vmatprep.subr.mxu0 0.0
  %2908 = vmatpush1.msra.mxu0 %v2762
  %2909 = vmatprep.subr.mxu0 0.0
  %2910 = vmatpush1.msra.mxu0 %v2761
  %2911 = vmatprep.subr.mxu0 0.0
  %2912 = vmatpush1.msra.mxu0 %v2760
  %2913 = vmatprep.subr.mxu0 0.0
  %2914 = vmatpush1.msra.mxu0 %v2759
  %2915 = vmatprep.subr.mxu0 0.0
  %2916 = vmatpush1.msra.mxu0 %v2758
  %2917 = vmatprep.subr.mxu0 0.0
  %2918 = vmatpush1.msra.mxu0 %v2757
  %2919 = vmatprep.subr.mxu0 0.0
  %2920 = vmatpush1.msra.mxu0 %v2756
  %2921 = vmatprep.subr.mxu0 0.0
  %2922 = vmatpush1.msra.mxu0 %v2755
  %2923 = vmatprep.subr.mxu0 0.0
  %2924 = vmatpush1.msra.mxu0 %v2754
  %2925 = vmatprep.subr.mxu0 0.0
  %2926 = vmatpush1.msra.mxu0 %v2753
  %2927 = vmatprep.subr.mxu0 0.0
  %2928 = vmatpush1.msra.mxu0 %v2752
  %2929 = vmatprep.subr.mxu0 0.0
  %2930 = vmatpush2.msra.mxu0 %v2783
  %2931 = vmatprep.subr.mxu0 0.0
  %2932 = vmatpush2.msra.mxu0 %v2782
  %2933 = vmatprep.subr.mxu0 0.0
  %2934 = vmatpush2.msra.mxu0 %v2781
  %2935 = vmatprep.subr.mxu0 0.0
  %2936 = vmatpush2.msra.mxu0 %v2780
  %2937 = vmatprep.subr.mxu0 0.0
  %2938 = vmatpush2.msra.mxu0 %v2779
  %2939 = vmatprep.subr.mxu0 0.0
  %2940 = vmatpush2.msra.mxu0 %v2778
  %2941 = vmatprep.subr.mxu0 0.0
  %2942 = vmatpush2.msra.mxu0 %v2777
  %2943 = vmatprep.subr.mxu0 0.0
  %2944 = vmatpush2.msra.mxu0 %v2776
  %2945 = vmatprep.subr.mxu0 0.0
  %2946 = vmatpush2.msra.mxu0 %v2775
  %2947 = vmatprep.subr.mxu0 0.0
  %2948 = vmatpush2.msra.mxu0 %v2774
  %2949 = vmatprep.subr.mxu0 0.0
  %2950 = vmatpush2.msra.mxu0 %v2773
  %2951 = vmatprep.subr.mxu0 0.0
  %2952 = vmatpush2.msra.mxu0 %v2772
  %2953 = vmatprep.subr.mxu0 0.0
  %2954 = vmatpush2.msra.mxu0 %v2771
  %2955 = vmatprep.subr.mxu0 0.0
  %2956 = vmatpush2.msra.mxu0 %v2770
  %2957 = vmatprep.subr.mxu0 0.0
  %2958 = vmatpush2.msra.mxu0 %v2769
  %2959 = vmatprep.subr.mxu0 0.0
  %2960 = vmatpush2.msra.mxu0 %v2768
  %2961 = vmatprep.mubr.f32.mxu0 %v2436
  %2962 = vmatmul.mubr.f32.gmra.mxu0 %v2434
  %v2963 = vpop.f32.mrf.mxu0
  %v2964 = vadd.f32 %v2894, %v2963
  %v2965 = vpop.f32.mrf.mxu0
  %2966 = vdwg.mxu0
  %2967 = vmatprep.subr.mxu0 0.0
  %2968 = vmatpush1.msra.mxu0 %v2799
  %2969 = vmatprep.subr.mxu0 0.0
  %2970 = vmatpush1.msra.mxu0 %v2798
  %2971 = vmatprep.subr.mxu0 0.0
  %2972 = vmatpush1.msra.mxu0 %v2797
  %2973 = vmatprep.subr.mxu0 0.0
  %2974 = vmatpush1.msra.mxu0 %v2796
  %2975 = vmatprep.subr.mxu0 0.0
  %2976 = vmatpush1.msra.mxu0 %v2795
  %2977 = vmatprep.subr.mxu0 0.0
  %2978 = vmatpush1.msra.mxu0 %v2794
  %2979 = vmatprep.subr.mxu0 0.0
  %2980 = vmatpush1.msra.mxu0 %v2793
  %2981 = vmatprep.subr.mxu0 0.0
  %2982 = vmatpush1.msra.mxu0 %v2792
  %2983 = vmatprep.subr.mxu0 0.0
  %2984 = vmatpush1.msra.mxu0 %v2791
  %2985 = vmatprep.subr.mxu0 0.0
  %2986 = vmatpush1.msra.mxu0 %v2790
  %2987 = vmatprep.subr.mxu0 0.0
  %2988 = vmatpush1.msra.mxu0 %v2789
  %2989 = vmatprep.subr.mxu0 0.0
  %2990 = vmatpush1.msra.mxu0 %v2788
  %2991 = vmatprep.subr.mxu0 0.0
  %2992 = vmatpush1.msra.mxu0 %v2787
  %2993 = vmatprep.subr.mxu0 0.0
  %2994 = vmatpush1.msra.mxu0 %v2786
  %2995 = vmatprep.subr.mxu0 0.0
  %2996 = vmatpush1.msra.mxu0 %v2785
  %2997 = vmatprep.subr.mxu0 0.0
  %2998 = vmatpush1.msra.mxu0 %v2784
  %2999 = vmatprep.subr.mxu0 0.0
  %3000 = vmatpush2.msra.mxu0 %v2815
  %3001 = vmatprep.subr.mxu0 0.0
  %3002 = vmatpush2.msra.mxu0 %v2814
  %3003 = vmatprep.subr.mxu0 0.0
  %3004 = vmatpush2.msra.mxu0 %v2813
  %3005 = vmatprep.subr.mxu0 0.0
  %3006 = vmatpush2.msra.mxu0 %v2812
  %3007 = vmatprep.subr.mxu0 0.0
  %3008 = vmatpush2.msra.mxu0 %v2811
  %3009 = vmatprep.subr.mxu0 0.0
  %3010 = vmatpush2.msra.mxu0 %v2810
  %3011 = vmatprep.subr.mxu0 0.0
  %3012 = vmatpush2.msra.mxu0 %v2809
  %3013 = vmatprep.subr.mxu0 0.0
  %3014 = vmatpush2.msra.mxu0 %v2808
  %3015 = vmatprep.subr.mxu0 0.0
  %3016 = vmatpush2.msra.mxu0 %v2807
  %3017 = vmatprep.subr.mxu0 0.0
  %3018 = vmatpush2.msra.mxu0 %v2806
  %3019 = vmatprep.subr.mxu0 0.0
  %3020 = vmatpush2.msra.mxu0 %v2805
  %3021 = vmatprep.subr.mxu0 0.0
  %3022 = vmatpush2.msra.mxu0 %v2804
  %3023 = vmatprep.subr.mxu0 0.0
  %3024 = vmatpush2.msra.mxu0 %v2803
  %3025 = vmatprep.subr.mxu0 0.0
  %3026 = vmatpush2.msra.mxu0 %v2802
  %3027 = vmatprep.subr.mxu0 0.0
  %3028 = vmatpush2.msra.mxu0 %v2801
  %3029 = vmatprep.subr.mxu0 0.0
  %3030 = vmatpush2.msra.mxu0 %v2800
  %3031 = vmatprep.mubr.f32.mxu0 %v2578
  %3032 = vmatmul.mubr.f32.gmra.mxu0 %v2576
  %v3033 = vpop.f32.mrf.mxu0
  %v3034 = vadd.f32 %v2964, %v3033
  %v3035 = vpop.f32.mrf.mxu0
  %3036 = vdwg.mxu0
  %3037 = vmatprep.subr.mxu0 0.0
  %3038 = vmatpush1.msra.mxu0 0.0
  %3039 = vmatprep.subr.mxu0 0.0
  %3040 = vmatpush1.msra.mxu0 0.0
  %3041 = vmatprep.subr.mxu0 0.0
  %3042 = vmatpush1.msra.mxu0 0.0
  %3043 = vmatprep.subr.mxu0 0.0
  %3044 = vmatpush1.msra.mxu0 0.0
  %3045 = vmatprep.subr.mxu0 0.0
  %3046 = vmatpush1.msra.mxu0 0.0
  %3047 = vmatprep.subr.mxu0 0.0
  %3048 = vmatpush1.msra.mxu0 0.0
  %3049 = vmatprep.subr.mxu0 0.0
  %3050 = vmatpush1.msra.mxu0 0.0
  %3051 = vmatprep.subr.mxu0 0.0
  %3052 = vmatpush1.msra.mxu0 0.0
  %3053 = vmatprep.subr.mxu0 0.0
  %3054 = vmatpush1.msra.mxu0 0.0
  %3055 = vmatprep.subr.mxu0 0.0
  %3056 = vmatpush1.msra.mxu0 0.0
  %3057 = vmatprep.subr.mxu0 0.0
  %3058 = vmatpush1.msra.mxu0 0.0
  %3059 = vmatprep.subr.mxu0 0.0
  %3060 = vmatpush1.msra.mxu0 0.0
  %3061 = vmatprep.subr.mxu0 0.0
  %3062 = vmatpush1.msra.mxu0 0.0
  %3063 = vmatprep.subr.mxu0 0.0
  %3064 = vmatpush1.msra.mxu0 0.0
  %3065 = vmatprep.subr.mxu0 0.0
  %3066 = vmatpush1.msra.mxu0 %v2817
  %3067 = vmatprep.subr.mxu0 0.0
  %3068 = vmatpush1.msra.mxu0 %v2816
  %3069 = vmatprep.subr.mxu0 0.0
  %3070 = vmatpush2.msra.mxu0 0.0
  %3071 = vmatprep.subr.mxu0 0.0
  %3072 = vmatpush2.msra.mxu0 0.0
  %3073 = vmatprep.subr.mxu0 0.0
  %3074 = vmatpush2.msra.mxu0 0.0
  %3075 = vmatprep.subr.mxu0 0.0
  %3076 = vmatpush2.msra.mxu0 0.0
  %3077 = vmatprep.subr.mxu0 0.0
  %3078 = vmatpush2.msra.mxu0 0.0
  %3079 = vmatprep.subr.mxu0 0.0
  %3080 = vmatpush2.msra.mxu0 0.0
  %3081 = vmatprep.subr.mxu0 0.0
  %3082 = vmatpush2.msra.mxu0 0.0
  %3083 = vmatprep.subr.mxu0 0.0
  %3084 = vmatpush2.msra.mxu0 0.0
  %3085 = vmatprep.subr.mxu0 0.0
  %3086 = vmatpush2.msra.mxu0 0.0
  %3087 = vmatprep.subr.mxu0 0.0
  %3088 = vmatpush2.msra.mxu0 0.0
  %3089 = vmatprep.subr.mxu0 0.0
  %3090 = vmatpush2.msra.mxu0 0.0
  %3091 = vmatprep.subr.mxu0 0.0
  %3092 = vmatpush2.msra.mxu0 0.0
  %3093 = vmatprep.subr.mxu0 0.0
  %3094 = vmatpush2.msra.mxu0 0.0
  %3095 = vmatprep.subr.mxu0 0.0
  %3096 = vmatpush2.msra.mxu0 0.0
  %3097 = vmatprep.subr.mxu0 0.0
  %3098 = vmatpush2.msra.mxu0 0.0
  %3099 = vmatprep.subr.mxu0 0.0
  %3100 = vmatpush2.msra.mxu0 0.0
  %3101 = vmatprep.mubr.f32.mxu0 0.0
  %3102 = vmatmul.mubr.f32.gmra.mxu0 %v2825
  %v3103 = vpop.f32.mrf.mxu0
  %v3104 = vadd.f32 %v3034, %v3103
  %v3105 = vpop.f32.mrf.mxu0
  %3106 = vdwg.mxu0
  %vm3107 = vcmask 1024
  %v3108 = vsel %vm3107, %v3104, 0.0
  %v3109 = vrot.slane %v3108, 4
  %v3110 = vadd.f32 %v3108, %v3109
  %v3111 = vrot.slane %v3110, 2
  %v3112 = vadd.f32 %v3110, %v3111
  %v3113 = vrot.slane %v3112, 1
  %v3114 = vadd.f32 %v3112, %v3113
  %v3115 = vmul.f32 %v3114, 0.0006377551
  %v3117 = vlaneseq
  %v3118 = vshrl.u32 %v3117, 7
  %v3119 = vsub.s32 0, %v3118
  %v3120 = vrot.slane %v2818, %v3119
  %v3121 = vlaneseq
  %v3122 = vshrl.u32 %v3121, 7
  %v3123 = vsub.s32 1, %v3122
  %v3124 = vrot.slane %v2818, %v3123
  %v3125 = vlaneseq
  %v3126 = vshrl.u32 %v3125, 7
  %v3127 = vsub.s32 2, %v3126
  %v3128 = vrot.slane %v2818, %v3127
  %v3129 = vlaneseq
  %v3130 = vshrl.u32 %v3129, 7
  %v3131 = vsub.s32 3, %v3130
  %v3132 = vrot.slane %v2818, %v3131
  %v3133 = vlaneseq
  %v3134 = vshrl.u32 %v3133, 7
  %v3135 = vsub.s32 4, %v3134
  %v3136 = vrot.slane %v2818, %v3135
  %v3137 = vlaneseq
  %v3138 = vshrl.u32 %v3137, 7
  %v3139 = vsub.s32 5, %v3138
  %v3140 = vrot.slane %v2818, %v3139
  %v3141 = vlaneseq
  %v3142 = vshrl.u32 %v3141, 7
  %v3143 = vsub.s32 6, %v3142
  %v3144 = vrot.slane %v2818, %v3143
  %vm3145 = vcmask 7168
  %v3147 = vsel %vm3145, %v3115, 0
  %v3149 = vsel %vm46, %v3120, 0
  %v3151 = vsel %vm46, %v3124, 0
  %v3153 = vsel %vm46, %v3128, 0
  %v3155 = vsel %vm46, %v3132, 0
  %v3157 = vsel %vm46, %v3136, 0
  %v3159 = vsel %vm46, %v3140, 0
  %v3161 = vsel %vm46, %v3144, 0
  %3163 = vmatprep.subr.mxu0 0.0
  %3164 = vmatpush1.msra.mxu0 0.0
  %3165 = vmatprep.subr.mxu0 0.0
  %3166 = vmatpush1.msra.mxu0 0.0
  %3167 = vmatprep.subr.mxu0 0.0
  %3168 = vmatpush1.msra.mxu0 0.0
  %3169 = vmatprep.subr.mxu0 0.0
  %3170 = vmatpush1.msra.mxu0 0.0
  %3171 = vmatprep.subr.mxu0 0.0
  %3172 = vmatpush1.msra.mxu0 0.0
  %3173 = vmatprep.subr.mxu0 0.0
  %3174 = vmatpush1.msra.mxu0 0.0
  %3175 = vmatprep.subr.mxu0 0.0
  %3176 = vmatpush1.msra.mxu0 0.0
  %3177 = vmatprep.subr.mxu0 0.0
  %3178 = vmatpush1.msra.mxu0 0.0
  %3179 = vmatprep.subr.mxu0 0.0
  %3180 = vmatpush1.msra.mxu0 0.0
  %3181 = vmatprep.subr.mxu0 0.0
  %3182 = vmatpush1.msra.mxu0 0.0
  %3183 = vmatprep.subr.mxu0 0.0
  %3184 = vmatpush1.msra.mxu0 0.0
  %3185 = vmatprep.subr.mxu0 0.0
  %3186 = vmatpush1.msra.mxu0 0.0
  %3187 = vmatprep.subr.mxu0 0.0
  %3188 = vmatpush1.msra.mxu0 0.0
  %3189 = vmatprep.subr.mxu0 0.0
  %3190 = vmatpush1.msra.mxu0 0.0
  %3191 = vmatprep.subr.mxu0 0.0
  %3192 = vmatpush1.msra.mxu0 0.0
  %3193 = vmatprep.subr.mxu0 %v3151
  %3194 = vmatpush1.msra.mxu0 %v3149
  %3195 = vmatprep.subr.mxu0 0.0
  %3196 = vmatpush2.msra.mxu0 0.0
  %3197 = vmatprep.subr.mxu0 0.0
  %3198 = vmatpush2.msra.mxu0 0.0
  %3199 = vmatprep.subr.mxu0 0.0
  %3200 = vmatpush2.msra.mxu0 0.0
  %3201 = vmatprep.subr.mxu0 0.0
  %3202 = vmatpush2.msra.mxu0 0.0
  %3203 = vmatprep.subr.mxu0 0.0
  %3204 = vmatpush2.msra.mxu0 0.0
  %3205 = vmatprep.subr.mxu0 0.0
  %3206 = vmatpush2.msra.mxu0 0.0
  %3207 = vmatprep.subr.mxu0 0.0
  %3208 = vmatpush2.msra.mxu0 0.0
  %3209 = vmatprep.subr.mxu0 0.0
  %3210 = vmatpush2.msra.mxu0 0.0
  %3211 = vmatprep.subr.mxu0 0.0
  %3212 = vmatpush2.msra.mxu0 0.0
  %3213 = vmatprep.subr.mxu0 0.0
  %3214 = vmatpush2.msra.mxu0 0.0
  %3215 = vmatprep.subr.mxu0 0.0
  %3216 = vmatpush2.msra.mxu0 0.0
  %3217 = vmatprep.subr.mxu0 0.0
  %3218 = vmatpush2.msra.mxu0 0.0
  %3219 = vmatprep.subr.mxu0 0.0
  %3220 = vmatpush2.msra.mxu0 0.0
  %3221 = vmatprep.subr.mxu0 0.0
  %3222 = vmatpush2.msra.mxu0 0.0
  %3223 = vmatprep.subr.mxu0 0.0
  %3224 = vmatpush2.msra.mxu0 0.0
  %3225 = vmatprep.subr.mxu0 0.0
  %3226 = vmatpush2.msra.mxu0 0.0
  %3227 = vmatprep.mubr.f32.mxu0 0.0
  %3228 = vmatmul.mubr.f32.gmra.mxu0 %v3147
  %v3229 = vpop.f32.mrf.mxu0
  %v3230 = vadd.f32 0.0, %v3229
  %v3231 = vpop.f32.mrf.mxu0
  %v3232 = vadd.f32 0.0, %v3231
  %3233 = vdwg.mxu0
  %3234 = vmatprep.subr.mxu0 0.0
  %3235 = vmatpush1.msra.mxu0 0.0
  %3236 = vmatprep.subr.mxu0 0.0
  %3237 = vmatpush1.msra.mxu0 0.0
  %3238 = vmatprep.subr.mxu0 0.0
  %3239 = vmatpush1.msra.mxu0 0.0
  %3240 = vmatprep.subr.mxu0 0.0
  %3241 = vmatpush1.msra.mxu0 0.0
  %3242 = vmatprep.subr.mxu0 0.0
  %3243 = vmatpush1.msra.mxu0 0.0
  %3244 = vmatprep.subr.mxu0 0.0
  %3245 = vmatpush1.msra.mxu0 0.0
  %3246 = vmatprep.subr.mxu0 0.0
  %3247 = vmatpush1.msra.mxu0 0.0
  %3248 = vmatprep.subr.mxu0 0.0
  %3249 = vmatpush1.msra.mxu0 0.0
  %3250 = vmatprep.subr.mxu0 0.0
  %3251 = vmatpush1.msra.mxu0 0.0
  %3252 = vmatprep.subr.mxu0 0.0
  %3253 = vmatpush1.msra.mxu0 0.0
  %3254 = vmatprep.subr.mxu0 0.0
  %3255 = vmatpush1.msra.mxu0 0.0
  %3256 = vmatprep.subr.mxu0 0.0
  %3257 = vmatpush1.msra.mxu0 0.0
  %3258 = vmatprep.subr.mxu0 0.0
  %3259 = vmatpush1.msra.mxu0 0.0
  %3260 = vmatprep.subr.mxu0 0.0
  %3261 = vmatpush1.msra.mxu0 0.0
  %3262 = vmatprep.subr.mxu0 0.0
  %3263 = vmatpush1.msra.mxu0 0.0
  %3264 = vmatprep.subr.mxu0 %v3155
  %3265 = vmatpush1.msra.mxu0 %v3153
  %3266 = vmatprep.subr.mxu0 0.0
  %3267 = vmatpush2.msra.mxu0 0.0
  %3268 = vmatprep.subr.mxu0 0.0
  %3269 = vmatpush2.msra.mxu0 0.0
  %3270 = vmatprep.subr.mxu0 0.0
  %3271 = vmatpush2.msra.mxu0 0.0
  %3272 = vmatprep.subr.mxu0 0.0
  %3273 = vmatpush2.msra.mxu0 0.0
  %3274 = vmatprep.subr.mxu0 0.0
  %3275 = vmatpush2.msra.mxu0 0.0
  %3276 = vmatprep.subr.mxu0 0.0
  %3277 = vmatpush2.msra.mxu0 0.0
  %3278 = vmatprep.subr.mxu0 0.0
  %3279 = vmatpush2.msra.mxu0 0.0
  %3280 = vmatprep.subr.mxu0 0.0
  %3281 = vmatpush2.msra.mxu0 0.0
  %3282 = vmatprep.subr.mxu0 0.0
  %3283 = vmatpush2.msra.mxu0 0.0
  %3284 = vmatprep.subr.mxu0 0.0
  %3285 = vmatpush2.msra.mxu0 0.0
  %3286 = vmatprep.subr.mxu0 0.0
  %3287 = vmatpush2.msra.mxu0 0.0
  %3288 = vmatprep.subr.mxu0 0.0
  %3289 = vmatpush2.msra.mxu0 0.0
  %3290 = vmatprep.subr.mxu0 0.0
  %3291 = vmatpush2.msra.mxu0 0.0
  %3292 = vmatprep.subr.mxu0 0.0
  %3293 = vmatpush2.msra.mxu0 0.0
  %3294 = vmatprep.subr.mxu0 0.0
  %3295 = vmatpush2.msra.mxu0 0.0
  %3296 = vmatprep.subr.mxu0 0.0
  %3297 = vmatpush2.msra.mxu0 0.0
  %3298 = vmatprep.mubr.f32.mxu0 0.0
  %3299 = vmatmul.mubr.f32.gmra.mxu0 %v3147
  %v3300 = vpop.f32.mrf.mxu0
  %v3301 = vadd.f32 0.0, %v3300
  %v3302 = vpop.f32.mrf.mxu0
  %v3303 = vadd.f32 0.0, %v3302
  %3304 = vdwg.mxu0
  %3305 = vmatprep.subr.mxu0 0.0
  %3306 = vmatpush1.msra.mxu0 0.0
  %3307 = vmatprep.subr.mxu0 0.0
  %3308 = vmatpush1.msra.mxu0 0.0
  %3309 = vmatprep.subr.mxu0 0.0
  %3310 = vmatpush1.msra.mxu0 0.0
  %3311 = vmatprep.subr.mxu0 0.0
  %3312 = vmatpush1.msra.mxu0 0.0
  %3313 = vmatprep.subr.mxu0 0.0
  %3314 = vmatpush1.msra.mxu0 0.0
  %3315 = vmatprep.subr.mxu0 0.0
  %3316 = vmatpush1.msra.mxu0 0.0
  %3317 = vmatprep.subr.mxu0 0.0
  %3318 = vmatpush1.msra.mxu0 0.0
  %3319 = vmatprep.subr.mxu0 0.0
  %3320 = vmatpush1.msra.mxu0 0.0
  %3321 = vmatprep.subr.mxu0 0.0
  %3322 = vmatpush1.msra.mxu0 0.0
  %3323 = vmatprep.subr.mxu0 0.0
  %3324 = vmatpush1.msra.mxu0 0.0
  %3325 = vmatprep.subr.mxu0 0.0
  %3326 = vmatpush1.msra.mxu0 0.0
  %3327 = vmatprep.subr.mxu0 0.0
  %3328 = vmatpush1.msra.mxu0 0.0
  %3329 = vmatprep.subr.mxu0 0.0
  %3330 = vmatpush1.msra.mxu0 0.0
  %3331 = vmatprep.subr.mxu0 0.0
  %3332 = vmatpush1.msra.mxu0 0.0
  %3333 = vmatprep.subr.mxu0 0.0
  %3334 = vmatpush1.msra.mxu0 0.0
  %3335 = vmatprep.subr.mxu0 %v3159
  %3336 = vmatpush1.msra.mxu0 %v3157
  %3337 = vmatprep.subr.mxu0 0.0
  %3338 = vmatpush2.msra.mxu0 0.0
  %3339 = vmatprep.subr.mxu0 0.0
  %3340 = vmatpush2.msra.mxu0 0.0
  %3341 = vmatprep.subr.mxu0 0.0
  %3342 = vmatpush2.msra.mxu0 0.0
  %3343 = vmatprep.subr.mxu0 0.0
  %3344 = vmatpush2.msra.mxu0 0.0
  %3345 = vmatprep.subr.mxu0 0.0
  %3346 = vmatpush2.msra.mxu0 0.0
  %3347 = vmatprep.subr.mxu0 0.0
  %3348 = vmatpush2.msra.mxu0 0.0
  %3349 = vmatprep.subr.mxu0 0.0
  %3350 = vmatpush2.msra.mxu0 0.0
  %3351 = vmatprep.subr.mxu0 0.0
  %3352 = vmatpush2.msra.mxu0 0.0
  %3353 = vmatprep.subr.mxu0 0.0
  %3354 = vmatpush2.msra.mxu0 0.0
  %3355 = vmatprep.subr.mxu0 0.0
  %3356 = vmatpush2.msra.mxu0 0.0
  %3357 = vmatprep.subr.mxu0 0.0
  %3358 = vmatpush2.msra.mxu0 0.0
  %3359 = vmatprep.subr.mxu0 0.0
  %3360 = vmatpush2.msra.mxu0 0.0
  %3361 = vmatprep.subr.mxu0 0.0
  %3362 = vmatpush2.msra.mxu0 0.0
  %3363 = vmatprep.subr.mxu0 0.0
  %3364 = vmatpush2.msra.mxu0 0.0
  %3365 = vmatprep.subr.mxu0 0.0
  %3366 = vmatpush2.msra.mxu0 0.0
  %3367 = vmatprep.subr.mxu0 0.0
  %3368 = vmatpush2.msra.mxu0 0.0
  %3369 = vmatprep.mubr.f32.mxu0 0.0
  %3370 = vmatmul.mubr.f32.gmra.mxu0 %v3147
  %v3371 = vpop.f32.mrf.mxu0
  %v3372 = vadd.f32 0.0, %v3371
  %v3373 = vpop.f32.mrf.mxu0
  %v3374 = vadd.f32 0.0, %v3373
  %3375 = vdwg.mxu0
  %3376 = vmatprep.subr.mxu0 0.0
  %3377 = vmatpush1.msra.mxu0 0.0
  %3378 = vmatprep.subr.mxu0 0.0
  %3379 = vmatpush1.msra.mxu0 0.0
  %3380 = vmatprep.subr.mxu0 0.0
  %3381 = vmatpush1.msra.mxu0 0.0
  %3382 = vmatprep.subr.mxu0 0.0
  %3383 = vmatpush1.msra.mxu0 0.0
  %3384 = vmatprep.subr.mxu0 0.0
  %3385 = vmatpush1.msra.mxu0 0.0
  %3386 = vmatprep.subr.mxu0 0.0
  %3387 = vmatpush1.msra.mxu0 0.0
  %3388 = vmatprep.subr.mxu0 0.0
  %3389 = vmatpush1.msra.mxu0 0.0
  %3390 = vmatprep.subr.mxu0 0.0
  %3391 = vmatpush1.msra.mxu0 0.0
  %3392 = vmatprep.subr.mxu0 0.0
  %3393 = vmatpush1.msra.mxu0 0.0
  %3394 = vmatprep.subr.mxu0 0.0
  %3395 = vmatpush1.msra.mxu0 0.0
  %3396 = vmatprep.subr.mxu0 0.0
  %3397 = vmatpush1.msra.mxu0 0.0
  %3398 = vmatprep.subr.mxu0 0.0
  %3399 = vmatpush1.msra.mxu0 0.0
  %3400 = vmatprep.subr.mxu0 0.0
  %3401 = vmatpush1.msra.mxu0 0.0
  %3402 = vmatprep.subr.mxu0 0.0
  %3403 = vmatpush1.msra.mxu0 0.0
  %3404 = vmatprep.subr.mxu0 0.0
  %3405 = vmatpush1.msra.mxu0 0.0
  %3406 = vmatprep.subr.mxu0 0.0
  %3407 = vmatpush1.msra.mxu0 %v3161
  %3408 = vmatprep.subr.mxu0 0.0
  %3409 = vmatpush2.msra.mxu0 0.0
  %3410 = vmatprep.subr.mxu0 0.0
  %3411 = vmatpush2.msra.mxu0 0.0
  %3412 = vmatprep.subr.mxu0 0.0
  %3413 = vmatpush2.msra.mxu0 0.0
  %3414 = vmatprep.subr.mxu0 0.0
  %3415 = vmatpush2.msra.mxu0 0.0
  %3416 = vmatprep.subr.mxu0 0.0
  %3417 = vmatpush2.msra.mxu0 0.0
  %3418 = vmatprep.subr.mxu0 0.0
  %3419 = vmatpush2.msra.mxu0 0.0
  %3420 = vmatprep.subr.mxu0 0.0
  %3421 = vmatpush2.msra.mxu0 0.0
  %3422 = vmatprep.subr.mxu0 0.0
  %3423 = vmatpush2.msra.mxu0 0.0
  %3424 = vmatprep.subr.mxu0 0.0
  %3425 = vmatpush2.msra.mxu0 0.0
  %3426 = vmatprep.subr.mxu0 0.0
  %3427 = vmatpush2.msra.mxu0 0.0
  %3428 = vmatprep.subr.mxu0 0.0
  %3429 = vmatpush2.msra.mxu0 0.0
  %3430 = vmatprep.subr.mxu0 0.0
  %3431 = vmatpush2.msra.mxu0 0.0
  %3432 = vmatprep.subr.mxu0 0.0
  %3433 = vmatpush2.msra.mxu0 0.0
  %3434 = vmatprep.subr.mxu0 0.0
  %3435 = vmatpush2.msra.mxu0 0.0
  %3436 = vmatprep.subr.mxu0 0.0
  %3437 = vmatpush2.msra.mxu0 0.0
  %3438 = vmatprep.subr.mxu0 0.0
  %3439 = vmatpush2.msra.mxu0 0.0
  %3440 = vmatprep.mubr.f32.mxu0 0.0
  %3441 = vmatmul.mubr.f32.gmra.mxu0 %v3147
  %v3442 = vpop.f32.mrf.mxu0
  %v3443 = vadd.f32 0.0, %v3442
  %v3444 = vpop.f32.mrf.mxu0
  %3445 = vdwg.mxu0
  %v3446 = vlaneseq
  %v3447 = vshrl.u32 %v3446, 7
  %v3448 = vsub.s32 0, %v3447
  %v3449 = vrot.slane %v3230, %v3448
  %v3450 = vlaneseq
  %v3451 = vshrl.u32 %v3450, 7
  %v3452 = vsub.s32 0, %v3451
  %v3453 = vrot.slane %v3232, %v3452
  %v3454 = vlaneseq
  %v3455 = vshrl.u32 %v3454, 7
  %v3456 = vsub.s32 0, %v3455
  %v3457 = vrot.slane %v3301, %v3456
  %v3458 = vlaneseq
  %v3459 = vshrl.u32 %v3458, 7
  %v3460 = vsub.s32 0, %v3459
  %v3461 = vrot.slane %v3303, %v3460
  %v3462 = vlaneseq
  %v3463 = vshrl.u32 %v3462, 7
  %v3464 = vsub.s32 0, %v3463
  %v3465 = vrot.slane %v3372, %v3464
  %v3466 = vlaneseq
  %v3467 = vshrl.u32 %v3466, 7
  %v3468 = vsub.s32 0, %v3467
  %v3469 = vrot.slane %v3374, %v3468
  %v3470 = vlaneseq
  %v3471 = vshrl.u32 %v3470, 7
  %v3472 = vsub.s32 0, %v3471
  %v3473 = vrot.slane %v3443, %v3472
  %v3474 = vsub.f32 %v2292, %v3449
  %v3475 = vsub.f32 %v2294, %v3453
  %v3476 = vsub.f32 %v2434, %v3457
  %v3477 = vsub.f32 %v2436, %v3461
  %v3478 = vsub.f32 %v2576, %v3465
  %v3479 = vsub.f32 %v2578, %v3469
  %v3480 = vsub.f32 %v2717, %v3473
  %v3481 = vmul.f32 %v3474, %v3474
  %v3482 = vmul.f32 %v3475, %v3475
  %v3483 = vmul.f32 %v3476, %v3476
  %v3484 = vmul.f32 %v3477, %v3477
  %v3485 = vmul.f32 %v3478, %v3478
  %v3486 = vmul.f32 %v3479, %v3479
  %v3487 = vmul.f32 %v3480, %v3480
  %v3489 = vsel %vm2823, %v3487, 0
  %3491 = vmatprep.subr.mxu0 0.0
  %3492 = vmatpush1.msra.mxu0 %v2735
  %3493 = vmatprep.subr.mxu0 0.0
  %3494 = vmatpush1.msra.mxu0 %v2734
  %3495 = vmatprep.subr.mxu0 0.0
  %3496 = vmatpush1.msra.mxu0 %v2733
  %3497 = vmatprep.subr.mxu0 0.0
  %3498 = vmatpush1.msra.mxu0 %v2732
  %3499 = vmatprep.subr.mxu0 0.0
  %3500 = vmatpush1.msra.mxu0 %v2731
  %3501 = vmatprep.subr.mxu0 0.0
  %3502 = vmatpush1.msra.mxu0 %v2730
  %3503 = vmatprep.subr.mxu0 0.0
  %3504 = vmatpush1.msra.mxu0 %v2729
  %3505 = vmatprep.subr.mxu0 0.0
  %3506 = vmatpush1.msra.mxu0 %v2728
  %3507 = vmatprep.subr.mxu0 0.0
  %3508 = vmatpush1.msra.mxu0 %v2727
  %3509 = vmatprep.subr.mxu0 0.0
  %3510 = vmatpush1.msra.mxu0 %v2726
  %3511 = vmatprep.subr.mxu0 0.0
  %3512 = vmatpush1.msra.mxu0 %v2725
  %3513 = vmatprep.subr.mxu0 0.0
  %3514 = vmatpush1.msra.mxu0 %v2724
  %3515 = vmatprep.subr.mxu0 0.0
  %3516 = vmatpush1.msra.mxu0 %v2723
  %3517 = vmatprep.subr.mxu0 0.0
  %3518 = vmatpush1.msra.mxu0 %v2722
  %3519 = vmatprep.subr.mxu0 0.0
  %3520 = vmatpush1.msra.mxu0 %v2721
  %3521 = vmatprep.subr.mxu0 0.0
  %3522 = vmatpush1.msra.mxu0 %v2720
  %3523 = vmatprep.subr.mxu0 0.0
  %3524 = vmatpush2.msra.mxu0 %v2751
  %3525 = vmatprep.subr.mxu0 0.0
  %3526 = vmatpush2.msra.mxu0 %v2750
  %3527 = vmatprep.subr.mxu0 0.0
  %3528 = vmatpush2.msra.mxu0 %v2749
  %3529 = vmatprep.subr.mxu0 0.0
  %3530 = vmatpush2.msra.mxu0 %v2748
  %3531 = vmatprep.subr.mxu0 0.0
  %3532 = vmatpush2.msra.mxu0 %v2747
  %3533 = vmatprep.subr.mxu0 0.0
  %3534 = vmatpush2.msra.mxu0 %v2746
  %3535 = vmatprep.subr.mxu0 0.0
  %3536 = vmatpush2.msra.mxu0 %v2745
  %3537 = vmatprep.subr.mxu0 0.0
  %3538 = vmatpush2.msra.mxu0 %v2744
  %3539 = vmatprep.subr.mxu0 0.0
  %3540 = vmatpush2.msra.mxu0 %v2743
  %3541 = vmatprep.subr.mxu0 0.0
  %3542 = vmatpush2.msra.mxu0 %v2742
  %3543 = vmatprep.subr.mxu0 0.0
  %3544 = vmatpush2.msra.mxu0 %v2741
  %3545 = vmatprep.subr.mxu0 0.0
  %3546 = vmatpush2.msra.mxu0 %v2740
  %3547 = vmatprep.subr.mxu0 0.0
  %3548 = vmatpush2.msra.mxu0 %v2739
  %3549 = vmatprep.subr.mxu0 0.0
  %3550 = vmatpush2.msra.mxu0 %v2738
  %3551 = vmatprep.subr.mxu0 0.0
  %3552 = vmatpush2.msra.mxu0 %v2737
  %3553 = vmatprep.subr.mxu0 0.0
  %3554 = vmatpush2.msra.mxu0 %v2736
  %3555 = vmatprep.mubr.f32.mxu0 %v3482
  %3556 = vmatmul.mubr.f32.gmra.mxu0 %v3481
  %v3557 = vpop.f32.mrf.mxu0
  %v3558 = vadd.f32 0.0, %v3557
  %v3559 = vpop.f32.mrf.mxu0
  %3560 = vdwg.mxu0
  %3561 = vmatprep.subr.mxu0 0.0
  %3562 = vmatpush1.msra.mxu0 %v2767
  %3563 = vmatprep.subr.mxu0 0.0
  %3564 = vmatpush1.msra.mxu0 %v2766
  %3565 = vmatprep.subr.mxu0 0.0
  %3566 = vmatpush1.msra.mxu0 %v2765
  %3567 = vmatprep.subr.mxu0 0.0
  %3568 = vmatpush1.msra.mxu0 %v2764
  %3569 = vmatprep.subr.mxu0 0.0
  %3570 = vmatpush1.msra.mxu0 %v2763
  %3571 = vmatprep.subr.mxu0 0.0
  %3572 = vmatpush1.msra.mxu0 %v2762
  %3573 = vmatprep.subr.mxu0 0.0
  %3574 = vmatpush1.msra.mxu0 %v2761
  %3575 = vmatprep.subr.mxu0 0.0
  %3576 = vmatpush1.msra.mxu0 %v2760
  %3577 = vmatprep.subr.mxu0 0.0
  %3578 = vmatpush1.msra.mxu0 %v2759
  %3579 = vmatprep.subr.mxu0 0.0
  %3580 = vmatpush1.msra.mxu0 %v2758
  %3581 = vmatprep.subr.mxu0 0.0
  %3582 = vmatpush1.msra.mxu0 %v2757
  %3583 = vmatprep.subr.mxu0 0.0
  %3584 = vmatpush1.msra.mxu0 %v2756
  %3585 = vmatprep.subr.mxu0 0.0
  %3586 = vmatpush1.msra.mxu0 %v2755
  %3587 = vmatprep.subr.mxu0 0.0
  %3588 = vmatpush1.msra.mxu0 %v2754
  %3589 = vmatprep.subr.mxu0 0.0
  %3590 = vmatpush1.msra.mxu0 %v2753
  %3591 = vmatprep.subr.mxu0 0.0
  %3592 = vmatpush1.msra.mxu0 %v2752
  %3593 = vmatprep.subr.mxu0 0.0
  %3594 = vmatpush2.msra.mxu0 %v2783
  %3595 = vmatprep.subr.mxu0 0.0
  %3596 = vmatpush2.msra.mxu0 %v2782
  %3597 = vmatprep.subr.mxu0 0.0
  %3598 = vmatpush2.msra.mxu0 %v2781
  %3599 = vmatprep.subr.mxu0 0.0
  %3600 = vmatpush2.msra.mxu0 %v2780
  %3601 = vmatprep.subr.mxu0 0.0
  %3602 = vmatpush2.msra.mxu0 %v2779
  %3603 = vmatprep.subr.mxu0 0.0
  %3604 = vmatpush2.msra.mxu0 %v2778
  %3605 = vmatprep.subr.mxu0 0.0
  %3606 = vmatpush2.msra.mxu0 %v2777
  %3607 = vmatprep.subr.mxu0 0.0
  %3608 = vmatpush2.msra.mxu0 %v2776
  %3609 = vmatprep.subr.mxu0 0.0
  %3610 = vmatpush2.msra.mxu0 %v2775
  %3611 = vmatprep.subr.mxu0 0.0
  %3612 = vmatpush2.msra.mxu0 %v2774
  %3613 = vmatprep.subr.mxu0 0.0
  %3614 = vmatpush2.msra.mxu0 %v2773
  %3615 = vmatprep.subr.mxu0 0.0
  %3616 = vmatpush2.msra.mxu0 %v2772
  %3617 = vmatprep.subr.mxu0 0.0
  %3618 = vmatpush2.msra.mxu0 %v2771
  %3619 = vmatprep.subr.mxu0 0.0
  %3620 = vmatpush2.msra.mxu0 %v2770
  %3621 = vmatprep.subr.mxu0 0.0
  %3622 = vmatpush2.msra.mxu0 %v2769
  %3623 = vmatprep.subr.mxu0 0.0
  %3624 = vmatpush2.msra.mxu0 %v2768
  %3625 = vmatprep.mubr.f32.mxu0 %v3484
  %3626 = vmatmul.mubr.f32.gmra.mxu0 %v3483
  %v3627 = vpop.f32.mrf.mxu0
  %v3628 = vadd.f32 %v3558, %v3627
  %v3629 = vpop.f32.mrf.mxu0
  %3630 = vdwg.mxu0
  %3631 = vmatprep.subr.mxu0 0.0
  %3632 = vmatpush1.msra.mxu0 %v2799
  %3633 = vmatprep.subr.mxu0 0.0
  %3634 = vmatpush1.msra.mxu0 %v2798
  %3635 = vmatprep.subr.mxu0 0.0
  %3636 = vmatpush1.msra.mxu0 %v2797
  %3637 = vmatprep.subr.mxu0 0.0
  %3638 = vmatpush1.msra.mxu0 %v2796
  %3639 = vmatprep.subr.mxu0 0.0
  %3640 = vmatpush1.msra.mxu0 %v2795
  %3641 = vmatprep.subr.mxu0 0.0
  %3642 = vmatpush1.msra.mxu0 %v2794
  %3643 = vmatprep.subr.mxu0 0.0
  %3644 = vmatpush1.msra.mxu0 %v2793
  %3645 = vmatprep.subr.mxu0 0.0
  %3646 = vmatpush1.msra.mxu0 %v2792
  %3647 = vmatprep.subr.mxu0 0.0
  %3648 = vmatpush1.msra.mxu0 %v2791
  %3649 = vmatprep.subr.mxu0 0.0
  %3650 = vmatpush1.msra.mxu0 %v2790
  %3651 = vmatprep.subr.mxu0 0.0
  %3652 = vmatpush1.msra.mxu0 %v2789
  %3653 = vmatprep.subr.mxu0 0.0
  %3654 = vmatpush1.msra.mxu0 %v2788
  %3655 = vmatprep.subr.mxu0 0.0
  %3656 = vmatpush1.msra.mxu0 %v2787
  %3657 = vmatprep.subr.mxu0 0.0
  %3658 = vmatpush1.msra.mxu0 %v2786
  %3659 = vmatprep.subr.mxu0 0.0
  %3660 = vmatpush1.msra.mxu0 %v2785
  %3661 = vmatprep.subr.mxu0 0.0
  %3662 = vmatpush1.msra.mxu0 %v2784
  %3663 = vmatprep.subr.mxu0 0.0
  %3664 = vmatpush2.msra.mxu0 %v2815
  %3665 = vmatprep.subr.mxu0 0.0
  %3666 = vmatpush2.msra.mxu0 %v2814
  %3667 = vmatprep.subr.mxu0 0.0
  %3668 = vmatpush2.msra.mxu0 %v2813
  %3669 = vmatprep.subr.mxu0 0.0
  %3670 = vmatpush2.msra.mxu0 %v2812
  %3671 = vmatprep.subr.mxu0 0.0
  %3672 = vmatpush2.msra.mxu0 %v2811
  %3673 = vmatprep.subr.mxu0 0.0
  %3674 = vmatpush2.msra.mxu0 %v2810
  %3675 = vmatprep.subr.mxu0 0.0
  %3676 = vmatpush2.msra.mxu0 %v2809
  %3677 = vmatprep.subr.mxu0 0.0
  %3678 = vmatpush2.msra.mxu0 %v2808
  %3679 = vmatprep.subr.mxu0 0.0
  %3680 = vmatpush2.msra.mxu0 %v2807
  %3681 = vmatprep.subr.mxu0 0.0
  %3682 = vmatpush2.msra.mxu0 %v2806
  %3683 = vmatprep.subr.mxu0 0.0
  %3684 = vmatpush2.msra.mxu0 %v2805
  %3685 = vmatprep.subr.mxu0 0.0
  %3686 = vmatpush2.msra.mxu0 %v2804
  %3687 = vmatprep.subr.mxu0 0.0
  %3688 = vmatpush2.msra.mxu0 %v2803
  %3689 = vmatprep.subr.mxu0 0.0
  %3690 = vmatpush2.msra.mxu0 %v2802
  %3691 = vmatprep.subr.mxu0 0.0
  %3692 = vmatpush2.msra.mxu0 %v2801
  %3693 = vmatprep.subr.mxu0 0.0
  %3694 = vmatpush2.msra.mxu0 %v2800
  %3695 = vmatprep.mubr.f32.mxu0 %v3486
  %3696 = vmatmul.mubr.f32.gmra.mxu0 %v3485
  %v3697 = vpop.f32.mrf.mxu0
  %v3698 = vadd.f32 %v3628, %v3697
  %v3699 = vpop.f32.mrf.mxu0
  %3700 = vdwg.mxu0
  %3701 = vmatprep.subr.mxu0 0.0
  %3702 = vmatpush1.msra.mxu0 0.0
  %3703 = vmatprep.subr.mxu0 0.0
  %3704 = vmatpush1.msra.mxu0 0.0
  %3705 = vmatprep.subr.mxu0 0.0
  %3706 = vmatpush1.msra.mxu0 0.0
  %3707 = vmatprep.subr.mxu0 0.0
  %3708 = vmatpush1.msra.mxu0 0.0
  %3709 = vmatprep.subr.mxu0 0.0
  %3710 = vmatpush1.msra.mxu0 0.0
  %3711 = vmatprep.subr.mxu0 0.0
  %3712 = vmatpush1.msra.mxu0 0.0
  %3713 = vmatprep.subr.mxu0 0.0
  %3714 = vmatpush1.msra.mxu0 0.0
  %3715 = vmatprep.subr.mxu0 0.0
  %3716 = vmatpush1.msra.mxu0 0.0
  %3717 = vmatprep.subr.mxu0 0.0
  %3718 = vmatpush1.msra.mxu0 0.0
  %3719 = vmatprep.subr.mxu0 0.0
  %3720 = vmatpush1.msra.mxu0 0.0
  %3721 = vmatprep.subr.mxu0 0.0
  %3722 = vmatpush1.msra.mxu0 0.0
  %3723 = vmatprep.subr.mxu0 0.0
  %3724 = vmatpush1.msra.mxu0 0.0
  %3725 = vmatprep.subr.mxu0 0.0
  %3726 = vmatpush1.msra.mxu0 0.0
  %3727 = vmatprep.subr.mxu0 0.0
  %3728 = vmatpush1.msra.mxu0 0.0
  %3729 = vmatprep.subr.mxu0 0.0
  %3730 = vmatpush1.msra.mxu0 %v2817
  %3731 = vmatprep.subr.mxu0 0.0
  %3732 = vmatpush1.msra.mxu0 %v2816
  %3733 = vmatprep.subr.mxu0 0.0
  %3734 = vmatpush2.msra.mxu0 0.0
  %3735 = vmatprep.subr.mxu0 0.0
  %3736 = vmatpush2.msra.mxu0 0.0
  %3737 = vmatprep.subr.mxu0 0.0
  %3738 = vmatpush2.msra.mxu0 0.0
  %3739 = vmatprep.subr.mxu0 0.0
  %3740 = vmatpush2.msra.mxu0 0.0
  %3741 = vmatprep.subr.mxu0 0.0
  %3742 = vmatpush2.msra.mxu0 0.0
  %3743 = vmatprep.subr.mxu0 0.0
  %3744 = vmatpush2.msra.mxu0 0.0
  %3745 = vmatprep.subr.mxu0 0.0
  %3746 = vmatpush2.msra.mxu0 0.0
  %3747 = vmatprep.subr.mxu0 0.0
  %3748 = vmatpush2.msra.mxu0 0.0
  %3749 = vmatprep.subr.mxu0 0.0
  %3750 = vmatpush2.msra.mxu0 0.0
  %3751 = vmatprep.subr.mxu0 0.0
  %3752 = vmatpush2.msra.mxu0 0.0
  %3753 = vmatprep.subr.mxu0 0.0
  %3754 = vmatpush2.msra.mxu0 0.0
  %3755 = vmatprep.subr.mxu0 0.0
  %3756 = vmatpush2.msra.mxu0 0.0
  %3757 = vmatprep.subr.mxu0 0.0
  %3758 = vmatpush2.msra.mxu0 0.0
  %3759 = vmatprep.subr.mxu0 0.0
  %3760 = vmatpush2.msra.mxu0 0.0
  %3761 = vmatprep.subr.mxu0 0.0
  %3762 = vmatpush2.msra.mxu0 0.0
  %3763 = vmatprep.subr.mxu0 0.0
  %3764 = vmatpush2.msra.mxu0 0.0
  %3765 = vmatprep.mubr.f32.mxu0 0.0
  %3766 = vmatmul.mubr.f32.gmra.mxu0 %v3489
  %v3767 = vpop.f32.mrf.mxu0
  %v3768 = vadd.f32 %v3698, %v3767
  %v3769 = vpop.f32.mrf.mxu0
  %3770 = vdwg.mxu0
  %v3771 = vsel %vm3107, %v3768, 0.0
  %v3772 = vrot.slane %v3771, 4
  %v3773 = vadd.f32 %v3771, %v3772
  %v3774 = vrot.slane %v3773, 2
  %v3775 = vadd.f32 %v3773, %v3774
  %v3776 = vrot.slane %v3775, 1
  %v3777 = vadd.f32 %v3775, %v3776
  %v3778 = vmul.f32 %v3777, 0.0006377551
  %v3779 = vadd.f32 %v3778, 1e-05
  %v3780 = vrsqrt.pop %v3779
  %v3782 = vsel %vm3145, %v3780, 0
  %3784 = vmatprep.subr.mxu0 0.0
  %3785 = vmatpush1.msra.mxu0 0.0
  %3786 = vmatprep.subr.mxu0 0.0
  %3787 = vmatpush1.msra.mxu0 0.0
  %3788 = vmatprep.subr.mxu0 0.0
  %3789 = vmatpush1.msra.mxu0 0.0
  %3790 = vmatprep.subr.mxu0 0.0
  %3791 = vmatpush1.msra.mxu0 0.0
  %3792 = vmatprep.subr.mxu0 0.0
  %3793 = vmatpush1.msra.mxu0 0.0
  %3794 = vmatprep.subr.mxu0 0.0
  %3795 = vmatpush1.msra.mxu0 0.0
  %3796 = vmatprep.subr.mxu0 0.0
  %3797 = vmatpush1.msra.mxu0 0.0
  %3798 = vmatprep.subr.mxu0 0.0
  %3799 = vmatpush1.msra.mxu0 0.0
  %3800 = vmatprep.subr.mxu0 0.0
  %3801 = vmatpush1.msra.mxu0 0.0
  %3802 = vmatprep.subr.mxu0 0.0
  %3803 = vmatpush1.msra.mxu0 0.0
  %3804 = vmatprep.subr.mxu0 0.0
  %3805 = vmatpush1.msra.mxu0 0.0
  %3806 = vmatprep.subr.mxu0 0.0
  %3807 = vmatpush1.msra.mxu0 0.0
  %3808 = vmatprep.subr.mxu0 0.0
  %3809 = vmatpush1.msra.mxu0 0.0
  %3810 = vmatprep.subr.mxu0 0.0
  %3811 = vmatpush1.msra.mxu0 0.0
  %3812 = vmatprep.subr.mxu0 0.0
  %3813 = vmatpush1.msra.mxu0 0.0
  %3814 = vmatprep.subr.mxu0 %v3151
  %3815 = vmatpush1.msra.mxu0 %v3149
  %3816 = vmatprep.subr.mxu0 0.0
  %3817 = vmatpush2.msra.mxu0 0.0
  %3818 = vmatprep.subr.mxu0 0.0
  %3819 = vmatpush2.msra.mxu0 0.0
  %3820 = vmatprep.subr.mxu0 0.0
  %3821 = vmatpush2.msra.mxu0 0.0
  %3822 = vmatprep.subr.mxu0 0.0
  %3823 = vmatpush2.msra.mxu0 0.0
  %3824 = vmatprep.subr.mxu0 0.0
  %3825 = vmatpush2.msra.mxu0 0.0
  %3826 = vmatprep.subr.mxu0 0.0
  %3827 = vmatpush2.msra.mxu0 0.0
  %3828 = vmatprep.subr.mxu0 0.0
  %3829 = vmatpush2.msra.mxu0 0.0
  %3830 = vmatprep.subr.mxu0 0.0
  %3831 = vmatpush2.msra.mxu0 0.0
  %3832 = vmatprep.subr.mxu0 0.0
  %3833 = vmatpush2.msra.mxu0 0.0
  %3834 = vmatprep.subr.mxu0 0.0
  %3835 = vmatpush2.msra.mxu0 0.0
  %3836 = vmatprep.subr.mxu0 0.0
  %3837 = vmatpush2.msra.mxu0 0.0
  %3838 = vmatprep.subr.mxu0 0.0
  %3839 = vmatpush2.msra.mxu0 0.0
  %3840 = vmatprep.subr.mxu0 0.0
  %3841 = vmatpush2.msra.mxu0 0.0
  %3842 = vmatprep.subr.mxu0 0.0
  %3843 = vmatpush2.msra.mxu0 0.0
  %3844 = vmatprep.subr.mxu0 0.0
  %3845 = vmatpush2.msra.mxu0 0.0
  %3846 = vmatprep.subr.mxu0 0.0
  %3847 = vmatpush2.msra.mxu0 0.0
  %3848 = vmatprep.mubr.f32.mxu0 0.0
  %3849 = vmatmul.mubr.f32.gmra.mxu0 %v3782
  %v3850 = vpop.f32.mrf.mxu0
  %v3851 = vadd.f32 0.0, %v3850
  %v3852 = vpop.f32.mrf.mxu0
  %v3853 = vadd.f32 0.0, %v3852
  %3854 = vdwg.mxu0
  %3855 = vmatprep.subr.mxu0 0.0
  %3856 = vmatpush1.msra.mxu0 0.0
  %3857 = vmatprep.subr.mxu0 0.0
  %3858 = vmatpush1.msra.mxu0 0.0
  %3859 = vmatprep.subr.mxu0 0.0
  %3860 = vmatpush1.msra.mxu0 0.0
  %3861 = vmatprep.subr.mxu0 0.0
  %3862 = vmatpush1.msra.mxu0 0.0
  %3863 = vmatprep.subr.mxu0 0.0
  %3864 = vmatpush1.msra.mxu0 0.0
  %3865 = vmatprep.subr.mxu0 0.0
  %3866 = vmatpush1.msra.mxu0 0.0
  %3867 = vmatprep.subr.mxu0 0.0
  %3868 = vmatpush1.msra.mxu0 0.0
  %3869 = vmatprep.subr.mxu0 0.0
  %3870 = vmatpush1.msra.mxu0 0.0
  %3871 = vmatprep.subr.mxu0 0.0
  %3872 = vmatpush1.msra.mxu0 0.0
  %3873 = vmatprep.subr.mxu0 0.0
  %3874 = vmatpush1.msra.mxu0 0.0
  %3875 = vmatprep.subr.mxu0 0.0
  %3876 = vmatpush1.msra.mxu0 0.0
  %3877 = vmatprep.subr.mxu0 0.0
  %3878 = vmatpush1.msra.mxu0 0.0
  %3879 = vmatprep.subr.mxu0 0.0
  %3880 = vmatpush1.msra.mxu0 0.0
  %3881 = vmatprep.subr.mxu0 0.0
  %3882 = vmatpush1.msra.mxu0 0.0
  %3883 = vmatprep.subr.mxu0 0.0
  %3884 = vmatpush1.msra.mxu0 0.0
  %3885 = vmatprep.subr.mxu0 %v3155
  %3886 = vmatpush1.msra.mxu0 %v3153
  %3887 = vmatprep.subr.mxu0 0.0
  %3888 = vmatpush2.msra.mxu0 0.0
  %3889 = vmatprep.subr.mxu0 0.0
  %3890 = vmatpush2.msra.mxu0 0.0
  %3891 = vmatprep.subr.mxu0 0.0
  %3892 = vmatpush2.msra.mxu0 0.0
  %3893 = vmatprep.subr.mxu0 0.0
  %3894 = vmatpush2.msra.mxu0 0.0
  %3895 = vmatprep.subr.mxu0 0.0
  %3896 = vmatpush2.msra.mxu0 0.0
  %3897 = vmatprep.subr.mxu0 0.0
  %3898 = vmatpush2.msra.mxu0 0.0
  %3899 = vmatprep.subr.mxu0 0.0
  %3900 = vmatpush2.msra.mxu0 0.0
  %3901 = vmatprep.subr.mxu0 0.0
  %3902 = vmatpush2.msra.mxu0 0.0
  %3903 = vmatprep.subr.mxu0 0.0
  %3904 = vmatpush2.msra.mxu0 0.0
  %3905 = vmatprep.subr.mxu0 0.0
  %3906 = vmatpush2.msra.mxu0 0.0
  %3907 = vmatprep.subr.mxu0 0.0
  %3908 = vmatpush2.msra.mxu0 0.0
  %3909 = vmatprep.subr.mxu0 0.0
  %3910 = vmatpush2.msra.mxu0 0.0
  %3911 = vmatprep.subr.mxu0 0.0
  %3912 = vmatpush2.msra.mxu0 0.0
  %3913 = vmatprep.subr.mxu0 0.0
  %3914 = vmatpush2.msra.mxu0 0.0
  %3915 = vmatprep.subr.mxu0 0.0
  %3916 = vmatpush2.msra.mxu0 0.0
  %3917 = vmatprep.subr.mxu0 0.0
  %3918 = vmatpush2.msra.mxu0 0.0
  %3919 = vmatprep.mubr.f32.mxu0 0.0
  %3920 = vmatmul.mubr.f32.gmra.mxu0 %v3782
  %v3921 = vpop.f32.mrf.mxu0
  %v3922 = vadd.f32 0.0, %v3921
  %v3923 = vpop.f32.mrf.mxu0
  %v3924 = vadd.f32 0.0, %v3923
  %3925 = vdwg.mxu0
  %3926 = vmatprep.subr.mxu0 0.0
  %3927 = vmatpush1.msra.mxu0 0.0
  %3928 = vmatprep.subr.mxu0 0.0
  %3929 = vmatpush1.msra.mxu0 0.0
  %3930 = vmatprep.subr.mxu0 0.0
  %3931 = vmatpush1.msra.mxu0 0.0
  %3932 = vmatprep.subr.mxu0 0.0
  %3933 = vmatpush1.msra.mxu0 0.0
  %3934 = vmatprep.subr.mxu0 0.0
  %3935 = vmatpush1.msra.mxu0 0.0
  %3936 = vmatprep.subr.mxu0 0.0
  %3937 = vmatpush1.msra.mxu0 0.0
  %3938 = vmatprep.subr.mxu0 0.0
  %3939 = vmatpush1.msra.mxu0 0.0
  %3940 = vmatprep.subr.mxu0 0.0
  %3941 = vmatpush1.msra.mxu0 0.0
  %3942 = vmatprep.subr.mxu0 0.0
  %3943 = vmatpush1.msra.mxu0 0.0
  %3944 = vmatprep.subr.mxu0 0.0
  %3945 = vmatpush1.msra.mxu0 0.0
  %3946 = vmatprep.subr.mxu0 0.0
  %3947 = vmatpush1.msra.mxu0 0.0
  %3948 = vmatprep.subr.mxu0 0.0
  %3949 = vmatpush1.msra.mxu0 0.0
  %3950 = vmatprep.subr.mxu0 0.0
  %3951 = vmatpush1.msra.mxu0 0.0
  %3952 = vmatprep.subr.mxu0 0.0
  %3953 = vmatpush1.msra.mxu0 0.0
  %3954 = vmatprep.subr.mxu0 0.0
  %3955 = vmatpush1.msra.mxu0 0.0
  %3956 = vmatprep.subr.mxu0 %v3159
  %3957 = vmatpush1.msra.mxu0 %v3157
  %3958 = vmatprep.subr.mxu0 0.0
  %3959 = vmatpush2.msra.mxu0 0.0
  %3960 = vmatprep.subr.mxu0 0.0
  %3961 = vmatpush2.msra.mxu0 0.0
  %3962 = vmatprep.subr.mxu0 0.0
  %3963 = vmatpush2.msra.mxu0 0.0
  %3964 = vmatprep.subr.mxu0 0.0
  %3965 = vmatpush2.msra.mxu0 0.0
  %3966 = vmatprep.subr.mxu0 0.0
  %3967 = vmatpush2.msra.mxu0 0.0
  %3968 = vmatprep.subr.mxu0 0.0
  %3969 = vmatpush2.msra.mxu0 0.0
  %3970 = vmatprep.subr.mxu0 0.0
  %3971 = vmatpush2.msra.mxu0 0.0
  %3972 = vmatprep.subr.mxu0 0.0
  %3973 = vmatpush2.msra.mxu0 0.0
  %3974 = vmatprep.subr.mxu0 0.0
  %3975 = vmatpush2.msra.mxu0 0.0
  %3976 = vmatprep.subr.mxu0 0.0
  %3977 = vmatpush2.msra.mxu0 0.0
  %3978 = vmatprep.subr.mxu0 0.0
  %3979 = vmatpush2.msra.mxu0 0.0
  %3980 = vmatprep.subr.mxu0 0.0
  %3981 = vmatpush2.msra.mxu0 0.0
  %3982 = vmatprep.subr.mxu0 0.0
  %3983 = vmatpush2.msra.mxu0 0.0
  %3984 = vmatprep.subr.mxu0 0.0
  %3985 = vmatpush2.msra.mxu0 0.0
  %3986 = vmatprep.subr.mxu0 0.0
  %3987 = vmatpush2.msra.mxu0 0.0
  %3988 = vmatprep.subr.mxu0 0.0
  %3989 = vmatpush2.msra.mxu0 0.0
  %3990 = vmatprep.mubr.f32.mxu0 0.0
  %3991 = vmatmul.mubr.f32.gmra.mxu0 %v3782
  %v3992 = vpop.f32.mrf.mxu0
  %v3993 = vadd.f32 0.0, %v3992
  %v3994 = vpop.f32.mrf.mxu0
  %v3995 = vadd.f32 0.0, %v3994
  %3996 = vdwg.mxu0
  %3997 = vmatprep.subr.mxu0 0.0
  %3998 = vmatpush1.msra.mxu0 0.0
  %3999 = vmatprep.subr.mxu0 0.0
  %4000 = vmatpush1.msra.mxu0 0.0
  %4001 = vmatprep.subr.mxu0 0.0
  %4002 = vmatpush1.msra.mxu0 0.0
  %4003 = vmatprep.subr.mxu0 0.0
  %4004 = vmatpush1.msra.mxu0 0.0
  %4005 = vmatprep.subr.mxu0 0.0
  %4006 = vmatpush1.msra.mxu0 0.0
  %4007 = vmatprep.subr.mxu0 0.0
  %4008 = vmatpush1.msra.mxu0 0.0
  %4009 = vmatprep.subr.mxu0 0.0
  %4010 = vmatpush1.msra.mxu0 0.0
  %4011 = vmatprep.subr.mxu0 0.0
  %4012 = vmatpush1.msra.mxu0 0.0
  %4013 = vmatprep.subr.mxu0 0.0
  %4014 = vmatpush1.msra.mxu0 0.0
  %4015 = vmatprep.subr.mxu0 0.0
  %4016 = vmatpush1.msra.mxu0 0.0
  %4017 = vmatprep.subr.mxu0 0.0
  %4018 = vmatpush1.msra.mxu0 0.0
  %4019 = vmatprep.subr.mxu0 0.0
  %4020 = vmatpush1.msra.mxu0 0.0
  %4021 = vmatprep.subr.mxu0 0.0
  %4022 = vmatpush1.msra.mxu0 0.0
  %4023 = vmatprep.subr.mxu0 0.0
  %4024 = vmatpush1.msra.mxu0 0.0
  %4025 = vmatprep.subr.mxu0 0.0
  %4026 = vmatpush1.msra.mxu0 0.0
  %4027 = vmatprep.subr.mxu0 0.0
  %4028 = vmatpush1.msra.mxu0 %v3161
  %4029 = vmatprep.subr.mxu0 0.0
  %4030 = vmatpush2.msra.mxu0 0.0
  %4031 = vmatprep.subr.mxu0 0.0
  %4032 = vmatpush2.msra.mxu0 0.0
  %4033 = vmatprep.subr.mxu0 0.0
  %4034 = vmatpush2.msra.mxu0 0.0
  %4035 = vmatprep.subr.mxu0 0.0
  %4036 = vmatpush2.msra.mxu0 0.0
  %4037 = vmatprep.subr.mxu0 0.0
  %4038 = vmatpush2.msra.mxu0 0.0
  %4039 = vmatprep.subr.mxu0 0.0
  %4040 = vmatpush2.msra.mxu0 0.0
  %4041 = vmatprep.subr.mxu0 0.0
  %4042 = vmatpush2.msra.mxu0 0.0
  %4043 = vmatprep.subr.mxu0 0.0
  %4044 = vmatpush2.msra.mxu0 0.0
  %4045 = vmatprep.subr.mxu0 0.0
  %4046 = vmatpush2.msra.mxu0 0.0
  %4047 = vmatprep.subr.mxu0 0.0
  %4048 = vmatpush2.msra.mxu0 0.0
  %4049 = vmatprep.subr.mxu0 0.0
  %4050 = vmatpush2.msra.mxu0 0.0
  %4051 = vmatprep.subr.mxu0 0.0
  %4052 = vmatpush2.msra.mxu0 0.0
  %4053 = vmatprep.subr.mxu0 0.0
  %4054 = vmatpush2.msra.mxu0 0.0
  %4055 = vmatprep.subr.mxu0 0.0
  %4056 = vmatpush2.msra.mxu0 0.0
  %4057 = vmatprep.subr.mxu0 0.0
  %4058 = vmatpush2.msra.mxu0 0.0
  %4059 = vmatprep.subr.mxu0 0.0
  %4060 = vmatpush2.msra.mxu0 0.0
  %4061 = vmatprep.mubr.f32.mxu0 0.0
  %4062 = vmatmul.mubr.f32.gmra.mxu0 %v3782
  %v4063 = vpop.f32.mrf.mxu0
  %v4064 = vadd.f32 0.0, %v4063
  %v4065 = vpop.f32.mrf.mxu0
  %4066 = vdwg.mxu0
  %v4068 = vlaneseq
  %v4069 = vshrl.u32 %v4068, 7
  %v4070 = vsub.s32 0, %v4069
  %v4071 = vrot.slane %v2820, %v4070
  %v4072 = vlaneseq
  %v4073 = vshrl.u32 %v4072, 7
  %v4074 = vsub.s32 1, %v4073
  %v4075 = vrot.slane %v2820, %v4074
  %v4076 = vlaneseq
  %v4077 = vshrl.u32 %v4076, 7
  %v4078 = vsub.s32 2, %v4077
  %v4079 = vrot.slane %v2820, %v4078
  %v4080 = vlaneseq
  %v4081 = vshrl.u32 %v4080, 7
  %v4082 = vsub.s32 3, %v4081
  %v4083 = vrot.slane %v2820, %v4082
  %v4084 = vlaneseq
  %v4085 = vshrl.u32 %v4084, 7
  %v4086 = vsub.s32 4, %v4085
  %v4087 = vrot.slane %v2820, %v4086
  %v4088 = vlaneseq
  %v4089 = vshrl.u32 %v4088, 7
  %v4090 = vsub.s32 5, %v4089
  %v4091 = vrot.slane %v2820, %v4090
  %v4092 = vlaneseq
  %v4093 = vshrl.u32 %v4092, 7
  %v4094 = vsub.s32 6, %v4093
  %v4095 = vrot.slane %v2820, %v4094
  %v4103 = vmul.f32 %v3851, %v4071
  %v4104 = vmul.f32 %v3853, %v4075
  %v4105 = vmul.f32 %v3922, %v4079
  %v4106 = vmul.f32 %v3924, %v4083
  %v4107 = vmul.f32 %v3993, %v4087
  %v4108 = vmul.f32 %v3995, %v4091
  %v4109 = vmul.f32 %v4064, %v4095
  %v4110 = vlaneseq
  %v4111 = vshrl.u32 %v4110, 7
  %v4112 = vsub.s32 0, %v4111
  %v4113 = vrot.slane %v4103, %v4112
  %v4114 = vlaneseq
  %v4115 = vshrl.u32 %v4114, 7
  %v4116 = vsub.s32 0, %v4115
  %v4117 = vrot.slane %v4104, %v4116
  %v4118 = vlaneseq
  %v4119 = vshrl.u32 %v4118, 7
  %v4120 = vsub.s32 0, %v4119
  %v4121 = vrot.slane %v4105, %v4120
  %v4122 = vlaneseq
  %v4123 = vshrl.u32 %v4122, 7
  %v4124 = vsub.s32 0, %v4123
  %v4125 = vrot.slane %v4106, %v4124
  %v4126 = vlaneseq
  %v4127 = vshrl.u32 %v4126, 7
  %v4128 = vsub.s32 0, %v4127
  %v4129 = vrot.slane %v4107, %v4128
  %v4130 = vlaneseq
  %v4131 = vshrl.u32 %v4130, 7
  %v4132 = vsub.s32 0, %v4131
  %v4133 = vrot.slane %v4108, %v4132
  %v4134 = vlaneseq
  %v4135 = vshrl.u32 %v4134, 7
  %v4136 = vsub.s32 0, %v4135
  %v4137 = vrot.slane %v4109, %v4136
  %v4138 = vmul.f32 %v3474, %v4113
  %v4139 = vmul.f32 %v3475, %v4117
  %v4140 = vmul.f32 %v3476, %v4121
  %v4141 = vmul.f32 %v3477, %v4125
  %v4142 = vmul.f32 %v3478, %v4129
  %v4143 = vmul.f32 %v3479, %v4133
  %v4144 = vmul.f32 %v3480, %v4137
  %v4146 = vlaneseq
  %v4147 = vshrl.u32 %v4146, 7
  %v4148 = vsub.s32 0, %v4147
  %v4149 = vrot.slane %v2822, %v4148
  %v4150 = vlaneseq
  %v4151 = vshrl.u32 %v4150, 7
  %v4152 = vsub.s32 1, %v4151
  %v4153 = vrot.slane %v2822, %v4152
  %v4154 = vlaneseq
  %v4155 = vshrl.u32 %v4154, 7
  %v4156 = vsub.s32 2, %v4155
  %v4157 = vrot.slane %v2822, %v4156
  %v4158 = vlaneseq
  %v4159 = vshrl.u32 %v4158, 7
  %v4160 = vsub.s32 3, %v4159
  %v4161 = vrot.slane %v2822, %v4160
  %v4162 = vlaneseq
  %v4163 = vshrl.u32 %v4162, 7
  %v4164 = vsub.s32 4, %v4163
  %v4165 = vrot.slane %v2822, %v4164
  %v4166 = vlaneseq
  %v4167 = vshrl.u32 %v4166, 7
  %v4168 = vsub.s32 5, %v4167
  %v4169 = vrot.slane %v2822, %v4168
  %v4170 = vlaneseq
  %v4171 = vshrl.u32 %v4170, 7
  %v4172 = vsub.s32 6, %v4171
  %v4173 = vrot.slane %v2822, %v4172
  %v4181 = vadd.f32 %v4138, %v4149
  %v4182 = vadd.f32 %v4139, %v4153
  %v4183 = vadd.f32 %v4140, %v4157
  %v4184 = vadd.f32 %v4141, %v4161
  %v4185 = vadd.f32 %v4142, %v4165
  %v4186 = vadd.f32 %v4143, %v4169
  %v4187 = vadd.f32 %v4144, %v4173
  %vm4188 = vcmp.ge.f32.partialorder %v4181, 0.0
  %vm4189 = vcmp.ge.f32.partialorder %v4182, 0.0
  %vm4190 = vcmp.ge.f32.partialorder %v4183, 0.0
  %vm4191 = vcmp.ge.f32.partialorder %v4184, 0.0
  %vm4192 = vcmp.ge.f32.partialorder %v4185, 0.0
  %vm4193 = vcmp.ge.f32.partialorder %v4186, 0.0
  %vm4194 = vcmp.ge.f32.partialorder %v4187, 0.0
  %v4195 = vmul.f32 %v4181, 0.01
  %v4196 = vmul.f32 %v4182, 0.01
  %v4197 = vmul.f32 %v4183, 0.01
  %v4198 = vmul.f32 %v4184, 0.01
  %v4199 = vmul.f32 %v4185, 0.01
  %v4200 = vmul.f32 %v4186, 0.01
  %v4201 = vmul.f32 %v4187, 0.01
  %v4202 = vsel %vm4188, %v4181, %v4195
  %v4203 = vsel %vm4189, %v4182, %v4196
  %v4204 = vsel %vm4190, %v4183, %v4197
  %v4205 = vsel %vm4191, %v4184, %v4198
  %v4206 = vsel %vm4192, %v4185, %v4199
  %v4207 = vsel %vm4193, %v4186, %v4200
  %v4208 = vsel %vm4194, %v4187, %v4201
  %v4216 = vcombine.low %v4202, %v4203
  %v4217 = vcombine.low %v4204, %v4205
  %v4219 = vunpack.c.l.s4 1983009808
  %v4220 = vunpack.c.0.s8 %v4219
  %v4221 = vlaneseq
  %v4222 = vshrl.u32 %v4221, 7
  %v4223 = vsub.s32 %v4220, %v4222
  %v4224 = vrot.slane %v4216, %v4223
  %v4226 = vunpack.c.l.s4 1983009808
  %v4227 = vunpack.c.0.s8 %v4226
  %v4228 = vlaneseq
  %v4229 = vshrl.u32 %v4228, 7
  %v4230 = vsub.s32 %v4227, %v4229
  %v4231 = vrot.slane %v4217, %v4230
  %v4232 = vcombine.low %v4224, %v4231
  %v4233 = vcombine.low %v4206, %v4207
  %v4235 = vunpack.c.l.s4 1983009808
  %v4236 = vunpack.c.0.s8 %v4235
  %v4237 = vlaneseq
  %v4238 = vshrl.u32 %v4237, 7
  %v4239 = vsub.s32 %v4236, %v4238
  %v4240 = vrot.slane %v4233, %v4239
  %v4242 = vunpack.c.l.s4 1983009808
  %v4243 = vunpack.c.0.s8 %v4242
  %v4244 = vlaneseq
  %v4245 = vshrl.u32 %v4244, 7
  %v4246 = vsub.s32 %v4243, %v4245
  %v4247 = vrot.slane %v4208, %v4246
  %v4248 = vcombine.low %v4240, %v4247
  %4251 = vst [vmem:[%s10] sm:$0xff] %v4232
  %vm4252 = vcmask 1043458
  %vm4253 = vmor %vm4252, %vm1057
  %vm4254 = vcmask 128004
  %vm4255 = vmor %vm4254, %vm4253
  %4256 = vst.msk [vmem:[%s10 + $0x8] sm:$0x3f] %vm4255, %v4248
  // Predicated region
  $region42: #{forward.1} parent=0 // pred_check
    _
  $region43: #{forward.1} parent=0 // pred_check_branch
    %4258 = sbr.rel (0) target = $region45
  $region44: #{forward.1} parent=0 // pred_region
    _
  $region45: #{forward.1} parent=0 // pred_fallthru
    _
  // Predicated region
  $region46: #{forward.1} parent=0 // pred_check
    _
  $region47: #{forward.1} parent=0 // pred_check_branch
    %4260 = sbr.rel (0) target = $region49
  $region48: #{forward.1} parent=0 // pred_region
    _
  $region49: #{forward.1} parent=0 // pred_fallthru
    _

</llo_original>
